<compile_context>
chip_gen: v7x
topology: tpu7x:2x2x1
jax: 0.10.0
libtpu: 0.0.40
codegen_flags: <defaults>
</compile_context>

<pallas_src>
import numpy as np
import jax
import jax.numpy as jnp
from jax.experimental import pallas as pl
from jax.experimental.pallas import tpu as pltpu

# ----------------------- model hyperparameters (synthetic defaults) -----------
IMG_HEIGHT = 32
IMG_WIDTH = 32
INPUT_CHANNELS = 4
CONV_FILTERS = (8, 16, 32, 32)      # DEFAULT_CNN2_CONV_FILTERS (synthetic)
FC_SIZES = (32, 16)                 # DEFAULT_CNN2_FC_SIZES (synthetic)
OUTPUT_DIM = 2
BN_EPS = 1e-5

BLOCK_CONFIGS = [
    dict(k=7, s=2, p=3, pk=3, ps=2, pp=1),
    dict(k=5, s=1, p=2, pk=3, ps=2, pp=1),
    dict(k=3, s=1, p=1, pk=3, ps=2, pp=1),
    dict(k=3, s=1, p=1, pk=3, ps=2, pp=1),
]


def _conv_out(sz, k, s, p):
    return (sz + 2 * p - k) // s + 1


def _block_geoms(n_batch):
    geoms = []
    h, w, c = IMG_HEIGHT, IMG_WIDTH, INPUT_CHANNELS
    for i, f in enumerate(CONV_FILTERS):
        cfg = BLOCK_CONFIGS[min(i, len(BLOCK_CONFIGS) - 1)]
        ho = _conv_out(h, cfg["k"], cfg["s"], cfg["p"])
        wo = _conv_out(w, cfg["k"], cfg["s"], cfg["p"])
        hp = _conv_out(ho, cfg["pk"], cfg["ps"], cfg["pp"])
        wp = _conv_out(wo, cfg["pk"], cfg["ps"], cfg["pp"])
        geoms.append(dict(N=n_batch, H=h, W=w, Cin=c, F=f,
                          Ho=ho, Wo=wo, Hp=hp, Wp=wp, **cfg))
        h, w, c = hp, wp, f
    return geoms


# ----------------------------- parameters -------------------------------------

def init_params(key):
    params = {"conv": [], "fc": []}
    keys = iter(jax.random.split(key, 64))
    c_in = INPUT_CHANNELS
    h, w = IMG_HEIGHT, IMG_WIDTH
    for i, c_out in enumerate(CONV_FILTERS):
        cfg = BLOCK_CONFIGS[min(i, len(BLOCK_CONFIGS) - 1)]
        k = cfg["k"]
        wgt = 0.1 * jax.random.normal(next(keys), (k, k, c_in, c_out), jnp.float32)
        gamma = 1.0 + 0.1 * jax.random.normal(next(keys), (c_out,), jnp.float32)
        beta = 0.1 * jax.random.normal(next(keys), (c_out,), jnp.float32)
        rmean = 0.1 * jax.random.normal(next(keys), (c_out,), jnp.float32)
        rvar = 1.0 + jnp.abs(jax.random.normal(next(keys), (c_out,), jnp.float32))
        params["conv"].append(dict(w=wgt, gamma=gamma, beta=beta, rmean=rmean, rvar=rvar))
        h = _conv_out(_conv_out(h, cfg["k"], cfg["s"], cfg["p"]), cfg["pk"], cfg["ps"], cfg["pp"])
        w = _conv_out(_conv_out(w, cfg["k"], cfg["s"], cfg["p"]), cfg["pk"], cfg["ps"], cfg["pp"])
        c_in = c_out
    last = c_in * h * w
    for size in list(FC_SIZES) + [OUTPUT_DIM]:
        wgt = 0.1 * jax.random.normal(next(keys), (last, size), jnp.float32)
        b = 0.1 * jax.random.normal(next(keys), (size,), jnp.float32)
        params["fc"].append((wgt, b))
        last = size
    return params


# ------------------ one-time host-side kernel-constant preparation -------------
# All structural 0/1 selection matrices, the BN-folded banded conv weights and the
# tiled biases are built once on the host (parameter transformation, not per-call
# work) and handed to the kernel as small VMEM-resident constants.

def _prepare_constants(params, n_batch):
    geoms = _block_geoms(n_batch)
    consts = []
    for blk, g in zip(params["conv"], geoms):
        k, s, p = g["k"], g["s"], g["p"]
        pk, ps, pp = g["pk"], g["ps"], g["pp"]
        N, H, W, Cin, F = g["N"], g["H"], g["W"], g["Cin"], g["F"]
        Ho, Wo, Hp, Wp = g["Ho"], g["Wo"], g["Hp"], g["Wp"]

        wgt = np.asarray(blk["w"], np.float32)                 # (k, k, Cin, F) HWIO
        gamma = np.asarray(blk["gamma"], np.float32)
        beta = np.asarray(blk["beta"], np.float32)
        rmean = np.asarray(blk["rmean"], np.float32)
        rvar = np.asarray(blk["rvar"], np.float32)
        scale = gamma / np.sqrt(rvar + BN_EPS)                 # eval-mode BN folding
        w_fold = wgt * scale[None, None, None, :]
        bias_f = beta - rmean * scale

        # H-tap row selections: (rs[dy] @ x) picks input row i = s*io + dy - p
        # for every output row (n, io); out-of-range rows are all-zero (= conv
        # zero padding in H).  Block-diagonal over the batch.
        rs = np.zeros((k, N * Ho, N * H), np.float32)
        for dy in range(k):
            for n in range(N):
                for io in range(Ho):
                    i = s * io + dy - p
                    if 0 <= i < H:
                        rs[dy, n * Ho + io, n * H + i] = 1.0

        # Banded weights: lane (j, c) of an input row -> lane (jo, f) of the conv
        # output row, carrying the W taps, W stride and zero padding in W.
        tb = np.zeros((k, W * Cin, Wo * F), np.float32)
        for dy in range(k):
            for jo in range(Wo):
                for dx in range(k):
                    j = s * jo + dx - p
                    if 0 <= j < W:
                        tb[dy, j * Cin:(j + 1) * Cin, jo * F:(jo + 1) * F] = w_fold[dy, dx]

        bias_row = np.tile(bias_f, Wo).reshape(1, Wo * F)      # folded BN bias per (jo, f)

        # Separable 3x3 / stride-2 / pad-1 max pool as 0/1 selections.
        ws = np.zeros((pk, Wo * F, Wp * F), np.float32)        # lane-side (W direction)
        eye_f = np.eye(F, dtype=np.float32)
        for d in range(pk):
            for jo in range(Wp):
                jw = ps * jo + d - pp
                if 0 <= jw < Wo:
                    ws[d, jw * F:(jw + 1) * F, jo * F:(jo + 1) * F] = eye_f
        hs = np.zeros((pk, N * Hp, N * Ho), np.float32)        # row-side (H direction)
        for d in range(pk):
            for n in range(N):
                for io in range(Hp):
                    i = ps * io + d - pp
                    if 0 <= i < Ho:
                        hs[d, n * Hp + io, n * Ho + i] = 1.0

        consts.extend([
            jnp.asarray(rs, jnp.bfloat16),
            jnp.asarray(tb, jnp.bfloat16),
            jnp.asarray(bias_row, jnp.float32),
            jnp.asarray(ws, jnp.bfloat16),
            jnp.asarray(hs, jnp.bfloat16),
        ])

    for wfc, bfc in params["fc"]:
        consts.append(jnp.asarray(wfc, jnp.float32))
        consts.append(jnp.asarray(np.asarray(bfc, np.float32).reshape(1, -1), jnp.float32))
    return geoms, consts


# --------------------------- the fused forward kernel --------------------------

def _make_fused_kernel(geoms, n_fc):
    def kernel(*refs):
        out_ref = refs[-1]
        act = refs[0][...]                                  # (N*H0, W0*C0) f32 input
        idx = 1
        for g in geoms:
            rs_ref, tb_ref, b_ref, ws_ref, hs_ref = refs[idx:idx + 5]
            idx += 5
            xb = act.astype(jnp.bfloat16)
            # Conv (+ folded BN) as k_h pairs of MXU GEMMs with f32 accumulation.
            acc = None
            for dy in range(g["k"]):
                xr = jnp.dot(rs_ref[dy], xb,
                             preferred_element_type=jnp.float32).astype(jnp.bfloat16)
                t = jnp.dot(xr, tb_ref[dy], preferred_element_type=jnp.float32)
                acc = t if acc is None else acc + t
            y = jnp.maximum(acc + b_ref[...], 0.0).astype(jnp.bfloat16)   # (N*Ho, Wo*F)

            # Separable max pool: zero rows/cols in the selections act as the pool
            # padding (safe post-ReLU); selecting bf16 values with 1.0 weights into
            # an f32 accumulator is exact.
            cm = None
            for d in range(g["pk"]):
                t = jnp.dot(y, ws_ref[d], preferred_element_type=jnp.float32)
                cm = t if cm is None else jnp.maximum(cm, t)
            cm = cm.astype(jnp.bfloat16)                                   # (N*Ho, Wp*F)
            pooled = None
            for d in range(g["pk"]):
                t = jnp.dot(hs_ref[d], cm, preferred_element_type=jnp.float32)
                pooled = t if pooled is None else jnp.maximum(pooled, t)
            act = pooled                                                   # (N*Hp, Wp*F) f32

        # Block-4 pooled output is (N, 1*1*32): flatten is a no-op in this layout,
        # so the FC stack chains directly on the VMEM-resident activation (f32).
        h = act
        for li in range(n_fc):
            fw_ref, fb_ref = refs[idx], refs[idx + 1]
            idx += 2
            h = jnp.dot(h, fw_ref[...], preferred_element_type=jnp.float32) + fb_ref[...]
            if li < n_fc - 1:
                h = jnp.maximum(h, 0.0)
                # TODO(synk): nn.Dropout is stochastic in train mode; eval-mode identity used.
        out_ref[...] = jax.nn.sigmoid(h)

    return kernel


def landing_point_cnn_forward(x_nchw, geoms, consts):
    n = x_nchw.shape[0]
    g0 = geoms[0]
    # NCHW -> NHWC -> lane-dense (N*H, W*C) layout used throughout the kernel.
    x = jnp.transpose(x_nchw, (0, 2, 3, 1)).astype(jnp.float32)
    x = x.reshape(n * g0["H"], g0["W"] * g0["Cin"])

    vspec = pl.BlockSpec(memory_space=pltpu.MemorySpace.VMEM)
    kernel = _make_fused_kernel(geoms, n_fc=len(FC_SIZES) + 1)
    return pl.pallas_call(
        kernel,
        out_shape=jax.ShapeDtypeStruct((n, OUTPUT_DIM), jnp.float32),
        in_specs=[vspec] * (1 + len(consts)),
        out_specs=vspec,
    )(x, *consts)


# ------------------------ pure-JAX reference (for verification) ----------------

def reference_forward(x_nchw, params):
    x = jnp.transpose(x_nchw, (0, 2, 3, 1)).astype(jnp.float32)
    for i, blk in enumerate(params["conv"]):
        cfg = BLOCK_CONFIGS[min(i, len(BLOCK_CONFIGS) - 1)]
        y = jax.lax.conv_general_dilated(
            x, blk["w"], (cfg["s"], cfg["s"]),
            ((cfg["p"], cfg["p"]), (cfg["p"], cfg["p"])),
            dimension_numbers=("NHWC", "HWIO", "NHWC"))
        scale = blk["gamma"] / jnp.sqrt(blk["rvar"] + BN_EPS)
        y = y * scale + (blk["beta"] - blk["rmean"] * scale)
        y = jnp.maximum(y, 0.0)
        x = jax.lax.reduce_window(
            y, -jnp.inf, jax.lax.max,
            (1, cfg["pk"], cfg["pk"], 1), (1, cfg["ps"], cfg["ps"], 1),
            [(0, 0), (cfg["pp"], cfg["pp"]), (cfg["pp"], cfg["pp"]), (0, 0)])
    h = jnp.transpose(x, (0, 3, 1, 2)).reshape(x.shape[0], -1)
    for li, (wfc, bfc) in enumerate(params["fc"]):
        h = h @ wfc + bfc
        if li < len(params["fc"]) - 1:
            h = jnp.maximum(h, 0.0)
    return jax.nn.sigmoid(h)


# --------------------------------- main ----------------------------------------

if __name__ == "__main__":
    key = jax.random.PRNGKey(0)
    pkey, xkey = jax.random.split(key)
    params = init_params(pkey)

    batch = 2
    geoms, consts = _prepare_constants(params, batch)
    x = jax.random.normal(xkey, (batch, INPUT_CHANNELS, IMG_HEIGHT, IMG_WIDTH), jnp.float32)

    fwd = jax.jit(lambda xx: landing_point_cnn_forward(xx, geoms, consts))
    out = fwd(x)
    jax.block_until_ready(out)

    assert out.shape == (batch, OUTPUT_DIM)
    assert bool(jnp.all((out >= 0.0) & (out <= 1.0)))

    # Cross-check against the pure-JAX/XLA reference (bf16 conv path -> loose tol).
    ref = jax.jit(lambda xx: reference_forward(xx, params))(x)
    assert float(jnp.max(jnp.abs(out - ref))) < 0.1

    print("KERNEL_OK")
</pallas_src>

<mosaic_0001>
module attributes {stable_mosaic.version = 11 : i64} {
  func.func @kernel(%arg0: memref<64x128xf32, #tpu.memory_space<vmem>>, %arg1: memref<7x32x64xbf16, #tpu.memory_space<vmem>>, %arg2: memref<7x128x128xbf16, #tpu.memory_space<vmem>>, %arg3: memref<1x128xf32, #tpu.memory_space<vmem>>, %arg4: memref<3x128x64xbf16, #tpu.memory_space<vmem>>, %arg5: memref<3x16x32xbf16, #tpu.memory_space<vmem>>, %arg6: memref<5x16x16xbf16, #tpu.memory_space<vmem>>, %arg7: memref<5x64x128xbf16, #tpu.memory_space<vmem>>, %arg8: memref<1x128xf32, #tpu.memory_space<vmem>>, %arg9: memref<3x128x64xbf16, #tpu.memory_space<vmem>>, %arg10: memref<3x8x16xbf16, #tpu.memory_space<vmem>>, %arg11: memref<3x8x8xbf16, #tpu.memory_space<vmem>>, %arg12: memref<3x64x128xbf16, #tpu.memory_space<vmem>>, %arg13: memref<1x128xf32, #tpu.memory_space<vmem>>, %arg14: memref<3x128x64xbf16, #tpu.memory_space<vmem>>, %arg15: memref<3x4x8xbf16, #tpu.memory_space<vmem>>, %arg16: memref<3x4x4xbf16, #tpu.memory_space<vmem>>, %arg17: memref<3x64x64xbf16, #tpu.memory_space<vmem>>, %arg18: memref<1x64xf32, #tpu.memory_space<vmem>>, %arg19: memref<3x64x32xbf16, #tpu.memory_space<vmem>>, %arg20: memref<3x2x4xbf16, #tpu.memory_space<vmem>>, %arg21: memref<32x32xf32, #tpu.memory_space<vmem>>, %arg22: memref<1x32xf32, #tpu.memory_space<vmem>>, %arg23: memref<32x16xf32, #tpu.memory_space<vmem>>, %arg24: memref<1x16xf32, #tpu.memory_space<vmem>>, %arg25: memref<16x2xf32, #tpu.memory_space<vmem>>, %arg26: memref<1x2xf32, #tpu.memory_space<vmem>>, %arg27: memref<2x2xf32, #tpu.memory_space<vmem>>) attributes {dimension_semantics = [], scalar_prefetch = 0 : i64, scratch_operands = 0 : i64, tpu.core_type = #tpu.core_type<tc>} {
    %c0 = arith.constant 0 : index
    %c0_0 = arith.constant 0 : index
    %0 = vector.load %arg0[%c0, %c0_0] : memref<64x128xf32, #tpu.memory_space<vmem>>, vector<64x128xf32>
    %1 = arith.truncf %0 : vector<64x128xf32> to vector<64x128xbf16>
    %c0_1 = arith.constant 0 : index
    %c0_2 = arith.constant 0 : index
    %c0_3 = arith.constant 0 : index
    %2 = vector.load %arg1[%c0_1, %c0_2, %c0_3] : memref<7x32x64xbf16, #tpu.memory_space<vmem>>, vector<1x32x64xbf16>
    %3 = vector.shape_cast %2 : vector<1x32x64xbf16> to vector<32x64xbf16>
    %cst = arith.constant dense<0.000000e+00> : vector<32x128xf32>
    %4 = tpu.matmul %3, %1, %cst {dimension_numbers = #tpu.dot_dimension_numbers<[1], [0], [0], [1], [0, 0, 1, 1], [], []>} : vector<32x64xbf16>, vector<64x128xbf16>, vector<32x128xf32> -> vector<32x128xf32>
    %5 = arith.truncf %4 : vector<32x128xf32> to vector<32x128xbf16>
    %c0_4 = arith.constant 0 : index
    %c0_5 = arith.constant 0 : index
    %c0_6 = arith.constant 0 : index
    %6 = vector.load %arg2[%c0_4, %c0_5, %c0_6] : memref<7x128x128xbf16, #tpu.memory_space<vmem>>, vector<1x128x128xbf16>
    %7 = vector.shape_cast %6 : vector<1x128x128xbf16> to vector<128x128xbf16>
    %cst_7 = arith.constant dense<0.000000e+00> : vector<32x128xf32>
    %8 = tpu.matmul %5, %7, %cst_7 {dimension_numbers = #tpu.dot_dimension_numbers<[1], [0], [0], [1], [0, 0, 1, 1], [], []>} : vector<32x128xbf16>, vector<128x128xbf16>, vector<32x128xf32> -> vector<32x128xf32>
    %c1 = arith.constant 1 : index
    %c0_8 = arith.constant 0 : index
    %c0_9 = arith.constant 0 : index
    %9 = vector.load %arg1[%c1, %c0_8, %c0_9] : memref<7x32x64xbf16, #tpu.memory_space<vmem>>, vector<1x32x64xbf16>
    %10 = vector.shape_cast %9 : vector<1x32x64xbf16> to vector<32x64xbf16>
    %cst_10 = arith.constant dense<0.000000e+00> : vector<32x128xf32>
    %11 = tpu.matmul %10, %1, %cst_10 {dimension_numbers = #tpu.dot_dimension_numbers<[1], [0], [0], [1], [0, 0, 1, 1], [], []>} : vector<32x64xbf16>, vector<64x128xbf16>, vector<32x128xf32> -> vector<32x128xf32>
    %12 = arith.truncf %11 : vector<32x128xf32> to vector<32x128xbf16>
    %c1_11 = arith.constant 1 : index
    %c0_12 = arith.constant 0 : index
    %c0_13 = arith.constant 0 : index
    %13 = vector.load %arg2[%c1_11, %c0_12, %c0_13] : memref<7x128x128xbf16, #tpu.memory_space<vmem>>, vector<1x128x128xbf16>
    %14 = vector.shape_cast %13 : vector<1x128x128xbf16> to vector<128x128xbf16>
    %cst_14 = arith.constant dense<0.000000e+00> : vector<32x128xf32>
    %15 = tpu.matmul %12, %14, %cst_14 {dimension_numbers = #tpu.dot_dimension_numbers<[1], [0], [0], [1], [0, 0, 1, 1], [], []>} : vector<32x128xbf16>, vector<128x128xbf16>, vector<32x128xf32> -> vector<32x128xf32>
    %16 = arith.addf %8, %15 : vector<32x128xf32>
    %c2 = arith.constant 2 : index
    %c0_15 = arith.constant 0 : index
    %c0_16 = arith.constant 0 : index
    %17 = vector.load %arg1[%c2, %c0_15, %c0_16] : memref<7x32x64xbf16, #tpu.memory_space<vmem>>, vector<1x32x64xbf16>
    %18 = vector.shape_cast %17 : vector<1x32x64xbf16> to vector<32x64xbf16>
    %cst_17 = arith.constant dense<0.000000e+00> : vector<32x128xf32>
    %19 = tpu.matmul %18, %1, %cst_17 {dimension_numbers = #tpu.dot_dimension_numbers<[1], [0], [0], [1], [0, 0, 1, 1], [], []>} : vector<32x64xbf16>, vector<64x128xbf16>, vector<32x128xf32> -> vector<32x128xf32>
    %20 = arith.truncf %19 : vector<32x128xf32> to vector<32x128xbf16>
    %c2_18 = arith.constant 2 : index
    %c0_19 = arith.constant 0 : index
    %c0_20 = arith.constant 0 : index
    %21 = vector.load %arg2[%c2_18, %c0_19, %c0_20] : memref<7x128x128xbf16, #tpu.memory_space<vmem>>, vector<1x128x128xbf16>
    %22 = vector.shape_cast %21 : vector<1x128x128xbf16> to vector<128x128xbf16>
    %cst_21 = arith.constant dense<0.000000e+00> : vector<32x128xf32>
    %23 = tpu.matmul %20, %22, %cst_21 {dimension_numbers = #tpu.dot_dimension_numbers<[1], [0], [0], [1], [0, 0, 1, 1], [], []>} : vector<32x128xbf16>, vector<128x128xbf16>, vector<32x128xf32> -> vector<32x128xf32>
    %24 = arith.addf %16, %23 : vector<32x128xf32>
    %c3 = arith.constant 3 : index
    %c0_22 = arith.constant 0 : index
    %c0_23 = arith.constant 0 : index
    %25 = vector.load %arg1[%c3, %c0_22, %c0_23] : memref<7x32x64xbf16, #tpu.memory_space<vmem>>, vector<1x32x64xbf16>
    %26 = vector.shape_cast %25 : vector<1x32x64xbf16> to vector<32x64xbf16>
    %cst_24 = arith.constant dense<0.000000e+00> : vector<32x128xf32>
    %27 = tpu.matmul %26, %1, %cst_24 {dimension_numbers = #tpu.dot_dimension_numbers<[1], [0], [0], [1], [0, 0, 1, 1], [], []>} : vector<32x64xbf16>, vector<64x128xbf16>, vector<32x128xf32> -> vector<32x128xf32>
    %28 = arith.truncf %27 : vector<32x128xf32> to vector<32x128xbf16>
    %c3_25 = arith.constant 3 : index
    %c0_26 = arith.constant 0 : index
    %c0_27 = arith.constant 0 : index
    %29 = vector.load %arg2[%c3_25, %c0_26, %c0_27] : memref<7x128x128xbf16, #tpu.memory_space<vmem>>, vector<1x128x128xbf16>
    %30 = vector.shape_cast %29 : vector<1x128x128xbf16> to vector<128x128xbf16>
    %cst_28 = arith.constant dense<0.000000e+00> : vector<32x128xf32>
    %31 = tpu.matmul %28, %30, %cst_28 {dimension_numbers = #tpu.dot_dimension_numbers<[1], [0], [0], [1], [0, 0, 1, 1], [], []>} : vector<32x128xbf16>, vector<128x128xbf16>, vector<32x128xf32> -> vector<32x128xf32>
    %32 = arith.addf %24, %31 : vector<32x128xf32>
    %c4 = arith.constant 4 : index
    %c0_29 = arith.constant 0 : index
    %c0_30 = arith.constant 0 : index
    %33 = vector.load %arg1[%c4, %c0_29, %c0_30] : memref<7x32x64xbf16, #tpu.memory_space<vmem>>, vector<1x32x64xbf16>
    %34 = vector.shape_cast %33 : vector<1x32x64xbf16> to vector<32x64xbf16>
    %cst_31 = arith.constant dense<0.000000e+00> : vector<32x128xf32>
    %35 = tpu.matmul %34, %1, %cst_31 {dimension_numbers = #tpu.dot_dimension_numbers<[1], [0], [0], [1], [0, 0, 1, 1], [], []>} : vector<32x64xbf16>, vector<64x128xbf16>, vector<32x128xf32> -> vector<32x128xf32>
    %36 = arith.truncf %35 : vector<32x128xf32> to vector<32x128xbf16>
    %c4_32 = arith.constant 4 : index
    %c0_33 = arith.constant 0 : index
    %c0_34 = arith.constant 0 : index
    %37 = vector.load %arg2[%c4_32, %c0_33, %c0_34] : memref<7x128x128xbf16, #tpu.memory_space<vmem>>, vector<1x128x128xbf16>
    %38 = vector.shape_cast %37 : vector<1x128x128xbf16> to vector<128x128xbf16>
    %cst_35 = arith.constant dense<0.000000e+00> : vector<32x128xf32>
    %39 = tpu.matmul %36, %38, %cst_35 {dimension_numbers = #tpu.dot_dimension_numbers<[1], [0], [0], [1], [0, 0, 1, 1], [], []>} : vector<32x128xbf16>, vector<128x128xbf16>, vector<32x128xf32> -> vector<32x128xf32>
    %40 = arith.addf %32, %39 : vector<32x128xf32>
    %c5 = arith.constant 5 : index
    %c0_36 = arith.constant 0 : index
    %c0_37 = arith.constant 0 : index
    %41 = vector.load %arg1[%c5, %c0_36, %c0_37] : memref<7x32x64xbf16, #tpu.memory_space<vmem>>, vector<1x32x64xbf16>
    %42 = vector.shape_cast %41 : vector<1x32x64xbf16> to vector<32x64xbf16>
    %cst_38 = arith.constant dense<0.000000e+00> : vector<32x128xf32>
    %43 = tpu.matmul %42, %1, %cst_38 {dimension_numbers = #tpu.dot_dimension_numbers<[1], [0], [0], [1], [0, 0, 1, 1], [], []>} : vector<32x64xbf16>, vector<64x128xbf16>, vector<32x128xf32> -> vector<32x128xf32>
    %44 = arith.truncf %43 : vector<32x128xf32> to vector<32x128xbf16>
    %c5_39 = arith.constant 5 : index
    %c0_40 = arith.constant 0 : index
    %c0_41 = arith.constant 0 : index
    %45 = vector.load %arg2[%c5_39, %c0_40, %c0_41] : memref<7x128x128xbf16, #tpu.memory_space<vmem>>, vector<1x128x128xbf16>
    %46 = vector.shape_cast %45 : vector<1x128x128xbf16> to vector<128x128xbf16>
    %cst_42 = arith.constant dense<0.000000e+00> : vector<32x128xf32>
    %47 = tpu.matmul %44, %46, %cst_42 {dimension_numbers = #tpu.dot_dimension_numbers<[1], [0], [0], [1], [0, 0, 1, 1], [], []>} : vector<32x128xbf16>, vector<128x128xbf16>, vector<32x128xf32> -> vector<32x128xf32>
    %48 = arith.addf %40, %47 : vector<32x128xf32>
    %c6 = arith.constant 6 : index
    %c0_43 = arith.constant 0 : index
    %c0_44 = arith.constant 0 : index
    %49 = vector.load %arg1[%c6, %c0_43, %c0_44] : memref<7x32x64xbf16, #tpu.memory_space<vmem>>, vector<1x32x64xbf16>
    %50 = vector.shape_cast %49 : vector<1x32x64xbf16> to vector<32x64xbf16>
    %cst_45 = arith.constant dense<0.000000e+00> : vector<32x128xf32>
    %51 = tpu.matmul %50, %1, %cst_45 {dimension_numbers = #tpu.dot_dimension_numbers<[1], [0], [0], [1], [0, 0, 1, 1], [], []>} : vector<32x64xbf16>, vector<64x128xbf16>, vector<32x128xf32> -> vector<32x128xf32>
    %52 = arith.truncf %51 : vector<32x128xf32> to vector<32x128xbf16>
    %c6_46 = arith.constant 6 : index
    %c0_47 = arith.constant 0 : index
    %c0_48 = arith.constant 0 : index
    %53 = vector.load %arg2[%c6_46, %c0_47, %c0_48] : memref<7x128x128xbf16, #tpu.memory_space<vmem>>, vector<1x128x128xbf16>
    %54 = vector.shape_cast %53 : vector<1x128x128xbf16> to vector<128x128xbf16>
    %cst_49 = arith.constant dense<0.000000e+00> : vector<32x128xf32>
    %55 = tpu.matmul %52, %54, %cst_49 {dimension_numbers = #tpu.dot_dimension_numbers<[1], [0], [0], [1], [0, 0, 1, 1], [], []>} : vector<32x128xbf16>, vector<128x128xbf16>, vector<32x128xf32> -> vector<32x128xf32>
    %56 = arith.addf %48, %55 : vector<32x128xf32>
    %c0_50 = arith.constant 0 : index
    %c0_51 = arith.constant 0 : index
    %57 = vector.load %arg3[%c0_50, %c0_51] : memref<1x128xf32, #tpu.memory_space<vmem>>, vector<1x128xf32>
    %58 = vector.broadcast %57 : vector<1x128xf32> to vector<32x128xf32>
    %59 = arith.addf %56, %58 : vector<32x128xf32>
    %cst_52 = arith.constant 0.000000e+00 : f32
    %60 = vector.broadcast %cst_52 : f32 to vector<32x128xf32>
    %61 = arith.maximumf %59, %60 : vector<32x128xf32>
    %62 = arith.truncf %61 : vector<32x128xf32> to vector<32x128xbf16>
    %c0_53 = arith.constant 0 : index
    %c0_54 = arith.constant 0 : index
    %c0_55 = arith.constant 0 : index
    %63 = vector.load %arg4[%c0_53, %c0_54, %c0_55] : memref<3x128x64xbf16, #tpu.memory_space<vmem>>, vector<1x128x64xbf16>
    %64 = vector.shape_cast %63 : vector<1x128x64xbf16> to vector<128x64xbf16>
    %cst_56 = arith.constant dense<0.000000e+00> : vector<32x64xf32>
    %65 = tpu.matmul %62, %64, %cst_56 {dimension_numbers = #tpu.dot_dimension_numbers<[1], [0], [0], [1], [0, 0, 1, 1], [], []>} : vector<32x128xbf16>, vector<128x64xbf16>, vector<32x64xf32> -> vector<32x64xf32>
    %c1_57 = arith.constant 1 : index
    %c0_58 = arith.constant 0 : index
    %c0_59 = arith.constant 0 : index
    %66 = vector.load %arg4[%c1_57, %c0_58, %c0_59] : memref<3x128x64xbf16, #tpu.memory_space<vmem>>, vector<1x128x64xbf16>
    %67 = vector.shape_cast %66 : vector<1x128x64xbf16> to vector<128x64xbf16>
    %cst_60 = arith.constant dense<0.000000e+00> : vector<32x64xf32>
    %68 = tpu.matmul %62, %67, %cst_60 {dimension_numbers = #tpu.dot_dimension_numbers<[1], [0], [0], [1], [0, 0, 1, 1], [], []>} : vector<32x128xbf16>, vector<128x64xbf16>, vector<32x64xf32> -> vector<32x64xf32>
    %69 = arith.maximumf %65, %68 : vector<32x64xf32>
    %c2_61 = arith.constant 2 : index
    %c0_62 = arith.constant 0 : index
    %c0_63 = arith.constant 0 : index
    %70 = vector.load %arg4[%c2_61, %c0_62, %c0_63] : memref<3x128x64xbf16, #tpu.memory_space<vmem>>, vector<1x128x64xbf16>
    %71 = vector.shape_cast %70 : vector<1x128x64xbf16> to vector<128x64xbf16>
    %cst_64 = arith.constant dense<0.000000e+00> : vector<32x64xf32>
    %72 = tpu.matmul %62, %71, %cst_64 {dimension_numbers = #tpu.dot_dimension_numbers<[1], [0], [0], [1], [0, 0, 1, 1], [], []>} : vector<32x128xbf16>, vector<128x64xbf16>, vector<32x64xf32> -> vector<32x64xf32>
    %73 = arith.maximumf %69, %72 : vector<32x64xf32>
    %74 = arith.truncf %73 : vector<32x64xf32> to vector<32x64xbf16>
    %c0_65 = arith.constant 0 : index
    %c0_66 = arith.constant 0 : index
    %c0_67 = arith.constant 0 : index
    %75 = vector.load %arg5[%c0_65, %c0_66, %c0_67] : memref<3x16x32xbf16, #tpu.memory_space<vmem>>, vector<1x16x32xbf16>
    %76 = vector.shape_cast %75 : vector<1x16x32xbf16> to vector<16x32xbf16>
    %cst_68 = arith.constant dense<0.000000e+00> : vector<16x64xf32>
    %77 = tpu.matmul %76, %74, %cst_68 {dimension_numbers = #tpu.dot_dimension_numbers<[1], [0], [0], [1], [0, 0, 1, 1], [], []>} : vector<16x32xbf16>, vector<32x64xbf16>, vector<16x64xf32> -> vector<16x64xf32>
    %c1_69 = arith.constant 1 : index
    %c0_70 = arith.constant 0 : index
    %c0_71 = arith.constant 0 : index
    %78 = vector.load %arg5[%c1_69, %c0_70, %c0_71] : memref<3x16x32xbf16, #tpu.memory_space<vmem>>, vector<1x16x32xbf16>
    %79 = vector.shape_cast %78 : vector<1x16x32xbf16> to vector<16x32xbf16>
    %cst_72 = arith.constant dense<0.000000e+00> : vector<16x64xf32>
    %80 = tpu.matmul %79, %74, %cst_72 {dimension_numbers = #tpu.dot_dimension_numbers<[1], [0], [0], [1], [0, 0, 1, 1], [], []>} : vector<16x32xbf16>, vector<32x64xbf16>, vector<16x64xf32> -> vector<16x64xf32>
    %81 = arith.maximumf %77, %80 : vector<16x64xf32>
    %c2_73 = arith.constant 2 : index
    %c0_74 = arith.constant 0 : index
    %c0_75 = arith.constant 0 : index
    %82 = vector.load %arg5[%c2_73, %c0_74, %c0_75] : memref<3x16x32xbf16, #tpu.memory_space<vmem>>, vector<1x16x32xbf16>
    %83 = vector.shape_cast %82 : vector<1x16x32xbf16> to vector<16x32xbf16>
    %cst_76 = arith.constant dense<0.000000e+00> : vector<16x64xf32>
    %84 = tpu.matmul %83, %74, %cst_76 {dimension_numbers = #tpu.dot_dimension_numbers<[1], [0], [0], [1], [0, 0, 1, 1], [], []>} : vector<16x32xbf16>, vector<32x64xbf16>, vector<16x64xf32> -> vector<16x64xf32>
    %85 = arith.maximumf %81, %84 : vector<16x64xf32>
    %86 = arith.truncf %85 : vector<16x64xf32> to vector<16x64xbf16>
    %c0_77 = arith.constant 0 : index
    %c0_78 = arith.constant 0 : index
    %c0_79 = arith.constant 0 : index
    %87 = vector.load %arg6[%c0_77, %c0_78, %c0_79] : memref<5x16x16xbf16, #tpu.memory_space<vmem>>, vector<1x16x16xbf16>
    %88 = vector.shape_cast %87 : vector<1x16x16xbf16> to vector<16x16xbf16>
    %cst_80 = arith.constant dense<0.000000e+00> : vector<16x64xf32>
    %89 = tpu.matmul %88, %86, %cst_80 {dimension_numbers = #tpu.dot_dimension_numbers<[1], [0], [0], [1], [0, 0, 1, 1], [], []>} : vector<16x16xbf16>, vector<16x64xbf16>, vector<16x64xf32> -> vector<16x64xf32>
    %90 = arith.truncf %89 : vector<16x64xf32> to vector<16x64xbf16>
    %c0_81 = arith.constant 0 : index
    %c0_82 = arith.constant 0 : index
    %c0_83 = arith.constant 0 : index
    %91 = vector.load %arg7[%c0_81, %c0_82, %c0_83] : memref<5x64x128xbf16, #tpu.memory_space<vmem>>, vector<1x64x128xbf16>
    %92 = vector.shape_cast %91 : vector<1x64x128xbf16> to vector<64x128xbf16>
    %cst_84 = arith.constant dense<0.000000e+00> : vector<16x128xf32>
    %93 = tpu.matmul %90, %92, %cst_84 {dimension_numbers = #tpu.dot_dimension_numbers<[1], [0], [0], [1], [0, 0, 1, 1], [], []>} : vector<16x64xbf16>, vector<64x128xbf16>, vector<16x128xf32> -> vector<16x128xf32>
    %c1_85 = arith.constant 1 : index
    %c0_86 = arith.constant 0 : index
    %c0_87 = arith.constant 0 : index
    %94 = vector.load %arg6[%c1_85, %c0_86, %c0_87] : memref<5x16x16xbf16, #tpu.memory_space<vmem>>, vector<1x16x16xbf16>
    %95 = vector.shape_cast %94 : vector<1x16x16xbf16> to vector<16x16xbf16>
    %cst_88 = arith.constant dense<0.000000e+00> : vector<16x64xf32>
    %96 = tpu.matmul %95, %86, %cst_88 {dimension_numbers = #tpu.dot_dimension_numbers<[1], [0], [0], [1], [0, 0, 1, 1], [], []>} : vector<16x16xbf16>, vector<16x64xbf16>, vector<16x64xf32> -> vector<16x64xf32>
    %97 = arith.truncf %96 : vector<16x64xf32> to vector<16x64xbf16>
    %c1_89 = arith.constant 1 : index
    %c0_90 = arith.constant 0 : index
    %c0_91 = arith.constant 0 : index
    %98 = vector.load %arg7[%c1_89, %c0_90, %c0_91] : memref<5x64x128xbf16, #tpu.memory_space<vmem>>, vector<1x64x128xbf16>
    %99 = vector.shape_cast %98 : vector<1x64x128xbf16> to vector<64x128xbf16>
    %cst_92 = arith.constant dense<0.000000e+00> : vector<16x128xf32>
    %100 = tpu.matmul %97, %99, %cst_92 {dimension_numbers = #tpu.dot_dimension_numbers<[1], [0], [0], [1], [0, 0, 1, 1], [], []>} : vector<16x64xbf16>, vector<64x128xbf16>, vector<16x128xf32> -> vector<16x128xf32>
    %101 = arith.addf %93, %100 : vector<16x128xf32>
    %c2_93 = arith.constant 2 : index
    %c0_94 = arith.constant 0 : index
    %c0_95 = arith.constant 0 : index
    %102 = vector.load %arg6[%c2_93, %c0_94, %c0_95] : memref<5x16x16xbf16, #tpu.memory_space<vmem>>, vector<1x16x16xbf16>
    %103 = vector.shape_cast %102 : vector<1x16x16xbf16> to vector<16x16xbf16>
    %cst_96 = arith.constant dense<0.000000e+00> : vector<16x64xf32>
    %104 = tpu.matmul %103, %86, %cst_96 {dimension_numbers = #tpu.dot_dimension_numbers<[1], [0], [0], [1], [0, 0, 1, 1], [], []>} : vector<16x16xbf16>, vector<16x64xbf16>, vector<16x64xf32> -> vector<16x64xf32>
    %105 = arith.truncf %104 : vector<16x64xf32> to vector<16x64xbf16>
    %c2_97 = arith.constant 2 : index
    %c0_98 = arith.constant 0 : index
    %c0_99 = arith.constant 0 : index
    %106 = vector.load %arg7[%c2_97, %c0_98, %c0_99] : memref<5x64x128xbf16, #tpu.memory_space<vmem>>, vector<1x64x128xbf16>
    %107 = vector.shape_cast %106 : vector<1x64x128xbf16> to vector<64x128xbf16>
    %cst_100 = arith.constant dense<0.000000e+00> : vector<16x128xf32>
    %108 = tpu.matmul %105, %107, %cst_100 {dimension_numbers = #tpu.dot_dimension_numbers<[1], [0], [0], [1], [0, 0, 1, 1], [], []>} : vector<16x64xbf16>, vector<64x128xbf16>, vector<16x128xf32> -> vector<16x128xf32>
    %109 = arith.addf %101, %108 : vector<16x128xf32>
    %c3_101 = arith.constant 3 : index
    %c0_102 = arith.constant 0 : index
    %c0_103 = arith.constant 0 : index
    %110 = vector.load %arg6[%c3_101, %c0_102, %c0_103] : memref<5x16x16xbf16, #tpu.memory_space<vmem>>, vector<1x16x16xbf16>
    %111 = vector.shape_cast %110 : vector<1x16x16xbf16> to vector<16x16xbf16>
    %cst_104 = arith.constant dense<0.000000e+00> : vector<16x64xf32>
    %112 = tpu.matmul %111, %86, %cst_104 {dimension_numbers = #tpu.dot_dimension_numbers<[1], [0], [0], [1], [0, 0, 1, 1], [], []>} : vector<16x16xbf16>, vector<16x64xbf16>, vector<16x64xf32> -> vector<16x64xf32>
    %113 = arith.truncf %112 : vector<16x64xf32> to vector<16x64xbf16>
    %c3_105 = arith.constant 3 : index
    %c0_106 = arith.constant 0 : index
    %c0_107 = arith.constant 0 : index
    %114 = vector.load %arg7[%c3_105, %c0_106, %c0_107] : memref<5x64x128xbf16, #tpu.memory_space<vmem>>, vector<1x64x128xbf16>
    %115 = vector.shape_cast %114 : vector<1x64x128xbf16> to vector<64x128xbf16>
    %cst_108 = arith.constant dense<0.000000e+00> : vector<16x128xf32>
    %116 = tpu.matmul %113, %115, %cst_108 {dimension_numbers = #tpu.dot_dimension_numbers<[1], [0], [0], [1], [0, 0, 1, 1], [], []>} : vector<16x64xbf16>, vector<64x128xbf16>, vector<16x128xf32> -> vector<16x128xf32>
    %117 = arith.addf %109, %116 : vector<16x128xf32>
    %c4_109 = arith.constant 4 : index
    %c0_110 = arith.constant 0 : index
    %c0_111 = arith.constant 0 : index
    %118 = vector.load %arg6[%c4_109, %c0_110, %c0_111] : memref<5x16x16xbf16, #tpu.memory_space<vmem>>, vector<1x16x16xbf16>
    %119 = vector.shape_cast %118 : vector<1x16x16xbf16> to vector<16x16xbf16>
    %cst_112 = arith.constant dense<0.000000e+00> : vector<16x64xf32>
    %120 = tpu.matmul %119, %86, %cst_112 {dimension_numbers = #tpu.dot_dimension_numbers<[1], [0], [0], [1], [0, 0, 1, 1], [], []>} : vector<16x16xbf16>, vector<16x64xbf16>, vector<16x64xf32> -> vector<16x64xf32>
    %121 = arith.truncf %120 : vector<16x64xf32> to vector<16x64xbf16>
    %c4_113 = arith.constant 4 : index
    %c0_114 = arith.constant 0 : index
    %c0_115 = arith.constant 0 : index
    %122 = vector.load %arg7[%c4_113, %c0_114, %c0_115] : memref<5x64x128xbf16, #tpu.memory_space<vmem>>, vector<1x64x128xbf16>
    %123 = vector.shape_cast %122 : vector<1x64x128xbf16> to vector<64x128xbf16>
    %cst_116 = arith.constant dense<0.000000e+00> : vector<16x128xf32>
    %124 = tpu.matmul %121, %123, %cst_116 {dimension_numbers = #tpu.dot_dimension_numbers<[1], [0], [0], [1], [0, 0, 1, 1], [], []>} : vector<16x64xbf16>, vector<64x128xbf16>, vector<16x128xf32> -> vector<16x128xf32>
    %125 = arith.addf %117, %124 : vector<16x128xf32>
    %c0_117 = arith.constant 0 : index
    %c0_118 = arith.constant 0 : index
    %126 = vector.load %arg8[%c0_117, %c0_118] : memref<1x128xf32, #tpu.memory_space<vmem>>, vector<1x128xf32>
    %127 = vector.broadcast %126 : vector<1x128xf32> to vector<16x128xf32>
    %128 = arith.addf %125, %127 : vector<16x128xf32>
    %cst_119 = arith.constant 0.000000e+00 : f32
    %129 = vector.broadcast %cst_119 : f32 to vector<16x128xf32>
    %130 = arith.maximumf %128, %129 : vector<16x128xf32>
    %131 = arith.truncf %130 : vector<16x128xf32> to vector<16x128xbf16>
    %c0_120 = arith.constant 0 : index
    %c0_121 = arith.constant 0 : index
    %c0_122 = arith.constant 0 : index
    %132 = vector.load %arg9[%c0_120, %c0_121, %c0_122] : memref<3x128x64xbf16, #tpu.memory_space<vmem>>, vector<1x128x64xbf16>
    %133 = vector.shape_cast %132 : vector<1x128x64xbf16> to vector<128x64xbf16>
    %cst_123 = arith.constant dense<0.000000e+00> : vector<16x64xf32>
    %134 = tpu.matmul %131, %133, %cst_123 {dimension_numbers = #tpu.dot_dimension_numbers<[1], [0], [0], [1], [0, 0, 1, 1], [], []>} : vector<16x128xbf16>, vector<128x64xbf16>, vector<16x64xf32> -> vector<16x64xf32>
    %c1_124 = arith.constant 1 : index
    %c0_125 = arith.constant 0 : index
    %c0_126 = arith.constant 0 : index
    %135 = vector.load %arg9[%c1_124, %c0_125, %c0_126] : memref<3x128x64xbf16, #tpu.memory_space<vmem>>, vector<1x128x64xbf16>
    %136 = vector.shape_cast %135 : vector<1x128x64xbf16> to vector<128x64xbf16>
    %cst_127 = arith.constant dense<0.000000e+00> : vector<16x64xf32>
    %137 = tpu.matmul %131, %136, %cst_127 {dimension_numbers = #tpu.dot_dimension_numbers<[1], [0], [0], [1], [0, 0, 1, 1], [], []>} : vector<16x128xbf16>, vector<128x64xbf16>, vector<16x64xf32> -> vector<16x64xf32>
    %138 = arith.maximumf %134, %137 : vector<16x64xf32>
    %c2_128 = arith.constant 2 : index
    %c0_129 = arith.constant 0 : index
    %c0_130 = arith.constant 0 : index
    %139 = vector.load %arg9[%c2_128, %c0_129, %c0_130] : memref<3x128x64xbf16, #tpu.memory_space<vmem>>, vector<1x128x64xbf16>
    %140 = vector.shape_cast %139 : vector<1x128x64xbf16> to vector<128x64xbf16>
    %cst_131 = arith.constant dense<0.000000e+00> : vector<16x64xf32>
    %141 = tpu.matmul %131, %140, %cst_131 {dimension_numbers = #tpu.dot_dimension_numbers<[1], [0], [0], [1], [0, 0, 1, 1], [], []>} : vector<16x128xbf16>, vector<128x64xbf16>, vector<16x64xf32> -> vector<16x64xf32>
    %142 = arith.maximumf %138, %141 : vector<16x64xf32>
    %143 = arith.truncf %142 : vector<16x64xf32> to vector<16x64xbf16>
    %c0_132 = arith.constant 0 : index
    %c0_133 = arith.constant 0 : index
    %c0_134 = arith.constant 0 : index
    %144 = vector.load %arg10[%c0_132, %c0_133, %c0_134] : memref<3x8x16xbf16, #tpu.memory_space<vmem>>, vector<1x8x16xbf16>
    %145 = vector.shape_cast %144 : vector<1x8x16xbf16> to vector<8x16xbf16>
    %cst_135 = arith.constant dense<0.000000e+00> : vector<8x64xf32>
    %146 = tpu.matmul %145, %143, %cst_135 {dimension_numbers = #tpu.dot_dimension_numbers<[1], [0], [0], [1], [0, 0, 1, 1], [], []>} : vector<8x16xbf16>, vector<16x64xbf16>, vector<8x64xf32> -> vector<8x64xf32>
    %c1_136 = arith.constant 1 : index
    %c0_137 = arith.constant 0 : index
    %c0_138 = arith.constant 0 : index
    %147 = vector.load %arg10[%c1_136, %c0_137, %c0_138] : memref<3x8x16xbf16, #tpu.memory_space<vmem>>, vector<1x8x16xbf16>
    %148 = vector.shape_cast %147 : vector<1x8x16xbf16> to vector<8x16xbf16>
    %cst_139 = arith.constant dense<0.000000e+00> : vector<8x64xf32>
    %149 = tpu.matmul %148, %143, %cst_139 {dimension_numbers = #tpu.dot_dimension_numbers<[1], [0], [0], [1], [0, 0, 1, 1], [], []>} : vector<8x16xbf16>, vector<16x64xbf16>, vector<8x64xf32> -> vector<8x64xf32>
    %150 = arith.maximumf %146, %149 : vector<8x64xf32>
    %c2_140 = arith.constant 2 : index
    %c0_141 = arith.constant 0 : index
    %c0_142 = arith.constant 0 : index
    %151 = vector.load %arg10[%c2_140, %c0_141, %c0_142] : memref<3x8x16xbf16, #tpu.memory_space<vmem>>, vector<1x8x16xbf16>
    %152 = vector.shape_cast %151 : vector<1x8x16xbf16> to vector<8x16xbf16>
    %cst_143 = arith.constant dense<0.000000e+00> : vector<8x64xf32>
    %153 = tpu.matmul %152, %143, %cst_143 {dimension_numbers = #tpu.dot_dimension_numbers<[1], [0], [0], [1], [0, 0, 1, 1], [], []>} : vector<8x16xbf16>, vector<16x64xbf16>, vector<8x64xf32> -> vector<8x64xf32>
    %154 = arith.maximumf %150, %153 : vector<8x64xf32>
    %155 = arith.truncf %154 : vector<8x64xf32> to vector<8x64xbf16>
    %c0_144 = arith.constant 0 : index
    %c0_145 = arith.constant 0 : index
    %c0_146 = arith.constant 0 : index
    %156 = vector.load %arg11[%c0_144, %c0_145, %c0_146] : memref<3x8x8xbf16, #tpu.memory_space<vmem>>, vector<1x8x8xbf16>
    %157 = vector.shape_cast %156 : vector<1x8x8xbf16> to vector<8x8xbf16>
    %cst_147 = arith.constant dense<0.000000e+00> : vector<8x64xf32>
    %158 = tpu.matmul %157, %155, %cst_147 {dimension_numbers = #tpu.dot_dimension_numbers<[1], [0], [0], [1], [0, 0, 1, 1], [], []>} : vector<8x8xbf16>, vector<8x64xbf16>, vector<8x64xf32> -> vector<8x64xf32>
    %159 = arith.truncf %158 : vector<8x64xf32> to vector<8x64xbf16>
    %c0_148 = arith.constant 0 : index
    %c0_149 = arith.constant 0 : index
    %c0_150 = arith.constant 0 : index
    %160 = vector.load %arg12[%c0_148, %c0_149, %c0_150] : memref<3x64x128xbf16, #tpu.memory_space<vmem>>, vector<1x64x128xbf16>
    %161 = vector.shape_cast %160 : vector<1x64x128xbf16> to vector<64x128xbf16>
    %cst_151 = arith.constant dense<0.000000e+00> : vector<8x128xf32>
    %162 = tpu.matmul %159, %161, %cst_151 {dimension_numbers = #tpu.dot_dimension_numbers<[1], [0], [0], [1], [0, 0, 1, 1], [], []>} : vector<8x64xbf16>, vector<64x128xbf16>, vector<8x128xf32> -> vector<8x128xf32>
    %c1_152 = arith.constant 1 : index
    %c0_153 = arith.constant 0 : index
    %c0_154 = arith.constant 0 : index
    %163 = vector.load %arg11[%c1_152, %c0_153, %c0_154] : memref<3x8x8xbf16, #tpu.memory_space<vmem>>, vector<1x8x8xbf16>
    %164 = vector.shape_cast %163 : vector<1x8x8xbf16> to vector<8x8xbf16>
    %cst_155 = arith.constant dense<0.000000e+00> : vector<8x64xf32>
    %165 = tpu.matmul %164, %155, %cst_155 {dimension_numbers = #tpu.dot_dimension_numbers<[1], [0], [0], [1], [0, 0, 1, 1], [], []>} : vector<8x8xbf16>, vector<8x64xbf16>, vector<8x64xf32> -> vector<8x64xf32>
    %166 = arith.truncf %165 : vector<8x64xf32> to vector<8x64xbf16>
    %c1_156 = arith.constant 1 : index
    %c0_157 = arith.constant 0 : index
    %c0_158 = arith.constant 0 : index
    %167 = vector.load %arg12[%c1_156, %c0_157, %c0_158] : memref<3x64x128xbf16, #tpu.memory_space<vmem>>, vector<1x64x128xbf16>
    %168 = vector.shape_cast %167 : vector<1x64x128xbf16> to vector<64x128xbf16>
    %cst_159 = arith.constant dense<0.000000e+00> : vector<8x128xf32>
    %169 = tpu.matmul %166, %168, %cst_159 {dimension_numbers = #tpu.dot_dimension_numbers<[1], [0], [0], [1], [0, 0, 1, 1], [], []>} : vector<8x64xbf16>, vector<64x128xbf16>, vector<8x128xf32> -> vector<8x128xf32>
    %170 = arith.addf %162, %169 : vector<8x128xf32>
    %c2_160 = arith.constant 2 : index
    %c0_161 = arith.constant 0 : index
    %c0_162 = arith.constant 0 : index
    %171 = vector.load %arg11[%c2_160, %c0_161, %c0_162] : memref<3x8x8xbf16, #tpu.memory_space<vmem>>, vector<1x8x8xbf16>
    %172 = vector.shape_cast %171 : vector<1x8x8xbf16> to vector<8x8xbf16>
    %cst_163 = arith.constant dense<0.000000e+00> : vector<8x64xf32>
    %173 = tpu.matmul %172, %155, %cst_163 {dimension_numbers = #tpu.dot_dimension_numbers<[1], [0], [0], [1], [0, 0, 1, 1], [], []>} : vector<8x8xbf16>, vector<8x64xbf16>, vector<8x64xf32> -> vector<8x64xf32>
    %174 = arith.truncf %173 : vector<8x64xf32> to vector<8x64xbf16>
    %c2_164 = arith.constant 2 : index
    %c0_165 = arith.constant 0 : index
    %c0_166 = arith.constant 0 : index
    %175 = vector.load %arg12[%c2_164, %c0_165, %c0_166] : memref<3x64x128xbf16, #tpu.memory_space<vmem>>, vector<1x64x128xbf16>
    %176 = vector.shape_cast %175 : vector<1x64x128xbf16> to vector<64x128xbf16>
    %cst_167 = arith.constant dense<0.000000e+00> : vector<8x128xf32>
    %177 = tpu.matmul %174, %176, %cst_167 {dimension_numbers = #tpu.dot_dimension_numbers<[1], [0], [0], [1], [0, 0, 1, 1], [], []>} : vector<8x64xbf16>, vector<64x128xbf16>, vector<8x128xf32> -> vector<8x128xf32>
    %178 = arith.addf %170, %177 : vector<8x128xf32>
    %c0_168 = arith.constant 0 : index
    %c0_169 = arith.constant 0 : index
    %179 = vector.load %arg13[%c0_168, %c0_169] : memref<1x128xf32, #tpu.memory_space<vmem>>, vector<1x128xf32>
    %180 = vector.broadcast %179 : vector<1x128xf32> to vector<8x128xf32>
    %181 = arith.addf %178, %180 : vector<8x128xf32>
    %cst_170 = arith.constant 0.000000e+00 : f32
    %182 = vector.broadcast %cst_170 : f32 to vector<8x128xf32>
    %183 = arith.maximumf %181, %182 : vector<8x128xf32>
    %184 = arith.truncf %183 : vector<8x128xf32> to vector<8x128xbf16>
    %c0_171 = arith.constant 0 : index
    %c0_172 = arith.constant 0 : index
    %c0_173 = arith.constant 0 : index
    %185 = vector.load %arg14[%c0_171, %c0_172, %c0_173] : memref<3x128x64xbf16, #tpu.memory_space<vmem>>, vector<1x128x64xbf16>
    %186 = vector.shape_cast %185 : vector<1x128x64xbf16> to vector<128x64xbf16>
    %cst_174 = arith.constant dense<0.000000e+00> : vector<8x64xf32>
    %187 = tpu.matmul %184, %186, %cst_174 {dimension_numbers = #tpu.dot_dimension_numbers<[1], [0], [0], [1], [0, 0, 1, 1], [], []>} : vector<8x128xbf16>, vector<128x64xbf16>, vector<8x64xf32> -> vector<8x64xf32>
    %c1_175 = arith.constant 1 : index
    %c0_176 = arith.constant 0 : index
    %c0_177 = arith.constant 0 : index
    %188 = vector.load %arg14[%c1_175, %c0_176, %c0_177] : memref<3x128x64xbf16, #tpu.memory_space<vmem>>, vector<1x128x64xbf16>
    %189 = vector.shape_cast %188 : vector<1x128x64xbf16> to vector<128x64xbf16>
    %cst_178 = arith.constant dense<0.000000e+00> : vector<8x64xf32>
    %190 = tpu.matmul %184, %189, %cst_178 {dimension_numbers = #tpu.dot_dimension_numbers<[1], [0], [0], [1], [0, 0, 1, 1], [], []>} : vector<8x128xbf16>, vector<128x64xbf16>, vector<8x64xf32> -> vector<8x64xf32>
    %191 = arith.maximumf %187, %190 : vector<8x64xf32>
    %c2_179 = arith.constant 2 : index
    %c0_180 = arith.constant 0 : index
    %c0_181 = arith.constant 0 : index
    %192 = vector.load %arg14[%c2_179, %c0_180, %c0_181] : memref<3x128x64xbf16, #tpu.memory_space<vmem>>, vector<1x128x64xbf16>
    %193 = vector.shape_cast %192 : vector<1x128x64xbf16> to vector<128x64xbf16>
    %cst_182 = arith.constant dense<0.000000e+00> : vector<8x64xf32>
    %194 = tpu.matmul %184, %193, %cst_182 {dimension_numbers = #tpu.dot_dimension_numbers<[1], [0], [0], [1], [0, 0, 1, 1], [], []>} : vector<8x128xbf16>, vector<128x64xbf16>, vector<8x64xf32> -> vector<8x64xf32>
    %195 = arith.maximumf %191, %194 : vector<8x64xf32>
    %196 = arith.truncf %195 : vector<8x64xf32> to vector<8x64xbf16>
    %c0_183 = arith.constant 0 : index
    %c0_184 = arith.constant 0 : index
    %c0_185 = arith.constant 0 : index
    %197 = vector.load %arg15[%c0_183, %c0_184, %c0_185] : memref<3x4x8xbf16, #tpu.memory_space<vmem>>, vector<1x4x8xbf16>
    %198 = vector.shape_cast %197 : vector<1x4x8xbf16> to vector<4x8xbf16>
    %cst_186 = arith.constant dense<0.000000e+00> : vector<4x64xf32>
    %199 = tpu.matmul %198, %196, %cst_186 {dimension_numbers = #tpu.dot_dimension_numbers<[1], [0], [0], [1], [0, 0, 1, 1], [], []>} : vector<4x8xbf16>, vector<8x64xbf16>, vector<4x64xf32> -> vector<4x64xf32>
    %c1_187 = arith.constant 1 : index
    %c0_188 = arith.constant 0 : index
    %c0_189 = arith.constant 0 : index
    %200 = vector.load %arg15[%c1_187, %c0_188, %c0_189] : memref<3x4x8xbf16, #tpu.memory_space<vmem>>, vector<1x4x8xbf16>
    %201 = vector.shape_cast %200 : vector<1x4x8xbf16> to vector<4x8xbf16>
    %cst_190 = arith.constant dense<0.000000e+00> : vector<4x64xf32>
    %202 = tpu.matmul %201, %196, %cst_190 {dimension_numbers = #tpu.dot_dimension_numbers<[1], [0], [0], [1], [0, 0, 1, 1], [], []>} : vector<4x8xbf16>, vector<8x64xbf16>, vector<4x64xf32> -> vector<4x64xf32>
    %203 = arith.maximumf %199, %202 : vector<4x64xf32>
    %c2_191 = arith.constant 2 : index
    %c0_192 = arith.constant 0 : index
    %c0_193 = arith.constant 0 : index
    %204 = vector.load %arg15[%c2_191, %c0_192, %c0_193] : memref<3x4x8xbf16, #tpu.memory_space<vmem>>, vector<1x4x8xbf16>
    %205 = vector.shape_cast %204 : vector<1x4x8xbf16> to vector<4x8xbf16>
    %cst_194 = arith.constant dense<0.000000e+00> : vector<4x64xf32>
    %206 = tpu.matmul %205, %196, %cst_194 {dimension_numbers = #tpu.dot_dimension_numbers<[1], [0], [0], [1], [0, 0, 1, 1], [], []>} : vector<4x8xbf16>, vector<8x64xbf16>, vector<4x64xf32> -> vector<4x64xf32>
    %207 = arith.maximumf %203, %206 : vector<4x64xf32>
    %208 = arith.truncf %207 : vector<4x64xf32> to vector<4x64xbf16>
    %c0_195 = arith.constant 0 : index
    %c0_196 = arith.constant 0 : index
    %c0_197 = arith.constant 0 : index
    %209 = vector.load %arg16[%c0_195, %c0_196, %c0_197] : memref<3x4x4xbf16, #tpu.memory_space<vmem>>, vector<1x4x4xbf16>
    %210 = vector.shape_cast %209 : vector<1x4x4xbf16> to vector<4x4xbf16>
    %cst_198 = arith.constant dense<0.000000e+00> : vector<4x64xf32>
    %211 = tpu.matmul %210, %208, %cst_198 {dimension_numbers = #tpu.dot_dimension_numbers<[1], [0], [0], [1], [0, 0, 1, 1], [], []>} : vector<4x4xbf16>, vector<4x64xbf16>, vector<4x64xf32> -> vector<4x64xf32>
    %212 = arith.truncf %211 : vector<4x64xf32> to vector<4x64xbf16>
    %c0_199 = arith.constant 0 : index
    %c0_200 = arith.constant 0 : index
    %c0_201 = arith.constant 0 : index
    %213 = vector.load %arg17[%c0_199, %c0_200, %c0_201] : memref<3x64x64xbf16, #tpu.memory_space<vmem>>, vector<1x64x64xbf16>
    %214 = vector.shape_cast %213 : vector<1x64x64xbf16> to vector<64x64xbf16>
    %cst_202 = arith.constant dense<0.000000e+00> : vector<4x64xf32>
    %215 = tpu.matmul %212, %214, %cst_202 {dimension_numbers = #tpu.dot_dimension_numbers<[1], [0], [0], [1], [0, 0, 1, 1], [], []>} : vector<4x64xbf16>, vector<64x64xbf16>, vector<4x64xf32> -> vector<4x64xf32>
    %c1_203 = arith.constant 1 : index
    %c0_204 = arith.constant 0 : index
    %c0_205 = arith.constant 0 : index
    %216 = vector.load %arg16[%c1_203, %c0_204, %c0_205] : memref<3x4x4xbf16, #tpu.memory_space<vmem>>, vector<1x4x4xbf16>
    %217 = vector.shape_cast %216 : vector<1x4x4xbf16> to vector<4x4xbf16>
    %cst_206 = arith.constant dense<0.000000e+00> : vector<4x64xf32>
    %218 = tpu.matmul %217, %208, %cst_206 {dimension_numbers = #tpu.dot_dimension_numbers<[1], [0], [0], [1], [0, 0, 1, 1], [], []>} : vector<4x4xbf16>, vector<4x64xbf16>, vector<4x64xf32> -> vector<4x64xf32>
    %219 = arith.truncf %218 : vector<4x64xf32> to vector<4x64xbf16>
    %c1_207 = arith.constant 1 : index
    %c0_208 = arith.constant 0 : index
    %c0_209 = arith.constant 0 : index
    %220 = vector.load %arg17[%c1_207, %c0_208, %c0_209] : memref<3x64x64xbf16, #tpu.memory_space<vmem>>, vector<1x64x64xbf16>
    %221 = vector.shape_cast %220 : vector<1x64x64xbf16> to vector<64x64xbf16>
    %cst_210 = arith.constant dense<0.000000e+00> : vector<4x64xf32>
    %222 = tpu.matmul %219, %221, %cst_210 {dimension_numbers = #tpu.dot_dimension_numbers<[1], [0], [0], [1], [0, 0, 1, 1], [], []>} : vector<4x64xbf16>, vector<64x64xbf16>, vector<4x64xf32> -> vector<4x64xf32>
    %223 = arith.addf %215, %222 : vector<4x64xf32>
    %c2_211 = arith.constant 2 : index
    %c0_212 = arith.constant 0 : index
    %c0_213 = arith.constant 0 : index
    %224 = vector.load %arg16[%c2_211, %c0_212, %c0_213] : memref<3x4x4xbf16, #tpu.memory_space<vmem>>, vector<1x4x4xbf16>
    %225 = vector.shape_cast %224 : vector<1x4x4xbf16> to vector<4x4xbf16>
    %cst_214 = arith.constant dense<0.000000e+00> : vector<4x64xf32>
    %226 = tpu.matmul %225, %208, %cst_214 {dimension_numbers = #tpu.dot_dimension_numbers<[1], [0], [0], [1], [0, 0, 1, 1], [], []>} : vector<4x4xbf16>, vector<4x64xbf16>, vector<4x64xf32> -> vector<4x64xf32>
    %227 = arith.truncf %226 : vector<4x64xf32> to vector<4x64xbf16>
    %c2_215 = arith.constant 2 : index
    %c0_216 = arith.constant 0 : index
    %c0_217 = arith.constant 0 : index
    %228 = vector.load %arg17[%c2_215, %c0_216, %c0_217] : memref<3x64x64xbf16, #tpu.memory_space<vmem>>, vector<1x64x64xbf16>
    %229 = vector.shape_cast %228 : vector<1x64x64xbf16> to vector<64x64xbf16>
    %cst_218 = arith.constant dense<0.000000e+00> : vector<4x64xf32>
    %230 = tpu.matmul %227, %229, %cst_218 {dimension_numbers = #tpu.dot_dimension_numbers<[1], [0], [0], [1], [0, 0, 1, 1], [], []>} : vector<4x64xbf16>, vector<64x64xbf16>, vector<4x64xf32> -> vector<4x64xf32>
    %231 = arith.addf %223, %230 : vector<4x64xf32>
    %c0_219 = arith.constant 0 : index
    %c0_220 = arith.constant 0 : index
    %232 = vector.load %arg18[%c0_219, %c0_220] : memref<1x64xf32, #tpu.memory_space<vmem>>, vector<1x64xf32>
    %233 = vector.broadcast %232 : vector<1x64xf32> to vector<4x64xf32>
    %234 = arith.addf %231, %233 : vector<4x64xf32>
    %cst_221 = arith.constant 0.000000e+00 : f32
    %235 = vector.broadcast %cst_221 : f32 to vector<4x64xf32>
    %236 = arith.maximumf %234, %235 : vector<4x64xf32>
    %237 = arith.truncf %236 : vector<4x64xf32> to vector<4x64xbf16>
    %c0_222 = arith.constant 0 : index
    %c0_223 = arith.constant 0 : index
    %c0_224 = arith.constant 0 : index
    %238 = vector.load %arg19[%c0_222, %c0_223, %c0_224] : memref<3x64x32xbf16, #tpu.memory_space<vmem>>, vector<1x64x32xbf16>
    %239 = vector.shape_cast %238 : vector<1x64x32xbf16> to vector<64x32xbf16>
    %cst_225 = arith.constant dense<0.000000e+00> : vector<4x32xf32>
    %240 = tpu.matmul %237, %239, %cst_225 {dimension_numbers = #tpu.dot_dimension_numbers<[1], [0], [0], [1], [0, 0, 1, 1], [], []>} : vector<4x64xbf16>, vector<64x32xbf16>, vector<4x32xf32> -> vector<4x32xf32>
    %c1_226 = arith.constant 1 : index
    %c0_227 = arith.constant 0 : index
    %c0_228 = arith.constant 0 : index
    %241 = vector.load %arg19[%c1_226, %c0_227, %c0_228] : memref<3x64x32xbf16, #tpu.memory_space<vmem>>, vector<1x64x32xbf16>
    %242 = vector.shape_cast %241 : vector<1x64x32xbf16> to vector<64x32xbf16>
    %cst_229 = arith.constant dense<0.000000e+00> : vector<4x32xf32>
    %243 = tpu.matmul %237, %242, %cst_229 {dimension_numbers = #tpu.dot_dimension_numbers<[1], [0], [0], [1], [0, 0, 1, 1], [], []>} : vector<4x64xbf16>, vector<64x32xbf16>, vector<4x32xf32> -> vector<4x32xf32>
    %244 = arith.maximumf %240, %243 : vector<4x32xf32>
    %c2_230 = arith.constant 2 : index
    %c0_231 = arith.constant 0 : index
    %c0_232 = arith.constant 0 : index
    %245 = vector.load %arg19[%c2_230, %c0_231, %c0_232] : memref<3x64x32xbf16, #tpu.memory_space<vmem>>, vector<1x64x32xbf16>
    %246 = vector.shape_cast %245 : vector<1x64x32xbf16> to vector<64x32xbf16>
    %cst_233 = arith.constant dense<0.000000e+00> : vector<4x32xf32>
    %247 = tpu.matmul %237, %246, %cst_233 {dimension_numbers = #tpu.dot_dimension_numbers<[1], [0], [0], [1], [0, 0, 1, 1], [], []>} : vector<4x64xbf16>, vector<64x32xbf16>, vector<4x32xf32> -> vector<4x32xf32>
    %248 = arith.maximumf %244, %247 : vector<4x32xf32>
    %249 = arith.truncf %248 : vector<4x32xf32> to vector<4x32xbf16>
    %c0_234 = arith.constant 0 : index
    %c0_235 = arith.constant 0 : index
    %c0_236 = arith.constant 0 : index
    %250 = vector.load %arg20[%c0_234, %c0_235, %c0_236] : memref<3x2x4xbf16, #tpu.memory_space<vmem>>, vector<1x2x4xbf16>
    %251 = vector.shape_cast %250 : vector<1x2x4xbf16> to vector<2x4xbf16>
    %cst_237 = arith.constant dense<0.000000e+00> : vector<2x32xf32>
    %252 = tpu.matmul %251, %249, %cst_237 {dimension_numbers = #tpu.dot_dimension_numbers<[1], [0], [0], [1], [0, 0, 1, 1], [], []>} : vector<2x4xbf16>, vector<4x32xbf16>, vector<2x32xf32> -> vector<2x32xf32>
    %c1_238 = arith.constant 1 : index
    %c0_239 = arith.constant 0 : index
    %c0_240 = arith.constant 0 : index
    %253 = vector.load %arg20[%c1_238, %c0_239, %c0_240] : memref<3x2x4xbf16, #tpu.memory_space<vmem>>, vector<1x2x4xbf16>
    %254 = vector.shape_cast %253 : vector<1x2x4xbf16> to vector<2x4xbf16>
    %cst_241 = arith.constant dense<0.000000e+00> : vector<2x32xf32>
    %255 = tpu.matmul %254, %249, %cst_241 {dimension_numbers = #tpu.dot_dimension_numbers<[1], [0], [0], [1], [0, 0, 1, 1], [], []>} : vector<2x4xbf16>, vector<4x32xbf16>, vector<2x32xf32> -> vector<2x32xf32>
    %256 = arith.maximumf %252, %255 : vector<2x32xf32>
    %c2_242 = arith.constant 2 : index
    %c0_243 = arith.constant 0 : index
    %c0_244 = arith.constant 0 : index
    %257 = vector.load %arg20[%c2_242, %c0_243, %c0_244] : memref<3x2x4xbf16, #tpu.memory_space<vmem>>, vector<1x2x4xbf16>
    %258 = vector.shape_cast %257 : vector<1x2x4xbf16> to vector<2x4xbf16>
    %cst_245 = arith.constant dense<0.000000e+00> : vector<2x32xf32>
    %259 = tpu.matmul %258, %249, %cst_245 {dimension_numbers = #tpu.dot_dimension_numbers<[1], [0], [0], [1], [0, 0, 1, 1], [], []>} : vector<2x4xbf16>, vector<4x32xbf16>, vector<2x32xf32> -> vector<2x32xf32>
    %260 = arith.maximumf %256, %259 : vector<2x32xf32>
    %c0_246 = arith.constant 0 : index
    %c0_247 = arith.constant 0 : index
    %261 = vector.load %arg21[%c0_246, %c0_247] : memref<32x32xf32, #tpu.memory_space<vmem>>, vector<32x32xf32>
    %cst_248 = arith.constant dense<0.000000e+00> : vector<2x32xf32>
    %262 = tpu.matmul %260, %261, %cst_248 {dimension_numbers = #tpu.dot_dimension_numbers<[1], [0], [0], [1], [0, 0, 1, 1], [], []>} : vector<2x32xf32>, vector<32x32xf32>, vector<2x32xf32> -> vector<2x32xf32>
    %c0_249 = arith.constant 0 : index
    %c0_250 = arith.constant 0 : index
    %263 = vector.load %arg22[%c0_249, %c0_250] : memref<1x32xf32, #tpu.memory_space<vmem>>, vector<1x32xf32>
    %264 = vector.broadcast %263 : vector<1x32xf32> to vector<2x32xf32>
    %265 = arith.addf %262, %264 : vector<2x32xf32>
    %cst_251 = arith.constant 0.000000e+00 : f32
    %266 = vector.broadcast %cst_251 : f32 to vector<2x32xf32>
    %267 = arith.maximumf %265, %266 : vector<2x32xf32>
    %c0_252 = arith.constant 0 : index
    %c0_253 = arith.constant 0 : index
    %268 = vector.load %arg23[%c0_252, %c0_253] : memref<32x16xf32, #tpu.memory_space<vmem>>, vector<32x16xf32>
    %cst_254 = arith.constant dense<0.000000e+00> : vector<2x16xf32>
    %269 = tpu.matmul %267, %268, %cst_254 {dimension_numbers = #tpu.dot_dimension_numbers<[1], [0], [0], [1], [0, 0, 1, 1], [], []>} : vector<2x32xf32>, vector<32x16xf32>, vector<2x16xf32> -> vector<2x16xf32>
    %c0_255 = arith.constant 0 : index
    %c0_256 = arith.constant 0 : index
    %270 = vector.load %arg24[%c0_255, %c0_256] : memref<1x16xf32, #tpu.memory_space<vmem>>, vector<1x16xf32>
    %271 = vector.broadcast %270 : vector<1x16xf32> to vector<2x16xf32>
    %272 = arith.addf %269, %271 : vector<2x16xf32>
    %cst_257 = arith.constant 0.000000e+00 : f32
    %273 = vector.broadcast %cst_257 : f32 to vector<2x16xf32>
    %274 = arith.maximumf %272, %273 : vector<2x16xf32>
    %c0_258 = arith.constant 0 : index
    %c0_259 = arith.constant 0 : index
    %275 = vector.load %arg25[%c0_258, %c0_259] : memref<16x2xf32, #tpu.memory_space<vmem>>, vector<16x2xf32>
    %cst_260 = arith.constant dense<0.000000e+00> : vector<2x2xf32>
    %276 = tpu.matmul %274, %275, %cst_260 {dimension_numbers = #tpu.dot_dimension_numbers<[1], [0], [0], [1], [0, 0, 1, 1], [], []>} : vector<2x16xf32>, vector<16x2xf32>, vector<2x2xf32> -> vector<2x2xf32>
    %c0_261 = arith.constant 0 : index
    %c0_262 = arith.constant 0 : index
    %277 = vector.load %arg26[%c0_261, %c0_262] : memref<1x2xf32, #tpu.memory_space<vmem>>, vector<1x2xf32>
    %278 = vector.broadcast %277 : vector<1x2xf32> to vector<2x2xf32>
    %279 = arith.addf %276, %278 : vector<2x2xf32>
    %280 = arith.negf %279 : vector<2x2xf32>
    %281 = math.exp %280 : vector<2x2xf32>
    %cst_263 = arith.constant 1.000000e+00 : f32
    %282 = vector.broadcast %cst_263 : f32 to vector<2x2xf32>
    %283 = arith.addf %282, %281 : vector<2x2xf32>
    %284 = arith.divf %282, %283 : vector<2x2xf32>
    %c0_264 = arith.constant 0 : index
    %c0_265 = arith.constant 0 : index
    %285 = vector.load %arg27[%c0_264, %c0_265] : memref<2x2xf32, #tpu.memory_space<vmem>>, vector<2x2xf32>
    tpu.vector_store %arg27[%c0_264, %c0_265], %284 {strides = array<i32>} : memref<2x2xf32, #tpu.memory_space<vmem>>, vector<2x2xf32>,
    return
  }
}

</mosaic_0001>

<llo_original>
// kernel: _lambda_.1
$region0: #{_lambda_.1}
  #allocation0 [shape = 'u32[]', space=smem, size = 0x4, offset = 0x4, fixed_abs, tag = 'smem constant byte address 0x4 - core index']
  #allocation1 [shape = 'u32[144,128]{1,0:T(1,128)}', space=vmem, size = 0x12000, scoped, tag = 'internal scratch']
  %s0 = inlined_call_operand.vmem [shape: f32[64,128], index: 0, kind: input, shape index: {}]
  %s1 = inlined_call_operand.hbm [shape: bf16[7,32,64], index: 1, kind: input, shape index: {}]
  %s2 = inlined_call_operand.vmem [shape: bf16[7,128,128], index: 2, kind: input, shape index: {}]
  %s3 = inlined_call_operand.hbm [shape: f32[1,128], index: 3, kind: input, shape index: {}]
  %s4 = inlined_call_operand.vmem [shape: bf16[3,128,64], index: 4, kind: input, shape index: {}]
  %s5 = inlined_call_operand.hbm [shape: bf16[3,16,32], index: 5, kind: input, shape index: {}]
  %s6 = inlined_call_operand.hbm [shape: bf16[5,16,16], index: 6, kind: input, shape index: {}]
  %s7 = inlined_call_operand.vmem [shape: bf16[5,64,128], index: 7, kind: input, shape index: {}]
  %s8 = inlined_call_operand.hbm [shape: f32[1,128], index: 8, kind: input, shape index: {}]
  %s9 = inlined_call_operand.vmem [shape: bf16[3,128,64], index: 9, kind: input, shape index: {}]
  %s10 = inlined_call_operand.hbm [shape: bf16[3,8,16], index: 10, kind: input, shape index: {}]
  %s11 = inlined_call_operand.hbm [shape: bf16[3,8,8], index: 11, kind: input, shape index: {}]
  %s12 = inlined_call_operand.hbm [shape: bf16[3,64,128], index: 12, kind: input, shape index: {}]
  %s13 = inlined_call_operand.hbm [shape: f32[1,128], index: 13, kind: input, shape index: {}]
  %s14 = inlined_call_operand.vmem [shape: bf16[3,128,64], index: 14, kind: input, shape index: {}]
  %s15 = inlined_call_operand.hbm [shape: bf16[3,4,8], index: 15, kind: input, shape index: {}]
  %s16 = inlined_call_operand.vmem [shape: bf16[3,4,4], index: 16, kind: input, shape index: {}]
  %s17 = inlined_call_operand.hbm [shape: bf16[3,64,64], index: 17, kind: input, shape index: {}]
  %s18 = inlined_call_operand.hbm [shape: f32[1,64], index: 18, kind: input, shape index: {}]
  %s19 = inlined_call_operand.hbm [shape: bf16[3,64,32], index: 19, kind: input, shape index: {}]
  %s20 = inlined_call_operand.vmem [shape: bf16[3,2,4], index: 20, kind: input, shape index: {}]
  %s21 = inlined_call_operand.hbm [shape: f32[32,32], index: 21, kind: input, shape index: {}]
  %s22 = inlined_call_operand.hbm [shape: f32[1,32], index: 22, kind: input, shape index: {}]
  %s23 = inlined_call_operand.hbm [shape: f32[32,16], index: 23, kind: input, shape index: {}]
  %s24 = inlined_call_operand.hbm [shape: f32[1,16], index: 24, kind: input, shape index: {}]
  %s25 = inlined_call_operand.hbm [shape: f32[16,2], index: 25, kind: input, shape index: {}]
  %s26 = inlined_call_operand.hbm [shape: f32[1,2], index: 26, kind: input, shape index: {}]
  %s27 = inlined_call_operand.hbm [shape: f32[2,2], index: 27, kind: output, shape index: {}]
  %s28 = sld [smem:[#allocation0]]
  $region194: #{_lambda_.1} parent=0
    _
  %s30 = ssub.s32 1, %s28
  %s31 = scalar_select 0, %s30, %s28
  $region1: #{_lambda_.1} parent=0
    #allocation2 [shape = 'u8[57344]{0}', space=vmem, size = 0xe000, scoped, tag = 'input window, operand 1, single buffered']
    #allocation3 [shape = 's32[1]{0}', space=sflag, size = 0x4, scoped, tag = 'scoped memory for _lambda_.1']
    #allocation4 [shape = 's32[1]{0}', space=sflag, size = 0x4, scoped, tag = 'scoped memory for _lambda_.1']
    #allocation5 [shape = 'u8[512]{0}', space=vmem, size = 0x400, scoped, tag = 'input window, operand 3, single buffered']
    #allocation6 [shape = 's32[1]{0}', space=sflag, size = 0x4, scoped, tag = 'scoped memory for _lambda_.1']
    #allocation7 [shape = 'u8[12288]{0}', space=vmem, size = 0x3000, scoped, tag = 'input window, operand 5, single buffered']
    #allocation8 [shape = 'u8[20480]{0}', space=vmem, size = 0x5000, scoped, tag = 'input window, operand 6, single buffered']
    #allocation9 [shape = 's32[1]{0}', space=sflag, size = 0x4, scoped, tag = 'scoped memory for _lambda_.1']
    #allocation10 [shape = 'u8[512]{0}', space=vmem, size = 0x400, scoped, tag = 'input window, operand 8, single buffered']
    #allocation11 [shape = 'u8[6144]{0}', space=vmem, size = 0x1800, scoped, tag = 'input window, operand 10, single buffered']
    #allocation12 [shape = 's32[1]{0}', space=sflag, size = 0x4, scoped, tag = 'scoped memory for _lambda_.1']
    #allocation13 [shape = 'u8[6144]{0}', space=vmem, size = 0x1800, scoped, tag = 'input window, operand 11, single buffered']
    #allocation14 [shape = 'u8[49152]{0}', space=vmem, size = 0xc000, scoped, tag = 'input window, operand 12, single buffered']
    #allocation15 [shape = 's32[1]{0}', space=sflag, size = 0x4, scoped, tag = 'scoped memory for _lambda_.1']
    #allocation16 [shape = 'u8[512]{0}', space=vmem, size = 0x400, scoped, tag = 'input window, operand 13, single buffered']
    #allocation17 [shape = 'u8[3072]{0}', space=vmem, size = 0xc00, scoped, tag = 'input window, operand 15, single buffered']
    #allocation18 [shape = 's32[1]{0}', space=sflag, size = 0x4, scoped, tag = 'scoped memory for _lambda_.1']
    #allocation19 [shape = 'u8[49152]{0}', space=vmem, size = 0xc000, scoped, tag = 'input window, operand 17, single buffered']
    #allocation20 [shape = 'u8[512]{0}', space=vmem, size = 0x400, scoped, tag = 'input window, operand 18, single buffered']
    #allocation21 [shape = 's32[1]{0}', space=sflag, size = 0x4, scoped, tag = 'scoped memory for _lambda_.1']
    #allocation22 [shape = 'u8[49152]{0}', space=vmem, size = 0xc000, scoped, tag = 'input window, operand 19, single buffered']
    #allocation23 [shape = 'u8[16384]{0}', space=vmem, size = 0x4000, scoped, tag = 'input window, operand 21, single buffered']
    #allocation24 [shape = 's32[1]{0}', space=sflag, size = 0x4, scoped, tag = 'scoped memory for _lambda_.1']
    #allocation25 [shape = 'u8[512]{0}', space=vmem, size = 0x400, scoped, tag = 'input window, operand 22, single buffered']
    #allocation26 [shape = 'u8[16384]{0}', space=vmem, size = 0x4000, scoped, tag = 'input window, operand 23, single buffered']
    #allocation27 [shape = 's32[1]{0}', space=sflag, size = 0x4, scoped, tag = 'scoped memory for _lambda_.1']
    #allocation28 [shape = 'u8[512]{0}', space=vmem, size = 0x400, scoped, tag = 'input window, operand 24, single buffered']
    #allocation29 [shape = 'u8[8192]{0}', space=vmem, size = 0x2000, scoped, tag = 'input window, operand 25, single buffered']
    #allocation30 [shape = 's32[1]{0}', space=sflag, size = 0x4, scoped, tag = 'scoped memory for _lambda_.1']
    #allocation31 [shape = 'u8[512]{0}', space=vmem, size = 0x400, scoped, tag = 'input window, operand 26, single buffered']
    #allocation32 [shape = 'u8[1024]{0}', space=vmem, size = 0x400, scoped, tag = 'output window, operand 0, single buffered']
    %32 = vsyncpa [#allocation3], 0
    %33 = vsyncpa [#allocation6], 0
    %34 = vsyncpa [#allocation9], 0
    %35 = vsyncpa [#allocation12], 0
    %36 = vsyncpa [#allocation15], 0
    %37 = vsyncpa [#allocation18], 0
    %38 = vsyncpa [#allocation21], 0
    %39 = vsyncpa [#allocation24], 0
    %40 = vsyncpa [#allocation27], 0
    %41 = vsyncpa [#allocation30], 0
    %42 = vsyncpa [#allocation4], 0
    // Predicated region
    $region2: #{_lambda_.1} parent=1 // pred_check
      _
    $region3: #{_lambda_.1} parent=1 // pred_check_branch
      %44 = sbr.rel (0) target = $region5
    $region4: #{_lambda_.1} parent=1 // pred_region
      _
    $region5: #{_lambda_.1} parent=1 // pred_fallthru
      _
    // Predicated region
    $region6: #{_lambda_.1} parent=1 // pred_check
      _
    $region7: #{_lambda_.1} parent=1 // pred_check_branch
      %46 = sbr.rel (0) target = $region9
    $region8: #{_lambda_.1} parent=1 // pred_region
      %s48 = ssub.s32 1792, 1792
      %49 = vsyncadd [#allocation3], %s48
      %s50 = sshll.u32 [#allocation2], 4
      %s51 = int_to_ptr.vmem [resolvable:$true] %s50
      %56 = dma.hbm_to_vmem [thread:$0]  %s1, 1792, %s51, [#allocation3], 64, 64, 4
    $region9: #{_lambda_.1} parent=1 // pred_fallthru
      _
    // Predicated region
    $region10: #{_lambda_.1} parent=1 // pred_check
      _
    $region11: #{_lambda_.1} parent=1 // pred_check_branch
      %58 = sbr.rel (0) target = $region13
    $region12: #{_lambda_.1} parent=1 // pred_region
      _
    $region13: #{_lambda_.1} parent=1 // pred_fallthru
      _
    // Predicated region
    $region14: #{_lambda_.1} parent=1 // pred_check
      _
    $region15: #{_lambda_.1} parent=1 // pred_check_branch
      %60 = sbr.rel (0) target = $region17
    $region16: #{_lambda_.1} parent=1 // pred_region
      %s62 = ssub.s32 16, 16
      %63 = vsyncadd [#allocation6], %s62
      %s65 = sshll.u32 [#allocation5], 4
      %s66 = int_to_ptr.vmem [resolvable:$true] %s65
      %68 = dma.hbm_to_vmem [thread:$0]  %s3, 16, %s66, [#allocation6]
    $region17: #{_lambda_.1} parent=1 // pred_fallthru
      _
    // Predicated region
    $region18: #{_lambda_.1} parent=1 // pred_check
      _
    $region19: #{_lambda_.1} parent=1 // pred_check_branch
      %70 = sbr.rel (0) target = $region21
    $region20: #{_lambda_.1} parent=1 // pred_region
      _
    $region21: #{_lambda_.1} parent=1 // pred_fallthru
      _
    // Predicated region
    $region22: #{_lambda_.1} parent=1 // pred_check
      _
    $region23: #{_lambda_.1} parent=1 // pred_check_branch
      %72 = sbr.rel (0) target = $region25
    $region24: #{_lambda_.1} parent=1 // pred_region
      %s74 = ssub.s32 384, 384
      %75 = vsyncadd [#allocation6], %s74
      %s76 = sshll.u32 [#allocation7], 4
      %s77 = int_to_ptr.vmem [resolvable:$true] %s76
      %82 = dma.hbm_to_vmem [thread:$0]  %s5, 384, %s77, [#allocation6], 64, 64, 4
    $region25: #{_lambda_.1} parent=1 // pred_fallthru
      _
    // Predicated region
    $region26: #{_lambda_.1} parent=1 // pred_check
      _
    $region27: #{_lambda_.1} parent=1 // pred_check_branch
      %84 = sbr.rel (0) target = $region29
    $region28: #{_lambda_.1} parent=1 // pred_region
      %s86 = ssub.s32 640, 640
      %87 = vsyncadd [#allocation9], %s86
      %s88 = sshll.u32 [#allocation8], 4
      %s89 = int_to_ptr.vmem [resolvable:$true] %s88
      %94 = dma.hbm_to_vmem [thread:$0]  %s6, 640, %s89, [#allocation9], 64, 64, 4
    $region29: #{_lambda_.1} parent=1 // pred_fallthru
      _
    // Predicated region
    $region30: #{_lambda_.1} parent=1 // pred_check
      _
    $region31: #{_lambda_.1} parent=1 // pred_check_branch
      %96 = sbr.rel (0) target = $region33
    $region32: #{_lambda_.1} parent=1 // pred_region
      _
    $region33: #{_lambda_.1} parent=1 // pred_fallthru
      _
    // Predicated region
    $region34: #{_lambda_.1} parent=1 // pred_check
      _
    $region35: #{_lambda_.1} parent=1 // pred_check_branch
      %98 = sbr.rel (0) target = $region37
    $region36: #{_lambda_.1} parent=1 // pred_region
      %s100 = ssub.s32 16, 16
      %101 = vsyncadd [#allocation9], %s100
      %s103 = sshll.u32 [#allocation10], 4
      %s104 = int_to_ptr.vmem [resolvable:$true] %s103
      %106 = dma.hbm_to_vmem [thread:$0]  %s8, 16, %s104, [#allocation9]
    $region37: #{_lambda_.1} parent=1 // pred_fallthru
      _
    // Predicated region
    $region38: #{_lambda_.1} parent=1 // pred_check
      _
    $region39: #{_lambda_.1} parent=1 // pred_check_branch
      %108 = sbr.rel (0) target = $region41
    $region40: #{_lambda_.1} parent=1 // pred_region
      _
    $region41: #{_lambda_.1} parent=1 // pred_fallthru
      _
    // Predicated region
    $region42: #{_lambda_.1} parent=1 // pred_check
      _
    $region43: #{_lambda_.1} parent=1 // pred_check_branch
      %110 = sbr.rel (0) target = $region45
    $region44: #{_lambda_.1} parent=1 // pred_region
      %s112 = ssub.s32 192, 192
      %113 = vsyncadd [#allocation12], %s112
      %s114 = sshll.u32 [#allocation11], 4
      %s115 = int_to_ptr.vmem [resolvable:$true] %s114
      %120 = dma.hbm_to_vmem [thread:$0]  %s10, 192, %s115, [#allocation12], 64, 64, 4
    $region45: #{_lambda_.1} parent=1 // pred_fallthru
      _
    // Predicated region
    $region46: #{_lambda_.1} parent=1 // pred_check
      _
    $region47: #{_lambda_.1} parent=1 // pred_check_branch
      %122 = sbr.rel (0) target = $region49
    $region48: #{_lambda_.1} parent=1 // pred_region
      %s124 = ssub.s32 192, 192
      %125 = vsyncadd [#allocation12], %s124
      %s126 = sshll.u32 [#allocation13], 4
      %s127 = int_to_ptr.vmem [resolvable:$true] %s126
      %132 = dma.hbm_to_vmem [thread:$0]  %s11, 192, %s127, [#allocation12], 64, 64, 4
    $region49: #{_lambda_.1} parent=1 // pred_fallthru
      _
    // Predicated region
    $region50: #{_lambda_.1} parent=1 // pred_check
      _
    $region51: #{_lambda_.1} parent=1 // pred_check_branch
      %134 = sbr.rel (0) target = $region53
    $region52: #{_lambda_.1} parent=1 // pred_region
      %s136 = ssub.s32 1536, 1536
      %137 = vsyncadd [#allocation15], %s136
      %s138 = sshll.u32 [#allocation14], 4
      %s139 = int_to_ptr.vmem [resolvable:$true] %s138
      %144 = dma.hbm_to_vmem [thread:$0]  %s12, 1536, %s139, [#allocation15], 64, 64, 4
    $region53: #{_lambda_.1} parent=1 // pred_fallthru
      _
    // Predicated region
    $region54: #{_lambda_.1} parent=1 // pred_check
      _
    $region55: #{_lambda_.1} parent=1 // pred_check_branch
      %146 = sbr.rel (0) target = $region57
    $region56: #{_lambda_.1} parent=1 // pred_region
      %s148 = ssub.s32 16, 16
      %149 = vsyncadd [#allocation15], %s148
      %s151 = sshll.u32 [#allocation16], 4
      %s152 = int_to_ptr.vmem [resolvable:$true] %s151
      %154 = dma.hbm_to_vmem [thread:$0]  %s13, 16, %s152, [#allocation15]
    $region57: #{_lambda_.1} parent=1 // pred_fallthru
      _
    // Predicated region
    $region58: #{_lambda_.1} parent=1 // pred_check
      _
    $region59: #{_lambda_.1} parent=1 // pred_check_branch
      %156 = sbr.rel (0) target = $region61
    $region60: #{_lambda_.1} parent=1 // pred_region
      _
    $region61: #{_lambda_.1} parent=1 // pred_fallthru
      _
    // Predicated region
    $region62: #{_lambda_.1} parent=1 // pred_check
      _
    $region63: #{_lambda_.1} parent=1 // pred_check_branch
      %158 = sbr.rel (0) target = $region65
    $region64: #{_lambda_.1} parent=1 // pred_region
      %s160 = ssub.s32 96, 96
      %161 = vsyncadd [#allocation18], %s160
      %s162 = sshll.u32 [#allocation17], 4
      %s163 = int_to_ptr.vmem [resolvable:$true] %s162
      %168 = dma.hbm_to_vmem [thread:$0]  %s15, 96, %s163, [#allocation18], 32, 32, 2
    $region65: #{_lambda_.1} parent=1 // pred_fallthru
      _
    // Predicated region
    $region66: #{_lambda_.1} parent=1 // pred_check
      _
    $region67: #{_lambda_.1} parent=1 // pred_check_branch
      %170 = sbr.rel (0) target = $region69
    $region68: #{_lambda_.1} parent=1 // pred_region
      _
    $region69: #{_lambda_.1} parent=1 // pred_fallthru
      _
    // Predicated region
    $region70: #{_lambda_.1} parent=1 // pred_check
      _
    $region71: #{_lambda_.1} parent=1 // pred_check_branch
      %172 = sbr.rel (0) target = $region73
    $region72: #{_lambda_.1} parent=1 // pred_region
      %s174 = ssub.s32 1536, 1536
      %175 = vsyncadd [#allocation18], %s174
      %s176 = sshll.u32 [#allocation19], 4
      %s177 = int_to_ptr.vmem [resolvable:$true] %s176
      %182 = dma.hbm_to_vmem [thread:$0]  %s17, 1536, %s177, [#allocation18], 64, 64, 4
    $region73: #{_lambda_.1} parent=1 // pred_fallthru
      _
    // Predicated region
    $region74: #{_lambda_.1} parent=1 // pred_check
      _
    $region75: #{_lambda_.1} parent=1 // pred_check_branch
      %184 = sbr.rel (0) target = $region77
    $region76: #{_lambda_.1} parent=1 // pred_region
      %s186 = ssub.s32 16, 16
      %187 = vsyncadd [#allocation21], %s186
      %s189 = sshll.u32 [#allocation20], 4
      %s190 = int_to_ptr.vmem [resolvable:$true] %s189
      %192 = dma.hbm_to_vmem [thread:$0]  %s18, 16, %s190, [#allocation21]
    $region77: #{_lambda_.1} parent=1 // pred_fallthru
      _
    // Predicated region
    $region78: #{_lambda_.1} parent=1 // pred_check
      _
    $region79: #{_lambda_.1} parent=1 // pred_check_branch
      %194 = sbr.rel (0) target = $region81
    $region80: #{_lambda_.1} parent=1 // pred_region
      %s196 = ssub.s32 1536, 1536
      %197 = vsyncadd [#allocation21], %s196
      %s198 = sshll.u32 [#allocation22], 4
      %s199 = int_to_ptr.vmem [resolvable:$true] %s198
      %204 = dma.hbm_to_vmem [thread:$0]  %s19, 1536, %s199, [#allocation21], 64, 64, 4
    $region81: #{_lambda_.1} parent=1 // pred_fallthru
      _
    // Predicated region
    $region82: #{_lambda_.1} parent=1 // pred_check
      _
    $region83: #{_lambda_.1} parent=1 // pred_check_branch
      %206 = sbr.rel (0) target = $region85
    $region84: #{_lambda_.1} parent=1 // pred_region
      _
    $region85: #{_lambda_.1} parent=1 // pred_fallthru
      _
    // Predicated region
    $region86: #{_lambda_.1} parent=1 // pred_check
      _
    $region87: #{_lambda_.1} parent=1 // pred_check_branch
      %208 = sbr.rel (0) target = $region89
    $region88: #{_lambda_.1} parent=1 // pred_region
      %s210 = ssub.s32 512, 512
      %211 = vsyncadd [#allocation24], %s210
      %s212 = sshll.u32 [#allocation23], 4
      %s213 = int_to_ptr.vmem [resolvable:$true] %s212
      %218 = dma.hbm_to_vmem [thread:$0]  %s21, 512, %s213, [#allocation24], 128, 128, 8
    $region89: #{_lambda_.1} parent=1 // pred_fallthru
      _
    // Predicated region
    $region90: #{_lambda_.1} parent=1 // pred_check
      _
    $region91: #{_lambda_.1} parent=1 // pred_check_branch
      %220 = sbr.rel (0) target = $region93
    $region92: #{_lambda_.1} parent=1 // pred_region
      %s222 = ssub.s32 16, 16
      %223 = vsyncadd [#allocation24], %s222
      %s225 = sshll.u32 [#allocation25], 4
      %s226 = int_to_ptr.vmem [resolvable:$true] %s225
      %228 = dma.hbm_to_vmem [thread:$0]  %s22, 16, %s226, [#allocation24]
    $region93: #{_lambda_.1} parent=1 // pred_fallthru
      _
    // Predicated region
    $region94: #{_lambda_.1} parent=1 // pred_check
      _
    $region95: #{_lambda_.1} parent=1 // pred_check_branch
      %230 = sbr.rel (0) target = $region97
    $region96: #{_lambda_.1} parent=1 // pred_region
      %s232 = ssub.s32 512, 512
      %233 = vsyncadd [#allocation27], %s232
      %s234 = sshll.u32 [#allocation26], 4
      %s235 = int_to_ptr.vmem [resolvable:$true] %s234
      %240 = dma.hbm_to_vmem [thread:$0]  %s23, 512, %s235, [#allocation27], 128, 128, 8
    $region97: #{_lambda_.1} parent=1 // pred_fallthru
      _
    // Predicated region
    $region98: #{_lambda_.1} parent=1 // pred_check
      _
    $region99: #{_lambda_.1} parent=1 // pred_check_branch
      %242 = sbr.rel (0) target = $region101
    $region100: #{_lambda_.1} parent=1 // pred_region
      %s244 = ssub.s32 16, 16
      %245 = vsyncadd [#allocation27], %s244
      %s247 = sshll.u32 [#allocation28], 4
      %s248 = int_to_ptr.vmem [resolvable:$true] %s247
      %250 = dma.hbm_to_vmem [thread:$0]  %s24, 16, %s248, [#allocation27]
    $region101: #{_lambda_.1} parent=1 // pred_fallthru
      _
    // Predicated region
    $region102: #{_lambda_.1} parent=1 // pred_check
      _
    $region103: #{_lambda_.1} parent=1 // pred_check_branch
      %252 = sbr.rel (0) target = $region105
    $region104: #{_lambda_.1} parent=1 // pred_region
      %s254 = ssub.s32 256, 256
      %255 = vsyncadd [#allocation30], %s254
      %s256 = sshll.u32 [#allocation29], 4
      %s257 = int_to_ptr.vmem [resolvable:$true] %s256
      %262 = dma.hbm_to_vmem [thread:$0]  %s25, 256, %s257, [#allocation30], 128, 128, 8
    $region105: #{_lambda_.1} parent=1 // pred_fallthru
      _
    // Predicated region
    $region106: #{_lambda_.1} parent=1 // pred_check
      _
    $region107: #{_lambda_.1} parent=1 // pred_check_branch
      %264 = sbr.rel (0) target = $region109
    $region108: #{_lambda_.1} parent=1 // pred_region
      %s266 = ssub.s32 16, 16
      %267 = vsyncadd [#allocation30], %s266
      %s269 = sshll.u32 [#allocation31], 4
      %s270 = int_to_ptr.vmem [resolvable:$true] %s269
      %272 = dma.hbm_to_vmem [thread:$0]  %s26, 16, %s270, [#allocation30]
    $region109: #{_lambda_.1} parent=1 // pred_fallthru
      _
    // Predicated region
    $region110: #{_lambda_.1} parent=1 // pred_check
      _
    $region111: #{_lambda_.1} parent=1 // pred_check_branch
      %274 = sbr.rel (0) target = $region113
    $region112: #{_lambda_.1} parent=1 // pred_region
      %275 = dma.done [#allocation3], 1792
    $region113: #{_lambda_.1} parent=1 // pred_fallthru
      _
    // Predicated region
    $region114: #{_lambda_.1} parent=1 // pred_check
      _
    $region115: #{_lambda_.1} parent=1 // pred_check_branch
      %277 = sbr.rel (0) target = $region117
    $region116: #{_lambda_.1} parent=1 // pred_region
      %278 = dma.done [#allocation6], 16
    $region117: #{_lambda_.1} parent=1 // pred_fallthru
      _
    // Predicated region
    $region118: #{_lambda_.1} parent=1 // pred_check
      _
    $region119: #{_lambda_.1} parent=1 // pred_check_branch
      %280 = sbr.rel (0) target = $region121
    $region120: #{_lambda_.1} parent=1 // pred_region
      %281 = dma.done [#allocation6], 384
    $region121: #{_lambda_.1} parent=1 // pred_fallthru
      _
    // Predicated region
    $region122: #{_lambda_.1} parent=1 // pred_check
      _
    $region123: #{_lambda_.1} parent=1 // pred_check_branch
      %283 = sbr.rel (0) target = $region125
    $region124: #{_lambda_.1} parent=1 // pred_region
      %284 = dma.done [#allocation9], 640
    $region125: #{_lambda_.1} parent=1 // pred_fallthru
      _
    // Predicated region
    $region126: #{_lambda_.1} parent=1 // pred_check
      _
    $region127: #{_lambda_.1} parent=1 // pred_check_branch
      %286 = sbr.rel (0) target = $region129
    $region128: #{_lambda_.1} parent=1 // pred_region
      %287 = dma.done [#allocation9], 16
    $region129: #{_lambda_.1} parent=1 // pred_fallthru
      _
    // Predicated region
    $region130: #{_lambda_.1} parent=1 // pred_check
      _
    $region131: #{_lambda_.1} parent=1 // pred_check_branch
      %289 = sbr.rel (0) target = $region133
    $region132: #{_lambda_.1} parent=1 // pred_region
      %290 = dma.done [#allocation12], 192
    $region133: #{_lambda_.1} parent=1 // pred_fallthru
      _
    // Predicated region
    $region134: #{_lambda_.1} parent=1 // pred_check
      _
    $region135: #{_lambda_.1} parent=1 // pred_check_branch
      %292 = sbr.rel (0) target = $region137
    $region136: #{_lambda_.1} parent=1 // pred_region
      %293 = dma.done [#allocation12], 192
    $region137: #{_lambda_.1} parent=1 // pred_fallthru
      _
    // Predicated region
    $region138: #{_lambda_.1} parent=1 // pred_check
      _
    $region139: #{_lambda_.1} parent=1 // pred_check_branch
      %295 = sbr.rel (0) target = $region141
    $region140: #{_lambda_.1} parent=1 // pred_region
      %296 = dma.done [#allocation15], 1536
    $region141: #{_lambda_.1} parent=1 // pred_fallthru
      _
    // Predicated region
    $region142: #{_lambda_.1} parent=1 // pred_check
      _
    $region143: #{_lambda_.1} parent=1 // pred_check_branch
      %298 = sbr.rel (0) target = $region145
    $region144: #{_lambda_.1} parent=1 // pred_region
      %299 = dma.done [#allocation15], 16
    $region145: #{_lambda_.1} parent=1 // pred_fallthru
      _
    // Predicated region
    $region146: #{_lambda_.1} parent=1 // pred_check
      _
    $region147: #{_lambda_.1} parent=1 // pred_check_branch
      %301 = sbr.rel (0) target = $region149
    $region148: #{_lambda_.1} parent=1 // pred_region
      %302 = dma.done [#allocation18], 96
    $region149: #{_lambda_.1} parent=1 // pred_fallthru
      _
    // Predicated region
    $region150: #{_lambda_.1} parent=1 // pred_check
      _
    $region151: #{_lambda_.1} parent=1 // pred_check_branch
      %304 = sbr.rel (0) target = $region153
    $region152: #{_lambda_.1} parent=1 // pred_region
      %305 = dma.done [#allocation18], 1536
    $region153: #{_lambda_.1} parent=1 // pred_fallthru
      _
    // Predicated region
    $region154: #{_lambda_.1} parent=1 // pred_check
      _
    $region155: #{_lambda_.1} parent=1 // pred_check_branch
      %307 = sbr.rel (0) target = $region157
    $region156: #{_lambda_.1} parent=1 // pred_region
      %308 = dma.done [#allocation21], 16
    $region157: #{_lambda_.1} parent=1 // pred_fallthru
      _
    // Predicated region
    $region158: #{_lambda_.1} parent=1 // pred_check
      _
    $region159: #{_lambda_.1} parent=1 // pred_check_branch
      %310 = sbr.rel (0) target = $region161
    $region160: #{_lambda_.1} parent=1 // pred_region
      %311 = dma.done [#allocation21], 1536
    $region161: #{_lambda_.1} parent=1 // pred_fallthru
      _
    // Predicated region
    $region162: #{_lambda_.1} parent=1 // pred_check
      _
    $region163: #{_lambda_.1} parent=1 // pred_check_branch
      %313 = sbr.rel (0) target = $region165
    $region164: #{_lambda_.1} parent=1 // pred_region
      %314 = dma.done [#allocation24], 512
    $region165: #{_lambda_.1} parent=1 // pred_fallthru
      _
    // Predicated region
    $region166: #{_lambda_.1} parent=1 // pred_check
      _
    $region167: #{_lambda_.1} parent=1 // pred_check_branch
      %316 = sbr.rel (0) target = $region169
    $region168: #{_lambda_.1} parent=1 // pred_region
      %317 = dma.done [#allocation24], 16
    $region169: #{_lambda_.1} parent=1 // pred_fallthru
      _
    // Predicated region
    $region170: #{_lambda_.1} parent=1 // pred_check
      _
    $region171: #{_lambda_.1} parent=1 // pred_check_branch
      %319 = sbr.rel (0) target = $region173
    $region172: #{_lambda_.1} parent=1 // pred_region
      %320 = dma.done [#allocation27], 512
    $region173: #{_lambda_.1} parent=1 // pred_fallthru
      _
    // Predicated region
    $region174: #{_lambda_.1} parent=1 // pred_check
      _
    $region175: #{_lambda_.1} parent=1 // pred_check_branch
      %322 = sbr.rel (0) target = $region177
    $region176: #{_lambda_.1} parent=1 // pred_region
      %323 = dma.done [#allocation27], 16
    $region177: #{_lambda_.1} parent=1 // pred_fallthru
      _
    // Predicated region
    $region178: #{_lambda_.1} parent=1 // pred_check
      _
    $region179: #{_lambda_.1} parent=1 // pred_check_branch
      %325 = sbr.rel (0) target = $region181
    $region180: #{_lambda_.1} parent=1 // pred_region
      %326 = dma.done [#allocation30], 256
    $region181: #{_lambda_.1} parent=1 // pred_fallthru
      _
    // Predicated region
    $region182: #{_lambda_.1} parent=1 // pred_check
      _
    $region183: #{_lambda_.1} parent=1 // pred_check_branch
      %328 = sbr.rel (0) target = $region185
    $region184: #{_lambda_.1} parent=1 // pred_region
      %329 = dma.done [#allocation30], 16
    $region185: #{_lambda_.1} parent=1 // pred_fallthru
      _
    %v331 = vld [vmem:[%s0] sm:$0xff]
    %v332 = vld [vmem:[%s0 + $0x8] sm:$0xff]
    %v333 = vld [vmem:[%s0 + $0x10] sm:$0xff]
    %v334 = vld [vmem:[%s0 + $0x18] sm:$0xff]
    %v335 = vld [vmem:[%s0 + $0x20] sm:$0xff]
    %v336 = vld [vmem:[%s0 + $0x28] sm:$0xff]
    %v337 = vld [vmem:[%s0 + $0x30] sm:$0xff]
    %v338 = vld [vmem:[%s0 + $0x38] sm:$0xff]
    %v339 = vpack.c.bf16 %v332, %v331
    %v340 = vpack.c.bf16 %v334, %v333
    %v341 = vpack.c.bf16 %v336, %v335
    %v342 = vpack.c.bf16 %v338, %v337
    %v343 = vld [vmem:[#allocation2] sm:$0xf]
    %v344 = vld [vmem:[#allocation2 + $0x4] sm:$0xf]
    %v345 = vld [vmem:[#allocation2 + $0x8] sm:$0xf]
    %v346 = vld [vmem:[#allocation2 + $0xc] sm:$0xf]
    %v351 = vunpack.c.l.b16 %v343
    %v352 = vunpack.c.l.b16 %v344
    %v353 = vunpack.c.l.b16 %v345
    %v354 = vunpack.c.l.b16 %v346
    %v355 = vpack.c.b16 %v352, %v351
    %v356 = vpack.c.b16 %v354, %v353
    %vm357 = vcmask 523264
    %v359 = vsel %vm357, %v355, 0
    %v362 = vsel %vm357, %v356, 0
    %364 = vmatprep.subr.bf16.mxu0 0
    %365 = vmatpush1.bf16.msra.mxu0 %v339
    %366 = vmatprep.subr.bf16.mxu0 0
    %367 = vmatpush1.bf16.msra.mxu0 %v340
    %368 = vmatprep.subr.bf16.mxu0 0
    %369 = vmatpush1.bf16.msra.mxu0 %v341
    %370 = vmatprep.subr.bf16.mxu0 0
    %371 = vmatpush1.bf16.msra.mxu0 %v342
    %372 = vmatprep.subr.bf16.mxu0 0
    %373 = vmatpush1.bf16.msra.mxu0 0
    %374 = vmatprep.subr.bf16.mxu0 0
    %375 = vmatpush1.bf16.msra.mxu0 0
    %376 = vmatprep.subr.bf16.mxu0 0
    %377 = vmatpush1.bf16.msra.mxu0 0
    %378 = vmatprep.subr.bf16.mxu0 0
    %379 = vmatpush1.bf16.msra.mxu0 0
    %380 = vmatprep.subr.bf16.mxu0 0
    %381 = vmatpush1.bf16.msra.mxu0 0
    %382 = vmatprep.subr.bf16.mxu0 0
    %383 = vmatpush1.bf16.msra.mxu0 0
    %384 = vmatprep.subr.bf16.mxu0 0
    %385 = vmatpush1.bf16.msra.mxu0 0
    %386 = vmatprep.subr.bf16.mxu0 0
    %387 = vmatpush1.bf16.msra.mxu0 0
    %388 = vmatprep.subr.bf16.mxu0 0
    %389 = vmatpush1.bf16.msra.mxu0 0
    %390 = vmatprep.subr.bf16.mxu0 0
    %391 = vmatpush1.bf16.msra.mxu0 0
    %392 = vmatprep.subr.bf16.mxu0 0
    %393 = vmatpush1.bf16.msra.mxu0 0
    %394 = vmatprep.subr.bf16.mxu0 0
    %395 = vmatpush1.bf16.msra.mxu0 0
    %396 = vmatprep.mubr.bf16.mxu0 0
    %397 = vmatmul.mubr.bf16.gmra.mrb[0].mxu0 %v359
    %v398 = vpop.f32.mrb[0].mxu0
    %v399 = vadd.f32 0.0, %v398
    %v400 = vpop.f32.mrb[0].mxu0
    %v401 = vpop.f32.mrb[0].mxu0
    %v402 = vadd.f32 0.0, %v401
    %v403 = vpop.f32.mrb[0].mxu0
    %404 = vmatprep.mubr.bf16.mxu0 0
    %405 = vmatmul.mubr.bf16.gmra.mrb[0].mxu0 %v362
    %v406 = vpop.f32.mrb[0].mxu0
    %v407 = vadd.f32 0.0, %v406
    %v408 = vpop.f32.mrb[0].mxu0
    %v409 = vpop.f32.mrb[0].mxu0
    %v410 = vadd.f32 0.0, %v409
    %v411 = vpop.f32.mrb[0].mxu0
    %412 = vdwg.mxu0
    %v413 = vpack.c.bf16 %v402, %v399
    %v414 = vpack.c.bf16 %v410, %v407
    %v415 = vld [vmem:[%s2] sm:$0xf]
    %v416 = vld [vmem:[%s2 + $0x4] sm:$0xf]
    %v417 = vld [vmem:[%s2 + $0x8] sm:$0xf]
    %v418 = vld [vmem:[%s2 + $0xc] sm:$0xf]
    %v419 = vld [vmem:[%s2 + $0x10] sm:$0xf]
    %v420 = vld [vmem:[%s2 + $0x14] sm:$0xf]
    %v421 = vld [vmem:[%s2 + $0x18] sm:$0xf]
    %v422 = vld [vmem:[%s2 + $0x1c] sm:$0xf]
    %v423 = vld [vmem:[%s2 + $0x20] sm:$0xf]
    %v424 = vld [vmem:[%s2 + $0x24] sm:$0xf]
    %v425 = vld [vmem:[%s2 + $0x28] sm:$0xf]
    %v426 = vld [vmem:[%s2 + $0x2c] sm:$0xf]
    %v427 = vld [vmem:[%s2 + $0x30] sm:$0xf]
    %v428 = vld [vmem:[%s2 + $0x34] sm:$0xf]
    %v429 = vld [vmem:[%s2 + $0x38] sm:$0xf]
    %v430 = vld [vmem:[%s2 + $0x3c] sm:$0xf]
    %s431 = scalar_lea.vmem [#allocation2], 16
    %v432 = vld [vmem:[%s431] sm:$0xf]
    %v433 = vld [vmem:[%s431 + $0x4] sm:$0xf]
    %v434 = vld [vmem:[%s431 + $0x8] sm:$0xf]
    %v435 = vld [vmem:[%s431 + $0xc] sm:$0xf]
    %v440 = vunpack.c.l.b16 %v432
    %v441 = vunpack.c.l.b16 %v433
    %v442 = vunpack.c.l.b16 %v434
    %v443 = vunpack.c.l.b16 %v435
    %v444 = vpack.c.b16 %v441, %v440
    %v445 = vpack.c.b16 %v443, %v442
    %v447 = vsel %vm357, %v444, 0
    %v450 = vsel %vm357, %v445, 0
    %452 = vmatprep.subr.bf16.mxu0 0
    %453 = vmatpush1.bf16.msra.mxu0 %v339
    %454 = vmatprep.subr.bf16.mxu0 0
    %455 = vmatpush1.bf16.msra.mxu0 %v340
    %456 = vmatprep.subr.bf16.mxu0 0
    %457 = vmatpush1.bf16.msra.mxu0 %v341
    %458 = vmatprep.subr.bf16.mxu0 0
    %459 = vmatpush1.bf16.msra.mxu0 %v342
    %460 = vmatprep.subr.bf16.mxu0 0
    %461 = vmatpush1.bf16.msra.mxu0 0
    %462 = vmatprep.subr.bf16.mxu0 0
    %463 = vmatpush1.bf16.msra.mxu0 0
    %464 = vmatprep.subr.bf16.mxu0 0
    %465 = vmatpush1.bf16.msra.mxu0 0
    %466 = vmatprep.subr.bf16.mxu0 0
    %467 = vmatpush1.bf16.msra.mxu0 0
    %468 = vmatprep.subr.bf16.mxu0 0
    %469 = vmatpush1.bf16.msra.mxu0 0
    %470 = vmatprep.subr.bf16.mxu0 0
    %471 = vmatpush1.bf16.msra.mxu0 0
    %472 = vmatprep.subr.bf16.mxu0 0
    %473 = vmatpush1.bf16.msra.mxu0 0
    %474 = vmatprep.subr.bf16.mxu0 0
    %475 = vmatpush1.bf16.msra.mxu0 0
    %476 = vmatprep.subr.bf16.mxu0 0
    %477 = vmatpush1.bf16.msra.mxu0 0
    %478 = vmatprep.subr.bf16.mxu0 0
    %479 = vmatpush1.bf16.msra.mxu0 0
    %480 = vmatprep.subr.bf16.mxu0 0
    %481 = vmatpush1.bf16.msra.mxu0 0
    %482 = vmatprep.subr.bf16.mxu0 0
    %483 = vmatpush1.bf16.msra.mxu0 0
    %484 = vmatprep.mubr.bf16.mxu0 0
    %485 = vmatmul.mubr.bf16.gmra.mrb[0].mxu0 %v447
    %v486 = vpop.f32.mrb[0].mxu0
    %v487 = vadd.f32 0.0, %v486
    %v488 = vpop.f32.mrb[0].mxu0
    %v489 = vpop.f32.mrb[0].mxu0
    %v490 = vadd.f32 0.0, %v489
    %v491 = vpop.f32.mrb[0].mxu0
    %492 = vmatprep.mubr.bf16.mxu0 0
    %493 = vmatmul.mubr.bf16.gmra.mrb[0].mxu0 %v450
    %v494 = vpop.f32.mrb[0].mxu0
    %v495 = vadd.f32 0.0, %v494
    %v496 = vpop.f32.mrb[0].mxu0
    %v497 = vpop.f32.mrb[0].mxu0
    %v498 = vadd.f32 0.0, %v497
    %v499 = vpop.f32.mrb[0].mxu0
    %500 = vdwg.mxu0
    %v501 = vpack.c.bf16 %v490, %v487
    %v502 = vpack.c.bf16 %v498, %v495
    %s503 = scalar_lea.vmem %s2, 64
    %v504 = vld [vmem:[%s503] sm:$0xf]
    %v505 = vld [vmem:[%s503 + $0x4] sm:$0xf]
    %v506 = vld [vmem:[%s503 + $0x8] sm:$0xf]
    %v507 = vld [vmem:[%s503 + $0xc] sm:$0xf]
    %v508 = vld [vmem:[%s503 + $0x10] sm:$0xf]
    %v509 = vld [vmem:[%s503 + $0x14] sm:$0xf]
    %v510 = vld [vmem:[%s503 + $0x18] sm:$0xf]
    %v511 = vld [vmem:[%s503 + $0x1c] sm:$0xf]
    %v512 = vld [vmem:[%s503 + $0x20] sm:$0xf]
    %v513 = vld [vmem:[%s503 + $0x24] sm:$0xf]
    %v514 = vld [vmem:[%s503 + $0x28] sm:$0xf]
    %v515 = vld [vmem:[%s503 + $0x2c] sm:$0xf]
    %v516 = vld [vmem:[%s503 + $0x30] sm:$0xf]
    %v517 = vld [vmem:[%s503 + $0x34] sm:$0xf]
    %v518 = vld [vmem:[%s503 + $0x38] sm:$0xf]
    %v519 = vld [vmem:[%s503 + $0x3c] sm:$0xf]
    %v536 = vunpack.c.l.b16 %v504
    %v537 = vunpack.c.l.b16 %v505
    %v538 = vunpack.c.l.b16 %v506
    %v539 = vunpack.c.l.b16 %v507
    %v540 = vunpack.c.l.b16 %v508
    %v541 = vunpack.c.l.b16 %v509
    %v542 = vunpack.c.l.b16 %v510
    %v543 = vunpack.c.l.b16 %v511
    %v544 = vunpack.c.l.b16 %v512
    %v545 = vunpack.c.l.b16 %v513
    %v546 = vunpack.c.l.b16 %v514
    %v547 = vunpack.c.l.b16 %v515
    %v548 = vunpack.c.l.b16 %v516
    %v549 = vunpack.c.l.b16 %v517
    %v550 = vunpack.c.l.b16 %v518
    %v551 = vunpack.c.l.b16 %v519
    %v552 = vpack.c.b16 %v537, %v536
    %v553 = vpack.c.b16 %v539, %v538
    %v554 = vpack.c.b16 %v541, %v540
    %v555 = vpack.c.b16 %v543, %v542
    %v556 = vpack.c.b16 %v545, %v544
    %v557 = vpack.c.b16 %v547, %v546
    %v558 = vpack.c.b16 %v549, %v548
    %v559 = vpack.c.b16 %v551, %v550
    %568 = vmatprep.subr.bf16.mxu0 0
    %569 = vmatpush1.bf16.msra.mxu0 %v552
    %570 = vmatprep.subr.bf16.mxu0 0
    %571 = vmatpush1.bf16.msra.mxu0 %v553
    %572 = vmatprep.subr.bf16.mxu0 0
    %573 = vmatpush1.bf16.msra.mxu0 %v554
    %574 = vmatprep.subr.bf16.mxu0 0
    %575 = vmatpush1.bf16.msra.mxu0 %v555
    %576 = vmatprep.subr.bf16.mxu0 0
    %577 = vmatpush1.bf16.msra.mxu0 %v556
    %578 = vmatprep.subr.bf16.mxu0 0
    %579 = vmatpush1.bf16.msra.mxu0 %v557
    %580 = vmatprep.subr.bf16.mxu0 0
    %581 = vmatpush1.bf16.msra.mxu0 %v558
    %582 = vmatprep.subr.bf16.mxu0 0
    %583 = vmatpush1.bf16.msra.mxu0 %v559
    %584 = vmatprep.subr.bf16.mxu0 0
    %585 = vmatpush1.bf16.msra.mxu0 0
    %586 = vmatprep.subr.bf16.mxu0 0
    %587 = vmatpush1.bf16.msra.mxu0 0
    %588 = vmatprep.subr.bf16.mxu0 0
    %589 = vmatpush1.bf16.msra.mxu0 0
    %590 = vmatprep.subr.bf16.mxu0 0
    %591 = vmatpush1.bf16.msra.mxu0 0
    %592 = vmatprep.subr.bf16.mxu0 0
    %593 = vmatpush1.bf16.msra.mxu0 0
    %594 = vmatprep.subr.bf16.mxu0 0
    %595 = vmatpush1.bf16.msra.mxu0 0
    %596 = vmatprep.subr.bf16.mxu0 0
    %597 = vmatpush1.bf16.msra.mxu0 0
    %598 = vmatprep.subr.bf16.mxu0 0
    %599 = vmatpush1.bf16.msra.mxu0 0
    %600 = vmatprep.mubr.bf16.mxu0 0
    %601 = vmatmul.mubr.bf16.gmra.mrb[0].mxu0 %v501
    %v602 = vpop.f32.mrb[0].mxu0
    %v603 = vadd.f32 0.0, %v602
    %v604 = vpop.f32.mrb[0].mxu0
    %v605 = vpop.f32.mrb[0].mxu0
    %v606 = vadd.f32 0.0, %v605
    %v607 = vpop.f32.mrb[0].mxu0
    %608 = vmatprep.mubr.bf16.mxu0 0
    %609 = vmatmul.mubr.bf16.gmra.mrb[0].mxu0 %v502
    %v610 = vpop.f32.mrb[0].mxu0
    %v611 = vadd.f32 0.0, %v610
    %v612 = vpop.f32.mrb[0].mxu0
    %v613 = vpop.f32.mrb[0].mxu0
    %v614 = vadd.f32 0.0, %v613
    %v615 = vpop.f32.mrb[0].mxu0
    %616 = vdwg.mxu0
    %v633 = vunpack.c.l.b16 %v415
    %v634 = vunpack.c.l.b16 %v416
    %v635 = vunpack.c.l.b16 %v417
    %v636 = vunpack.c.l.b16 %v418
    %v637 = vunpack.c.l.b16 %v419
    %v638 = vunpack.c.l.b16 %v420
    %v639 = vunpack.c.l.b16 %v421
    %v640 = vunpack.c.l.b16 %v422
    %v641 = vunpack.c.l.b16 %v423
    %v642 = vunpack.c.l.b16 %v424
    %v643 = vunpack.c.l.b16 %v425
    %v644 = vunpack.c.l.b16 %v426
    %v645 = vunpack.c.l.b16 %v427
    %v646 = vunpack.c.l.b16 %v428
    %v647 = vunpack.c.l.b16 %v429
    %v648 = vunpack.c.l.b16 %v430
    %v649 = vpack.c.b16 %v634, %v633
    %v650 = vpack.c.b16 %v636, %v635
    %v651 = vpack.c.b16 %v638, %v637
    %v652 = vpack.c.b16 %v640, %v639
    %v653 = vpack.c.b16 %v642, %v641
    %v654 = vpack.c.b16 %v644, %v643
    %v655 = vpack.c.b16 %v646, %v645
    %v656 = vpack.c.b16 %v648, %v647
    %665 = vmatprep.subr.bf16.mxu0 0
    %666 = vmatpush1.bf16.msra.mxu0 %v649
    %667 = vmatprep.subr.bf16.mxu0 0
    %668 = vmatpush1.bf16.msra.mxu0 %v650
    %669 = vmatprep.subr.bf16.mxu0 0
    %670 = vmatpush1.bf16.msra.mxu0 %v651
    %671 = vmatprep.subr.bf16.mxu0 0
    %672 = vmatpush1.bf16.msra.mxu0 %v652
    %673 = vmatprep.subr.bf16.mxu0 0
    %674 = vmatpush1.bf16.msra.mxu0 %v653
    %675 = vmatprep.subr.bf16.mxu0 0
    %676 = vmatpush1.bf16.msra.mxu0 %v654
    %677 = vmatprep.subr.bf16.mxu0 0
    %678 = vmatpush1.bf16.msra.mxu0 %v655
    %679 = vmatprep.subr.bf16.mxu0 0
    %680 = vmatpush1.bf16.msra.mxu0 %v656
    %681 = vmatprep.subr.bf16.mxu0 0
    %682 = vmatpush1.bf16.msra.mxu0 0
    %683 = vmatprep.subr.bf16.mxu0 0
    %684 = vmatpush1.bf16.msra.mxu0 0
    %685 = vmatprep.subr.bf16.mxu0 0
    %686 = vmatpush1.bf16.msra.mxu0 0
    %687 = vmatprep.subr.bf16.mxu0 0
    %688 = vmatpush1.bf16.msra.mxu0 0
    %689 = vmatprep.subr.bf16.mxu0 0
    %690 = vmatpush1.bf16.msra.mxu0 0
    %691 = vmatprep.subr.bf16.mxu0 0
    %692 = vmatpush1.bf16.msra.mxu0 0
    %693 = vmatprep.subr.bf16.mxu0 0
    %694 = vmatpush1.bf16.msra.mxu0 0
    %695 = vmatprep.subr.bf16.mxu0 0
    %696 = vmatpush1.bf16.msra.mxu0 0
    %697 = vmatprep.mubr.bf16.mxu0 0
    %698 = vmatmul.mubr.bf16.gmra.mrb[0].mxu0 %v413
    %v699 = vpop.f32.mrb[0].mxu0
    %v700 = vadd.f32 %v603, %v699
    %v701 = vpop.f32.mrb[0].mxu0
    %v702 = vpop.f32.mrb[0].mxu0
    %v703 = vadd.f32 %v606, %v702
    %v704 = vpop.f32.mrb[0].mxu0
    %705 = vmatprep.mubr.bf16.mxu0 0
    %706 = vmatmul.mubr.bf16.gmra.mrb[0].mxu0 %v414
    %v707 = vpop.f32.mrb[0].mxu0
    %v708 = vadd.f32 %v611, %v707
    %v709 = vpop.f32.mrb[0].mxu0
    %v710 = vpop.f32.mrb[0].mxu0
    %v711 = vadd.f32 %v614, %v710
    %v712 = vpop.f32.mrb[0].mxu0
    %713 = vdwg.mxu0
    %s714 = scalar_lea.vmem [#allocation2], 32
    %v715 = vld [vmem:[%s714] sm:$0xf]
    %v716 = vld [vmem:[%s714 + $0x4] sm:$0xf]
    %v717 = vld [vmem:[%s714 + $0x8] sm:$0xf]
    %v718 = vld [vmem:[%s714 + $0xc] sm:$0xf]
    %v723 = vunpack.c.l.b16 %v715
    %v724 = vunpack.c.l.b16 %v716
    %v725 = vunpack.c.l.b16 %v717
    %v726 = vunpack.c.l.b16 %v718
    %v727 = vpack.c.b16 %v724, %v723
    %v728 = vpack.c.b16 %v726, %v725
    %v730 = vsel %vm357, %v727, 0
    %v733 = vsel %vm357, %v728, 0
    %735 = vmatprep.subr.bf16.mxu0 0
    %736 = vmatpush1.bf16.msra.mxu0 %v339
    %737 = vmatprep.subr.bf16.mxu0 0
    %738 = vmatpush1.bf16.msra.mxu0 %v340
    %739 = vmatprep.subr.bf16.mxu0 0
    %740 = vmatpush1.bf16.msra.mxu0 %v341
    %741 = vmatprep.subr.bf16.mxu0 0
    %742 = vmatpush1.bf16.msra.mxu0 %v342
    %743 = vmatprep.subr.bf16.mxu0 0
    %744 = vmatpush1.bf16.msra.mxu0 0
    %745 = vmatprep.subr.bf16.mxu0 0
    %746 = vmatpush1.bf16.msra.mxu0 0
    %747 = vmatprep.subr.bf16.mxu0 0
    %748 = vmatpush1.bf16.msra.mxu0 0
    %749 = vmatprep.subr.bf16.mxu0 0
    %750 = vmatpush1.bf16.msra.mxu0 0
    %751 = vmatprep.subr.bf16.mxu0 0
    %752 = vmatpush1.bf16.msra.mxu0 0
    %753 = vmatprep.subr.bf16.mxu0 0
    %754 = vmatpush1.bf16.msra.mxu0 0
    %755 = vmatprep.subr.bf16.mxu0 0
    %756 = vmatpush1.bf16.msra.mxu0 0
    %757 = vmatprep.subr.bf16.mxu0 0
    %758 = vmatpush1.bf16.msra.mxu0 0
    %759 = vmatprep.subr.bf16.mxu0 0
    %760 = vmatpush1.bf16.msra.mxu0 0
    %761 = vmatprep.subr.bf16.mxu0 0
    %762 = vmatpush1.bf16.msra.mxu0 0
    %763 = vmatprep.subr.bf16.mxu0 0
    %764 = vmatpush1.bf16.msra.mxu0 0
    %765 = vmatprep.subr.bf16.mxu0 0
    %766 = vmatpush1.bf16.msra.mxu0 0
    %767 = vmatprep.mubr.bf16.mxu0 0
    %768 = vmatmul.mubr.bf16.gmra.mrb[0].mxu0 %v730
    %v769 = vpop.f32.mrb[0].mxu0
    %v770 = vadd.f32 0.0, %v769
    %v771 = vpop.f32.mrb[0].mxu0
    %v772 = vpop.f32.mrb[0].mxu0
    %v773 = vadd.f32 0.0, %v772
    %v774 = vpop.f32.mrb[0].mxu0
    %775 = vmatprep.mubr.bf16.mxu0 0
    %776 = vmatmul.mubr.bf16.gmra.mrb[0].mxu0 %v733
    %v777 = vpop.f32.mrb[0].mxu0
    %v778 = vadd.f32 0.0, %v777
    %v779 = vpop.f32.mrb[0].mxu0
    %v780 = vpop.f32.mrb[0].mxu0
    %v781 = vadd.f32 0.0, %v780
    %v782 = vpop.f32.mrb[0].mxu0
    %783 = vdwg.mxu0
    %v784 = vpack.c.bf16 %v773, %v770
    %v785 = vpack.c.bf16 %v781, %v778
    %s786 = scalar_lea.vmem %s2, 128
    %v787 = vld [vmem:[%s786] sm:$0xf]
    %v788 = vld [vmem:[%s786 + $0x4] sm:$0xf]
    %v789 = vld [vmem:[%s786 + $0x8] sm:$0xf]
    %v790 = vld [vmem:[%s786 + $0xc] sm:$0xf]
    %v791 = vld [vmem:[%s786 + $0x10] sm:$0xf]
    %v792 = vld [vmem:[%s786 + $0x14] sm:$0xf]
    %v793 = vld [vmem:[%s786 + $0x18] sm:$0xf]
    %v794 = vld [vmem:[%s786 + $0x1c] sm:$0xf]
    %v795 = vld [vmem:[%s786 + $0x20] sm:$0xf]
    %v796 = vld [vmem:[%s786 + $0x24] sm:$0xf]
    %v797 = vld [vmem:[%s786 + $0x28] sm:$0xf]
    %v798 = vld [vmem:[%s786 + $0x2c] sm:$0xf]
    %v799 = vld [vmem:[%s786 + $0x30] sm:$0xf]
    %v800 = vld [vmem:[%s786 + $0x34] sm:$0xf]
    %v801 = vld [vmem:[%s786 + $0x38] sm:$0xf]
    %v802 = vld [vmem:[%s786 + $0x3c] sm:$0xf]
    %v819 = vunpack.c.l.b16 %v787
    %v820 = vunpack.c.l.b16 %v788
    %v821 = vunpack.c.l.b16 %v789
    %v822 = vunpack.c.l.b16 %v790
    %v823 = vunpack.c.l.b16 %v791
    %v824 = vunpack.c.l.b16 %v792
    %v825 = vunpack.c.l.b16 %v793
    %v826 = vunpack.c.l.b16 %v794
    %v827 = vunpack.c.l.b16 %v795
    %v828 = vunpack.c.l.b16 %v796
    %v829 = vunpack.c.l.b16 %v797
    %v830 = vunpack.c.l.b16 %v798
    %v831 = vunpack.c.l.b16 %v799
    %v832 = vunpack.c.l.b16 %v800
    %v833 = vunpack.c.l.b16 %v801
    %v834 = vunpack.c.l.b16 %v802
    %v835 = vpack.c.b16 %v820, %v819
    %v836 = vpack.c.b16 %v822, %v821
    %v837 = vpack.c.b16 %v824, %v823
    %v838 = vpack.c.b16 %v826, %v825
    %v839 = vpack.c.b16 %v828, %v827
    %v840 = vpack.c.b16 %v830, %v829
    %v841 = vpack.c.b16 %v832, %v831
    %v842 = vpack.c.b16 %v834, %v833
    %851 = vmatprep.subr.bf16.mxu0 0
    %852 = vmatpush1.bf16.msra.mxu0 %v835
    %853 = vmatprep.subr.bf16.mxu0 0
    %854 = vmatpush1.bf16.msra.mxu0 %v836
    %855 = vmatprep.subr.bf16.mxu0 0
    %856 = vmatpush1.bf16.msra.mxu0 %v837
    %857 = vmatprep.subr.bf16.mxu0 0
    %858 = vmatpush1.bf16.msra.mxu0 %v838
    %859 = vmatprep.subr.bf16.mxu0 0
    %860 = vmatpush1.bf16.msra.mxu0 %v839
    %861 = vmatprep.subr.bf16.mxu0 0
    %862 = vmatpush1.bf16.msra.mxu0 %v840
    %863 = vmatprep.subr.bf16.mxu0 0
    %864 = vmatpush1.bf16.msra.mxu0 %v841
    %865 = vmatprep.subr.bf16.mxu0 0
    %866 = vmatpush1.bf16.msra.mxu0 %v842
    %867 = vmatprep.subr.bf16.mxu0 0
    %868 = vmatpush1.bf16.msra.mxu0 0
    %869 = vmatprep.subr.bf16.mxu0 0
    %870 = vmatpush1.bf16.msra.mxu0 0
    %871 = vmatprep.subr.bf16.mxu0 0
    %872 = vmatpush1.bf16.msra.mxu0 0
    %873 = vmatprep.subr.bf16.mxu0 0
    %874 = vmatpush1.bf16.msra.mxu0 0
    %875 = vmatprep.subr.bf16.mxu0 0
    %876 = vmatpush1.bf16.msra.mxu0 0
    %877 = vmatprep.subr.bf16.mxu0 0
    %878 = vmatpush1.bf16.msra.mxu0 0
    %879 = vmatprep.subr.bf16.mxu0 0
    %880 = vmatpush1.bf16.msra.mxu0 0
    %881 = vmatprep.subr.bf16.mxu0 0
    %882 = vmatpush1.bf16.msra.mxu0 0
    %883 = vmatprep.mubr.bf16.mxu0 0
    %884 = vmatmul.mubr.bf16.gmra.mrb[0].mxu0 %v784
    %v885 = vpop.f32.mrb[0].mxu0
    %v886 = vadd.f32 0.0, %v885
    %v887 = vpop.f32.mrb[0].mxu0
    %v888 = vpop.f32.mrb[0].mxu0
    %v889 = vadd.f32 0.0, %v888
    %v890 = vpop.f32.mrb[0].mxu0
    %891 = vmatprep.mubr.bf16.mxu0 0
    %892 = vmatmul.mubr.bf16.gmra.mrb[0].mxu0 %v785
    %v893 = vpop.f32.mrb[0].mxu0
    %v894 = vadd.f32 0.0, %v893
    %v895 = vpop.f32.mrb[0].mxu0
    %v896 = vpop.f32.mrb[0].mxu0
    %v897 = vadd.f32 0.0, %v896
    %v898 = vpop.f32.mrb[0].mxu0
    %899 = vdwg.mxu0
    %v900 = vadd.f32 %v700, %v886
    %v901 = vadd.f32 %v703, %v889
    %v902 = vadd.f32 %v708, %v894
    %v903 = vadd.f32 %v711, %v897
    %s904 = scalar_lea.vmem [#allocation2], 48
    %v905 = vld [vmem:[%s904] sm:$0xf]
    %v906 = vld [vmem:[%s904 + $0x4] sm:$0xf]
    %v907 = vld [vmem:[%s904 + $0x8] sm:$0xf]
    %v908 = vld [vmem:[%s904 + $0xc] sm:$0xf]
    %v913 = vunpack.c.l.b16 %v905
    %v914 = vunpack.c.l.b16 %v906
    %v915 = vunpack.c.l.b16 %v907
    %v916 = vunpack.c.l.b16 %v908
    %v917 = vpack.c.b16 %v914, %v913
    %v918 = vpack.c.b16 %v916, %v915
    %v920 = vsel %vm357, %v917, 0
    %v923 = vsel %vm357, %v918, 0
    %925 = vmatprep.subr.bf16.mxu0 0
    %926 = vmatpush1.bf16.msra.mxu0 %v339
    %927 = vmatprep.subr.bf16.mxu0 0
    %928 = vmatpush1.bf16.msra.mxu0 %v340
    %929 = vmatprep.subr.bf16.mxu0 0
    %930 = vmatpush1.bf16.msra.mxu0 %v341
    %931 = vmatprep.subr.bf16.mxu0 0
    %932 = vmatpush1.bf16.msra.mxu0 %v342
    %933 = vmatprep.subr.bf16.mxu0 0
    %934 = vmatpush1.bf16.msra.mxu0 0
    %935 = vmatprep.subr.bf16.mxu0 0
    %936 = vmatpush1.bf16.msra.mxu0 0
    %937 = vmatprep.subr.bf16.mxu0 0
    %938 = vmatpush1.bf16.msra.mxu0 0
    %939 = vmatprep.subr.bf16.mxu0 0
    %940 = vmatpush1.bf16.msra.mxu0 0
    %941 = vmatprep.subr.bf16.mxu0 0
    %942 = vmatpush1.bf16.msra.mxu0 0
    %943 = vmatprep.subr.bf16.mxu0 0
    %944 = vmatpush1.bf16.msra.mxu0 0
    %945 = vmatprep.subr.bf16.mxu0 0
    %946 = vmatpush1.bf16.msra.mxu0 0
    %947 = vmatprep.subr.bf16.mxu0 0
    %948 = vmatpush1.bf16.msra.mxu0 0
    %949 = vmatprep.subr.bf16.mxu0 0
    %950 = vmatpush1.bf16.msra.mxu0 0
    %951 = vmatprep.subr.bf16.mxu0 0
    %952 = vmatpush1.bf16.msra.mxu0 0
    %953 = vmatprep.subr.bf16.mxu0 0
    %954 = vmatpush1.bf16.msra.mxu0 0
    %955 = vmatprep.subr.bf16.mxu0 0
    %956 = vmatpush1.bf16.msra.mxu0 0
    %957 = vmatprep.mubr.bf16.mxu0 0
    %958 = vmatmul.mubr.bf16.gmra.mrb[0].mxu0 %v920
    %v959 = vpop.f32.mrb[0].mxu0
    %v960 = vadd.f32 0.0, %v959
    %v961 = vpop.f32.mrb[0].mxu0
    %v962 = vpop.f32.mrb[0].mxu0
    %v963 = vadd.f32 0.0, %v962
    %v964 = vpop.f32.mrb[0].mxu0
    %965 = vmatprep.mubr.bf16.mxu0 0
    %966 = vmatmul.mubr.bf16.gmra.mrb[0].mxu0 %v923
    %v967 = vpop.f32.mrb[0].mxu0
    %v968 = vadd.f32 0.0, %v967
    %v969 = vpop.f32.mrb[0].mxu0
    %v970 = vpop.f32.mrb[0].mxu0
    %v971 = vadd.f32 0.0, %v970
    %v972 = vpop.f32.mrb[0].mxu0
    %973 = vdwg.mxu0
    %v974 = vpack.c.bf16 %v963, %v960
    %v975 = vpack.c.bf16 %v971, %v968
    %s976 = scalar_lea.vmem %s2, 192
    %v977 = vld [vmem:[%s976] sm:$0xf]
    %v978 = vld [vmem:[%s976 + $0x4] sm:$0xf]
    %v979 = vld [vmem:[%s976 + $0x8] sm:$0xf]
    %v980 = vld [vmem:[%s976 + $0xc] sm:$0xf]
    %v981 = vld [vmem:[%s976 + $0x10] sm:$0xf]
    %v982 = vld [vmem:[%s976 + $0x14] sm:$0xf]
    %v983 = vld [vmem:[%s976 + $0x18] sm:$0xf]
    %v984 = vld [vmem:[%s976 + $0x1c] sm:$0xf]
    %v985 = vld [vmem:[%s976 + $0x20] sm:$0xf]
    %v986 = vld [vmem:[%s976 + $0x24] sm:$0xf]
    %v987 = vld [vmem:[%s976 + $0x28] sm:$0xf]
    %v988 = vld [vmem:[%s976 + $0x2c] sm:$0xf]
    %v989 = vld [vmem:[%s976 + $0x30] sm:$0xf]
    %v990 = vld [vmem:[%s976 + $0x34] sm:$0xf]
    %v991 = vld [vmem:[%s976 + $0x38] sm:$0xf]
    %v992 = vld [vmem:[%s976 + $0x3c] sm:$0xf]
    %v1009 = vunpack.c.l.b16 %v977
    %v1010 = vunpack.c.l.b16 %v978
    %v1011 = vunpack.c.l.b16 %v979
    %v1012 = vunpack.c.l.b16 %v980
    %v1013 = vunpack.c.l.b16 %v981
    %v1014 = vunpack.c.l.b16 %v982
    %v1015 = vunpack.c.l.b16 %v983
    %v1016 = vunpack.c.l.b16 %v984
    %v1017 = vunpack.c.l.b16 %v985
    %v1018 = vunpack.c.l.b16 %v986
    %v1019 = vunpack.c.l.b16 %v987
    %v1020 = vunpack.c.l.b16 %v988
    %v1021 = vunpack.c.l.b16 %v989
    %v1022 = vunpack.c.l.b16 %v990
    %v1023 = vunpack.c.l.b16 %v991
    %v1024 = vunpack.c.l.b16 %v992
    %v1025 = vpack.c.b16 %v1010, %v1009
    %v1026 = vpack.c.b16 %v1012, %v1011
    %v1027 = vpack.c.b16 %v1014, %v1013
    %v1028 = vpack.c.b16 %v1016, %v1015
    %v1029 = vpack.c.b16 %v1018, %v1017
    %v1030 = vpack.c.b16 %v1020, %v1019
    %v1031 = vpack.c.b16 %v1022, %v1021
    %v1032 = vpack.c.b16 %v1024, %v1023
    %1041 = vmatprep.subr.bf16.mxu0 0
    %1042 = vmatpush1.bf16.msra.mxu0 %v1025
    %1043 = vmatprep.subr.bf16.mxu0 0
    %1044 = vmatpush1.bf16.msra.mxu0 %v1026
    %1045 = vmatprep.subr.bf16.mxu0 0
    %1046 = vmatpush1.bf16.msra.mxu0 %v1027
    %1047 = vmatprep.subr.bf16.mxu0 0
    %1048 = vmatpush1.bf16.msra.mxu0 %v1028
    %1049 = vmatprep.subr.bf16.mxu0 0
    %1050 = vmatpush1.bf16.msra.mxu0 %v1029
    %1051 = vmatprep.subr.bf16.mxu0 0
    %1052 = vmatpush1.bf16.msra.mxu0 %v1030
    %1053 = vmatprep.subr.bf16.mxu0 0
    %1054 = vmatpush1.bf16.msra.mxu0 %v1031
    %1055 = vmatprep.subr.bf16.mxu0 0
    %1056 = vmatpush1.bf16.msra.mxu0 %v1032
    %1057 = vmatprep.subr.bf16.mxu0 0
    %1058 = vmatpush1.bf16.msra.mxu0 0
    %1059 = vmatprep.subr.bf16.mxu0 0
    %1060 = vmatpush1.bf16.msra.mxu0 0
    %1061 = vmatprep.subr.bf16.mxu0 0
    %1062 = vmatpush1.bf16.msra.mxu0 0
    %1063 = vmatprep.subr.bf16.mxu0 0
    %1064 = vmatpush1.bf16.msra.mxu0 0
    %1065 = vmatprep.subr.bf16.mxu0 0
    %1066 = vmatpush1.bf16.msra.mxu0 0
    %1067 = vmatprep.subr.bf16.mxu0 0
    %1068 = vmatpush1.bf16.msra.mxu0 0
    %1069 = vmatprep.subr.bf16.mxu0 0
    %1070 = vmatpush1.bf16.msra.mxu0 0
    %1071 = vmatprep.subr.bf16.mxu0 0
    %1072 = vmatpush1.bf16.msra.mxu0 0
    %1073 = vmatprep.mubr.bf16.mxu0 0
    %1074 = vmatmul.mubr.bf16.gmra.mrb[0].mxu0 %v974
    %v1075 = vpop.f32.mrb[0].mxu0
    %v1076 = vadd.f32 0.0, %v1075
    %v1077 = vpop.f32.mrb[0].mxu0
    %v1078 = vpop.f32.mrb[0].mxu0
    %v1079 = vadd.f32 0.0, %v1078
    %v1080 = vpop.f32.mrb[0].mxu0
    %1081 = vmatprep.mubr.bf16.mxu0 0
    %1082 = vmatmul.mubr.bf16.gmra.mrb[0].mxu0 %v975
    %v1083 = vpop.f32.mrb[0].mxu0
    %v1084 = vadd.f32 0.0, %v1083
    %v1085 = vpop.f32.mrb[0].mxu0
    %v1086 = vpop.f32.mrb[0].mxu0
    %v1087 = vadd.f32 0.0, %v1086
    %v1088 = vpop.f32.mrb[0].mxu0
    %1089 = vdwg.mxu0
    %v1090 = vadd.f32 %v900, %v1076
    %v1091 = vadd.f32 %v901, %v1079
    %v1092 = vadd.f32 %v902, %v1084
    %v1093 = vadd.f32 %v903, %v1087
    %s1094 = scalar_lea.vmem [#allocation2], 64
    %v1095 = vld [vmem:[%s1094] sm:$0xf]
    %v1096 = vld [vmem:[%s1094 + $0x4] sm:$0xf]
    %v1097 = vld [vmem:[%s1094 + $0x8] sm:$0xf]
    %v1098 = vld [vmem:[%s1094 + $0xc] sm:$0xf]
    %v1103 = vunpack.c.l.b16 %v1095
    %v1104 = vunpack.c.l.b16 %v1096
    %v1105 = vunpack.c.l.b16 %v1097
    %v1106 = vunpack.c.l.b16 %v1098
    %v1107 = vpack.c.b16 %v1104, %v1103
    %v1108 = vpack.c.b16 %v1106, %v1105
    %v1110 = vsel %vm357, %v1107, 0
    %v1113 = vsel %vm357, %v1108, 0
    %1115 = vmatprep.subr.bf16.mxu0 0
    %1116 = vmatpush1.bf16.msra.mxu0 %v339
    %1117 = vmatprep.subr.bf16.mxu0 0
    %1118 = vmatpush1.bf16.msra.mxu0 %v340
    %1119 = vmatprep.subr.bf16.mxu0 0
    %1120 = vmatpush1.bf16.msra.mxu0 %v341
    %1121 = vmatprep.subr.bf16.mxu0 0
    %1122 = vmatpush1.bf16.msra.mxu0 %v342
    %1123 = vmatprep.subr.bf16.mxu0 0
    %1124 = vmatpush1.bf16.msra.mxu0 0
    %1125 = vmatprep.subr.bf16.mxu0 0
    %1126 = vmatpush1.bf16.msra.mxu0 0
    %1127 = vmatprep.subr.bf16.mxu0 0
    %1128 = vmatpush1.bf16.msra.mxu0 0
    %1129 = vmatprep.subr.bf16.mxu0 0
    %1130 = vmatpush1.bf16.msra.mxu0 0
    %1131 = vmatprep.subr.bf16.mxu0 0
    %1132 = vmatpush1.bf16.msra.mxu0 0
    %1133 = vmatprep.subr.bf16.mxu0 0
    %1134 = vmatpush1.bf16.msra.mxu0 0
    %1135 = vmatprep.subr.bf16.mxu0 0
    %1136 = vmatpush1.bf16.msra.mxu0 0
    %1137 = vmatprep.subr.bf16.mxu0 0
    %1138 = vmatpush1.bf16.msra.mxu0 0
    %1139 = vmatprep.subr.bf16.mxu0 0
    %1140 = vmatpush1.bf16.msra.mxu0 0
    %1141 = vmatprep.subr.bf16.mxu0 0
    %1142 = vmatpush1.bf16.msra.mxu0 0
    %1143 = vmatprep.subr.bf16.mxu0 0
    %1144 = vmatpush1.bf16.msra.mxu0 0
    %1145 = vmatprep.subr.bf16.mxu0 0
    %1146 = vmatpush1.bf16.msra.mxu0 0
    %1147 = vmatprep.mubr.bf16.mxu0 0
    %1148 = vmatmul.mubr.bf16.gmra.mrb[0].mxu0 %v1110
    %v1149 = vpop.f32.mrb[0].mxu0
    %v1150 = vadd.f32 0.0, %v1149
    %v1151 = vpop.f32.mrb[0].mxu0
    %v1152 = vpop.f32.mrb[0].mxu0
    %v1153 = vadd.f32 0.0, %v1152
    %v1154 = vpop.f32.mrb[0].mxu0
    %1155 = vmatprep.mubr.bf16.mxu0 0
    %1156 = vmatmul.mubr.bf16.gmra.mrb[0].mxu0 %v1113
    %v1157 = vpop.f32.mrb[0].mxu0
    %v1158 = vadd.f32 0.0, %v1157
    %v1159 = vpop.f32.mrb[0].mxu0
    %v1160 = vpop.f32.mrb[0].mxu0
    %v1161 = vadd.f32 0.0, %v1160
    %v1162 = vpop.f32.mrb[0].mxu0
    %1163 = vdwg.mxu0
    %v1164 = vpack.c.bf16 %v1153, %v1150
    %v1165 = vpack.c.bf16 %v1161, %v1158
    %s1166 = scalar_lea.vmem %s2, 256
    %v1167 = vld [vmem:[%s1166] sm:$0xf]
    %v1168 = vld [vmem:[%s1166 + $0x4] sm:$0xf]
    %v1169 = vld [vmem:[%s1166 + $0x8] sm:$0xf]
    %v1170 = vld [vmem:[%s1166 + $0xc] sm:$0xf]
    %v1171 = vld [vmem:[%s1166 + $0x10] sm:$0xf]
    %v1172 = vld [vmem:[%s1166 + $0x14] sm:$0xf]
    %v1173 = vld [vmem:[%s1166 + $0x18] sm:$0xf]
    %v1174 = vld [vmem:[%s1166 + $0x1c] sm:$0xf]
    %v1175 = vld [vmem:[%s1166 + $0x20] sm:$0xf]
    %v1176 = vld [vmem:[%s1166 + $0x24] sm:$0xf]
    %v1177 = vld [vmem:[%s1166 + $0x28] sm:$0xf]
    %v1178 = vld [vmem:[%s1166 + $0x2c] sm:$0xf]
    %v1179 = vld [vmem:[%s1166 + $0x30] sm:$0xf]
    %v1180 = vld [vmem:[%s1166 + $0x34] sm:$0xf]
    %v1181 = vld [vmem:[%s1166 + $0x38] sm:$0xf]
    %v1182 = vld [vmem:[%s1166 + $0x3c] sm:$0xf]
    %v1199 = vunpack.c.l.b16 %v1167
    %v1200 = vunpack.c.l.b16 %v1168
    %v1201 = vunpack.c.l.b16 %v1169
    %v1202 = vunpack.c.l.b16 %v1170
    %v1203 = vunpack.c.l.b16 %v1171
    %v1204 = vunpack.c.l.b16 %v1172
    %v1205 = vunpack.c.l.b16 %v1173
    %v1206 = vunpack.c.l.b16 %v1174
    %v1207 = vunpack.c.l.b16 %v1175
    %v1208 = vunpack.c.l.b16 %v1176
    %v1209 = vunpack.c.l.b16 %v1177
    %v1210 = vunpack.c.l.b16 %v1178
    %v1211 = vunpack.c.l.b16 %v1179
    %v1212 = vunpack.c.l.b16 %v1180
    %v1213 = vunpack.c.l.b16 %v1181
    %v1214 = vunpack.c.l.b16 %v1182
    %v1215 = vpack.c.b16 %v1200, %v1199
    %v1216 = vpack.c.b16 %v1202, %v1201
    %v1217 = vpack.c.b16 %v1204, %v1203
    %v1218 = vpack.c.b16 %v1206, %v1205
    %v1219 = vpack.c.b16 %v1208, %v1207
    %v1220 = vpack.c.b16 %v1210, %v1209
    %v1221 = vpack.c.b16 %v1212, %v1211
    %v1222 = vpack.c.b16 %v1214, %v1213
    %1231 = vmatprep.subr.bf16.mxu0 0
    %1232 = vmatpush1.bf16.msra.mxu0 %v1215
    %1233 = vmatprep.subr.bf16.mxu0 0
    %1234 = vmatpush1.bf16.msra.mxu0 %v1216
    %1235 = vmatprep.subr.bf16.mxu0 0
    %1236 = vmatpush1.bf16.msra.mxu0 %v1217
    %1237 = vmatprep.subr.bf16.mxu0 0
    %1238 = vmatpush1.bf16.msra.mxu0 %v1218
    %1239 = vmatprep.subr.bf16.mxu0 0
    %1240 = vmatpush1.bf16.msra.mxu0 %v1219
    %1241 = vmatprep.subr.bf16.mxu0 0
    %1242 = vmatpush1.bf16.msra.mxu0 %v1220
    %1243 = vmatprep.subr.bf16.mxu0 0
    %1244 = vmatpush1.bf16.msra.mxu0 %v1221
    %1245 = vmatprep.subr.bf16.mxu0 0
    %1246 = vmatpush1.bf16.msra.mxu0 %v1222
    %1247 = vmatprep.subr.bf16.mxu0 0
    %1248 = vmatpush1.bf16.msra.mxu0 0
    %1249 = vmatprep.subr.bf16.mxu0 0
    %1250 = vmatpush1.bf16.msra.mxu0 0
    %1251 = vmatprep.subr.bf16.mxu0 0
    %1252 = vmatpush1.bf16.msra.mxu0 0
    %1253 = vmatprep.subr.bf16.mxu0 0
    %1254 = vmatpush1.bf16.msra.mxu0 0
    %1255 = vmatprep.subr.bf16.mxu0 0
    %1256 = vmatpush1.bf16.msra.mxu0 0
    %1257 = vmatprep.subr.bf16.mxu0 0
    %1258 = vmatpush1.bf16.msra.mxu0 0
    %1259 = vmatprep.subr.bf16.mxu0 0
    %1260 = vmatpush1.bf16.msra.mxu0 0
    %1261 = vmatprep.subr.bf16.mxu0 0
    %1262 = vmatpush1.bf16.msra.mxu0 0
    %1263 = vmatprep.mubr.bf16.mxu0 0
    %1264 = vmatmul.mubr.bf16.gmra.mrb[0].mxu0 %v1164
    %v1265 = vpop.f32.mrb[0].mxu0
    %v1266 = vadd.f32 0.0, %v1265
    %v1267 = vpop.f32.mrb[0].mxu0
    %v1268 = vpop.f32.mrb[0].mxu0
    %v1269 = vadd.f32 0.0, %v1268
    %v1270 = vpop.f32.mrb[0].mxu0
    %1271 = vmatprep.mubr.bf16.mxu0 0
    %1272 = vmatmul.mubr.bf16.gmra.mrb[0].mxu0 %v1165
    %v1273 = vpop.f32.mrb[0].mxu0
    %v1274 = vadd.f32 0.0, %v1273
    %v1275 = vpop.f32.mrb[0].mxu0
    %v1276 = vpop.f32.mrb[0].mxu0
    %v1277 = vadd.f32 0.0, %v1276
    %v1278 = vpop.f32.mrb[0].mxu0
    %1279 = vdwg.mxu0
    %v1280 = vadd.f32 %v1090, %v1266
    %v1281 = vadd.f32 %v1091, %v1269
    %v1282 = vadd.f32 %v1092, %v1274
    %v1283 = vadd.f32 %v1093, %v1277
    %s1284 = scalar_lea.vmem [#allocation2], 80
    %v1285 = vld [vmem:[%s1284] sm:$0xf]
    %v1286 = vld [vmem:[%s1284 + $0x4] sm:$0xf]
    %v1287 = vld [vmem:[%s1284 + $0x8] sm:$0xf]
    %v1288 = vld [vmem:[%s1284 + $0xc] sm:$0xf]
    %v1293 = vunpack.c.l.b16 %v1285
    %v1294 = vunpack.c.l.b16 %v1286
    %v1295 = vunpack.c.l.b16 %v1287
    %v1296 = vunpack.c.l.b16 %v1288
    %v1297 = vpack.c.b16 %v1294, %v1293
    %v1298 = vpack.c.b16 %v1296, %v1295
    %v1300 = vsel %vm357, %v1297, 0
    %v1303 = vsel %vm357, %v1298, 0
    %1305 = vmatprep.subr.bf16.mxu0 0
    %1306 = vmatpush1.bf16.msra.mxu0 %v339
    %1307 = vmatprep.subr.bf16.mxu0 0
    %1308 = vmatpush1.bf16.msra.mxu0 %v340
    %1309 = vmatprep.subr.bf16.mxu0 0
    %1310 = vmatpush1.bf16.msra.mxu0 %v341
    %1311 = vmatprep.subr.bf16.mxu0 0
    %1312 = vmatpush1.bf16.msra.mxu0 %v342
    %1313 = vmatprep.subr.bf16.mxu0 0
    %1314 = vmatpush1.bf16.msra.mxu0 0
    %1315 = vmatprep.subr.bf16.mxu0 0
    %1316 = vmatpush1.bf16.msra.mxu0 0
    %1317 = vmatprep.subr.bf16.mxu0 0
    %1318 = vmatpush1.bf16.msra.mxu0 0
    %1319 = vmatprep.subr.bf16.mxu0 0
    %1320 = vmatpush1.bf16.msra.mxu0 0
    %1321 = vmatprep.subr.bf16.mxu0 0
    %1322 = vmatpush1.bf16.msra.mxu0 0
    %1323 = vmatprep.subr.bf16.mxu0 0
    %1324 = vmatpush1.bf16.msra.mxu0 0
    %1325 = vmatprep.subr.bf16.mxu0 0
    %1326 = vmatpush1.bf16.msra.mxu0 0
    %1327 = vmatprep.subr.bf16.mxu0 0
    %1328 = vmatpush1.bf16.msra.mxu0 0
    %1329 = vmatprep.subr.bf16.mxu0 0
    %1330 = vmatpush1.bf16.msra.mxu0 0
    %1331 = vmatprep.subr.bf16.mxu0 0
    %1332 = vmatpush1.bf16.msra.mxu0 0
    %1333 = vmatprep.subr.bf16.mxu0 0
    %1334 = vmatpush1.bf16.msra.mxu0 0
    %1335 = vmatprep.subr.bf16.mxu0 0
    %1336 = vmatpush1.bf16.msra.mxu0 0
    %1337 = vmatprep.mubr.bf16.mxu0 0
    %1338 = vmatmul.mubr.bf16.gmra.mrb[0].mxu0 %v1300
    %v1339 = vpop.f32.mrb[0].mxu0
    %v1340 = vadd.f32 0.0, %v1339
    %v1341 = vpop.f32.mrb[0].mxu0
    %v1342 = vpop.f32.mrb[0].mxu0
    %v1343 = vadd.f32 0.0, %v1342
    %v1344 = vpop.f32.mrb[0].mxu0
    %1345 = vmatprep.mubr.bf16.mxu0 0
    %1346 = vmatmul.mubr.bf16.gmra.mrb[0].mxu0 %v1303
    %v1347 = vpop.f32.mrb[0].mxu0
    %v1348 = vadd.f32 0.0, %v1347
    %v1349 = vpop.f32.mrb[0].mxu0
    %v1350 = vpop.f32.mrb[0].mxu0
    %v1351 = vadd.f32 0.0, %v1350
    %v1352 = vpop.f32.mrb[0].mxu0
    %1353 = vdwg.mxu0
    %v1354 = vpack.c.bf16 %v1343, %v1340
    %v1355 = vpack.c.bf16 %v1351, %v1348
    %s1356 = scalar_lea.vmem %s2, 320
    %v1357 = vld [vmem:[%s1356] sm:$0xf]
    %v1358 = vld [vmem:[%s1356 + $0x4] sm:$0xf]
    %v1359 = vld [vmem:[%s1356 + $0x8] sm:$0xf]
    %v1360 = vld [vmem:[%s1356 + $0xc] sm:$0xf]
    %v1361 = vld [vmem:[%s1356 + $0x10] sm:$0xf]
    %v1362 = vld [vmem:[%s1356 + $0x14] sm:$0xf]
    %v1363 = vld [vmem:[%s1356 + $0x18] sm:$0xf]
    %v1364 = vld [vmem:[%s1356 + $0x1c] sm:$0xf]
    %v1365 = vld [vmem:[%s1356 + $0x20] sm:$0xf]
    %v1366 = vld [vmem:[%s1356 + $0x24] sm:$0xf]
    %v1367 = vld [vmem:[%s1356 + $0x28] sm:$0xf]
    %v1368 = vld [vmem:[%s1356 + $0x2c] sm:$0xf]
    %v1369 = vld [vmem:[%s1356 + $0x30] sm:$0xf]
    %v1370 = vld [vmem:[%s1356 + $0x34] sm:$0xf]
    %v1371 = vld [vmem:[%s1356 + $0x38] sm:$0xf]
    %v1372 = vld [vmem:[%s1356 + $0x3c] sm:$0xf]
    %v1389 = vunpack.c.l.b16 %v1357
    %v1390 = vunpack.c.l.b16 %v1358
    %v1391 = vunpack.c.l.b16 %v1359
    %v1392 = vunpack.c.l.b16 %v1360
    %v1393 = vunpack.c.l.b16 %v1361
    %v1394 = vunpack.c.l.b16 %v1362
    %v1395 = vunpack.c.l.b16 %v1363
    %v1396 = vunpack.c.l.b16 %v1364
    %v1397 = vunpack.c.l.b16 %v1365
    %v1398 = vunpack.c.l.b16 %v1366
    %v1399 = vunpack.c.l.b16 %v1367
    %v1400 = vunpack.c.l.b16 %v1368
    %v1401 = vunpack.c.l.b16 %v1369
    %v1402 = vunpack.c.l.b16 %v1370
    %v1403 = vunpack.c.l.b16 %v1371
    %v1404 = vunpack.c.l.b16 %v1372
    %v1405 = vpack.c.b16 %v1390, %v1389
    %v1406 = vpack.c.b16 %v1392, %v1391
    %v1407 = vpack.c.b16 %v1394, %v1393
    %v1408 = vpack.c.b16 %v1396, %v1395
    %v1409 = vpack.c.b16 %v1398, %v1397
    %v1410 = vpack.c.b16 %v1400, %v1399
    %v1411 = vpack.c.b16 %v1402, %v1401
    %v1412 = vpack.c.b16 %v1404, %v1403
    %1421 = vmatprep.subr.bf16.mxu0 0
    %1422 = vmatpush1.bf16.msra.mxu0 %v1405
    %1423 = vmatprep.subr.bf16.mxu0 0
    %1424 = vmatpush1.bf16.msra.mxu0 %v1406
    %1425 = vmatprep.subr.bf16.mxu0 0
    %1426 = vmatpush1.bf16.msra.mxu0 %v1407
    %1427 = vmatprep.subr.bf16.mxu0 0
    %1428 = vmatpush1.bf16.msra.mxu0 %v1408
    %1429 = vmatprep.subr.bf16.mxu0 0
    %1430 = vmatpush1.bf16.msra.mxu0 %v1409
    %1431 = vmatprep.subr.bf16.mxu0 0
    %1432 = vmatpush1.bf16.msra.mxu0 %v1410
    %1433 = vmatprep.subr.bf16.mxu0 0
    %1434 = vmatpush1.bf16.msra.mxu0 %v1411
    %1435 = vmatprep.subr.bf16.mxu0 0
    %1436 = vmatpush1.bf16.msra.mxu0 %v1412
    %1437 = vmatprep.subr.bf16.mxu0 0
    %1438 = vmatpush1.bf16.msra.mxu0 0
    %1439 = vmatprep.subr.bf16.mxu0 0
    %1440 = vmatpush1.bf16.msra.mxu0 0
    %1441 = vmatprep.subr.bf16.mxu0 0
    %1442 = vmatpush1.bf16.msra.mxu0 0
    %1443 = vmatprep.subr.bf16.mxu0 0
    %1444 = vmatpush1.bf16.msra.mxu0 0
    %1445 = vmatprep.subr.bf16.mxu0 0
    %1446 = vmatpush1.bf16.msra.mxu0 0
    %1447 = vmatprep.subr.bf16.mxu0 0
    %1448 = vmatpush1.bf16.msra.mxu0 0
    %1449 = vmatprep.subr.bf16.mxu0 0
    %1450 = vmatpush1.bf16.msra.mxu0 0
    %1451 = vmatprep.subr.bf16.mxu0 0
    %1452 = vmatpush1.bf16.msra.mxu0 0
    %1453 = vmatprep.mubr.bf16.mxu0 0
    %1454 = vmatmul.mubr.bf16.gmra.mrb[0].mxu0 %v1354
    %v1455 = vpop.f32.mrb[0].mxu0
    %v1456 = vadd.f32 0.0, %v1455
    %v1457 = vpop.f32.mrb[0].mxu0
    %v1458 = vpop.f32.mrb[0].mxu0
    %v1459 = vadd.f32 0.0, %v1458
    %v1460 = vpop.f32.mrb[0].mxu0
    %1461 = vmatprep.mubr.bf16.mxu0 0
    %1462 = vmatmul.mubr.bf16.gmra.mrb[0].mxu0 %v1355
    %v1463 = vpop.f32.mrb[0].mxu0
    %v1464 = vadd.f32 0.0, %v1463
    %v1465 = vpop.f32.mrb[0].mxu0
    %v1466 = vpop.f32.mrb[0].mxu0
    %v1467 = vadd.f32 0.0, %v1466
    %v1468 = vpop.f32.mrb[0].mxu0
    %1469 = vdwg.mxu0
    %v1470 = vadd.f32 %v1280, %v1456
    %v1471 = vadd.f32 %v1281, %v1459
    %v1472 = vadd.f32 %v1282, %v1464
    %v1473 = vadd.f32 %v1283, %v1467
    %s1474 = scalar_lea.vmem [#allocation2], 96
    %v1475 = vld [vmem:[%s1474] sm:$0xf]
    %v1476 = vld [vmem:[%s1474 + $0x4] sm:$0xf]
    %v1477 = vld [vmem:[%s1474 + $0x8] sm:$0xf]
    %v1478 = vld [vmem:[%s1474 + $0xc] sm:$0xf]
    %v1483 = vunpack.c.l.b16 %v1475
    %v1484 = vunpack.c.l.b16 %v1476
    %v1485 = vunpack.c.l.b16 %v1477
    %v1486 = vunpack.c.l.b16 %v1478
    %v1487 = vpack.c.b16 %v1484, %v1483
    %v1488 = vpack.c.b16 %v1486, %v1485
    %v1490 = vsel %vm357, %v1487, 0
    %v1493 = vsel %vm357, %v1488, 0
    %1495 = vmatprep.subr.bf16.mxu0 0
    %1496 = vmatpush1.bf16.msra.mxu0 %v339
    %1497 = vmatprep.subr.bf16.mxu0 0
    %1498 = vmatpush1.bf16.msra.mxu0 %v340
    %1499 = vmatprep.subr.bf16.mxu0 0
    %1500 = vmatpush1.bf16.msra.mxu0 %v341
    %1501 = vmatprep.subr.bf16.mxu0 0
    %1502 = vmatpush1.bf16.msra.mxu0 %v342
    %1503 = vmatprep.subr.bf16.mxu0 0
    %1504 = vmatpush1.bf16.msra.mxu0 0
    %1505 = vmatprep.subr.bf16.mxu0 0
    %1506 = vmatpush1.bf16.msra.mxu0 0
    %1507 = vmatprep.subr.bf16.mxu0 0
    %1508 = vmatpush1.bf16.msra.mxu0 0
    %1509 = vmatprep.subr.bf16.mxu0 0
    %1510 = vmatpush1.bf16.msra.mxu0 0
    %1511 = vmatprep.subr.bf16.mxu0 0
    %1512 = vmatpush1.bf16.msra.mxu0 0
    %1513 = vmatprep.subr.bf16.mxu0 0
    %1514 = vmatpush1.bf16.msra.mxu0 0
    %1515 = vmatprep.subr.bf16.mxu0 0
    %1516 = vmatpush1.bf16.msra.mxu0 0
    %1517 = vmatprep.subr.bf16.mxu0 0
    %1518 = vmatpush1.bf16.msra.mxu0 0
    %1519 = vmatprep.subr.bf16.mxu0 0
    %1520 = vmatpush1.bf16.msra.mxu0 0
    %1521 = vmatprep.subr.bf16.mxu0 0
    %1522 = vmatpush1.bf16.msra.mxu0 0
    %1523 = vmatprep.subr.bf16.mxu0 0
    %1524 = vmatpush1.bf16.msra.mxu0 0
    %1525 = vmatprep.subr.bf16.mxu0 0
    %1526 = vmatpush1.bf16.msra.mxu0 0
    %1527 = vmatprep.mubr.bf16.mxu0 0
    %1528 = vmatmul.mubr.bf16.gmra.mrb[0].mxu0 %v1490
    %v1529 = vpop.f32.mrb[0].mxu0
    %v1530 = vadd.f32 0.0, %v1529
    %v1531 = vpop.f32.mrb[0].mxu0
    %v1532 = vpop.f32.mrb[0].mxu0
    %v1533 = vadd.f32 0.0, %v1532
    %v1534 = vpop.f32.mrb[0].mxu0
    %1535 = vmatprep.mubr.bf16.mxu0 0
    %1536 = vmatmul.mubr.bf16.gmra.mrb[0].mxu0 %v1493
    %v1537 = vpop.f32.mrb[0].mxu0
    %v1538 = vadd.f32 0.0, %v1537
    %v1539 = vpop.f32.mrb[0].mxu0
    %v1540 = vpop.f32.mrb[0].mxu0
    %v1541 = vadd.f32 0.0, %v1540
    %v1542 = vpop.f32.mrb[0].mxu0
    %1543 = vdwg.mxu0
    %v1544 = vpack.c.bf16 %v1533, %v1530
    %v1545 = vpack.c.bf16 %v1541, %v1538
    %s1546 = scalar_lea.vmem %s2, 384
    %v1547 = vld [vmem:[%s1546] sm:$0xf]
    %v1548 = vld [vmem:[%s1546 + $0x4] sm:$0xf]
    %v1549 = vld [vmem:[%s1546 + $0x8] sm:$0xf]
    %v1550 = vld [vmem:[%s1546 + $0xc] sm:$0xf]
    %v1551 = vld [vmem:[%s1546 + $0x10] sm:$0xf]
    %v1552 = vld [vmem:[%s1546 + $0x14] sm:$0xf]
    %v1553 = vld [vmem:[%s1546 + $0x18] sm:$0xf]
    %v1554 = vld [vmem:[%s1546 + $0x1c] sm:$0xf]
    %v1555 = vld [vmem:[%s1546 + $0x20] sm:$0xf]
    %v1556 = vld [vmem:[%s1546 + $0x24] sm:$0xf]
    %v1557 = vld [vmem:[%s1546 + $0x28] sm:$0xf]
    %v1558 = vld [vmem:[%s1546 + $0x2c] sm:$0xf]
    %v1559 = vld [vmem:[%s1546 + $0x30] sm:$0xf]
    %v1560 = vld [vmem:[%s1546 + $0x34] sm:$0xf]
    %v1561 = vld [vmem:[%s1546 + $0x38] sm:$0xf]
    %v1562 = vld [vmem:[%s1546 + $0x3c] sm:$0xf]
    %v1579 = vunpack.c.l.b16 %v1547
    %v1580 = vunpack.c.l.b16 %v1548
    %v1581 = vunpack.c.l.b16 %v1549
    %v1582 = vunpack.c.l.b16 %v1550
    %v1583 = vunpack.c.l.b16 %v1551
    %v1584 = vunpack.c.l.b16 %v1552
    %v1585 = vunpack.c.l.b16 %v1553
    %v1586 = vunpack.c.l.b16 %v1554
    %v1587 = vunpack.c.l.b16 %v1555
    %v1588 = vunpack.c.l.b16 %v1556
    %v1589 = vunpack.c.l.b16 %v1557
    %v1590 = vunpack.c.l.b16 %v1558
    %v1591 = vunpack.c.l.b16 %v1559
    %v1592 = vunpack.c.l.b16 %v1560
    %v1593 = vunpack.c.l.b16 %v1561
    %v1594 = vunpack.c.l.b16 %v1562
    %v1595 = vpack.c.b16 %v1580, %v1579
    %v1596 = vpack.c.b16 %v1582, %v1581
    %v1597 = vpack.c.b16 %v1584, %v1583
    %v1598 = vpack.c.b16 %v1586, %v1585
    %v1599 = vpack.c.b16 %v1588, %v1587
    %v1600 = vpack.c.b16 %v1590, %v1589
    %v1601 = vpack.c.b16 %v1592, %v1591
    %v1602 = vpack.c.b16 %v1594, %v1593
    %1611 = vmatprep.subr.bf16.mxu0 0
    %1612 = vmatpush1.bf16.msra.mxu0 %v1595
    %1613 = vmatprep.subr.bf16.mxu0 0
    %1614 = vmatpush1.bf16.msra.mxu0 %v1596
    %1615 = vmatprep.subr.bf16.mxu0 0
    %1616 = vmatpush1.bf16.msra.mxu0 %v1597
    %1617 = vmatprep.subr.bf16.mxu0 0
    %1618 = vmatpush1.bf16.msra.mxu0 %v1598
    %1619 = vmatprep.subr.bf16.mxu0 0
    %1620 = vmatpush1.bf16.msra.mxu0 %v1599
    %1621 = vmatprep.subr.bf16.mxu0 0
    %1622 = vmatpush1.bf16.msra.mxu0 %v1600
    %1623 = vmatprep.subr.bf16.mxu0 0
    %1624 = vmatpush1.bf16.msra.mxu0 %v1601
    %1625 = vmatprep.subr.bf16.mxu0 0
    %1626 = vmatpush1.bf16.msra.mxu0 %v1602
    %1627 = vmatprep.subr.bf16.mxu0 0
    %1628 = vmatpush1.bf16.msra.mxu0 0
    %1629 = vmatprep.subr.bf16.mxu0 0
    %1630 = vmatpush1.bf16.msra.mxu0 0
    %1631 = vmatprep.subr.bf16.mxu0 0
    %1632 = vmatpush1.bf16.msra.mxu0 0
    %1633 = vmatprep.subr.bf16.mxu0 0
    %1634 = vmatpush1.bf16.msra.mxu0 0
    %1635 = vmatprep.subr.bf16.mxu0 0
    %1636 = vmatpush1.bf16.msra.mxu0 0
    %1637 = vmatprep.subr.bf16.mxu0 0
    %1638 = vmatpush1.bf16.msra.mxu0 0
    %1639 = vmatprep.subr.bf16.mxu0 0
    %1640 = vmatpush1.bf16.msra.mxu0 0
    %1641 = vmatprep.subr.bf16.mxu0 0
    %1642 = vmatpush1.bf16.msra.mxu0 0
    %1643 = vmatprep.mubr.bf16.mxu0 0
    %1644 = vmatmul.mubr.bf16.gmra.mrb[0].mxu0 %v1544
    %v1645 = vpop.f32.mrb[0].mxu0
    %v1646 = vadd.f32 0.0, %v1645
    %v1647 = vpop.f32.mrb[0].mxu0
    %v1648 = vpop.f32.mrb[0].mxu0
    %v1649 = vadd.f32 0.0, %v1648
    %v1650 = vpop.f32.mrb[0].mxu0
    %1651 = vmatprep.mubr.bf16.mxu0 0
    %1652 = vmatmul.mubr.bf16.gmra.mrb[0].mxu0 %v1545
    %v1653 = vpop.f32.mrb[0].mxu0
    %v1654 = vadd.f32 0.0, %v1653
    %v1655 = vpop.f32.mrb[0].mxu0
    %v1656 = vpop.f32.mrb[0].mxu0
    %v1657 = vadd.f32 0.0, %v1656
    %v1658 = vpop.f32.mrb[0].mxu0
    %1659 = vdwg.mxu0
    %v1660 = vadd.f32 %v1470, %v1646
    %v1661 = vadd.f32 %v1471, %v1649
    %v1662 = vadd.f32 %v1472, %v1654
    %v1663 = vadd.f32 %v1473, %v1657
    %v1664 = vld [vmem:[#allocation5] sm:$0x1]
    %v1666 = vlaneseq
    %v1667 = vshrl.u32 %v1666, 7
    %v1668 = vsub.s32 0, %v1667
    %v1669 = vrot.slane %v1664, %v1668
    %v1671 = vadd.f32 %v1660, %v1669
    %v1672 = vadd.f32 %v1661, %v1669
    %v1673 = vadd.f32 %v1662, %v1669
    %v1674 = vadd.f32 %v1663, %v1669
    %v1675 = vmax.f32 %v1671, 0.0
    %v1676 = vmax.f32 %v1672, 0.0
    %v1677 = vmax.f32 %v1673, 0.0
    %v1678 = vmax.f32 %v1674, 0.0
    %v1679 = vpack.c.bf16 %v1676, %v1675
    %v1680 = vpack.c.bf16 %v1678, %v1677
    %v1681 = vld [vmem:[%s4] sm:$0xf]
    %v1682 = vld [vmem:[%s4 + $0x4] sm:$0xf]
    %v1683 = vld [vmem:[%s4 + $0x8] sm:$0xf]
    %v1684 = vld [vmem:[%s4 + $0xc] sm:$0xf]
    %v1685 = vld [vmem:[%s4 + $0x10] sm:$0xf]
    %v1686 = vld [vmem:[%s4 + $0x14] sm:$0xf]
    %v1687 = vld [vmem:[%s4 + $0x18] sm:$0xf]
    %v1688 = vld [vmem:[%s4 + $0x1c] sm:$0xf]
    %v1689 = vld [vmem:[%s4 + $0x20] sm:$0xf]
    %v1690 = vld [vmem:[%s4 + $0x24] sm:$0xf]
    %v1691 = vld [vmem:[%s4 + $0x28] sm:$0xf]
    %v1692 = vld [vmem:[%s4 + $0x2c] sm:$0xf]
    %v1693 = vld [vmem:[%s4 + $0x30] sm:$0xf]
    %v1694 = vld [vmem:[%s4 + $0x34] sm:$0xf]
    %v1695 = vld [vmem:[%s4 + $0x38] sm:$0xf]
    %v1696 = vld [vmem:[%s4 + $0x3c] sm:$0xf]
    %v1713 = vunpack.c.l.b16 %v1681
    %v1714 = vunpack.c.l.b16 %v1682
    %v1715 = vunpack.c.l.b16 %v1683
    %v1716 = vunpack.c.l.b16 %v1684
    %v1717 = vunpack.c.l.b16 %v1685
    %v1718 = vunpack.c.l.b16 %v1686
    %v1719 = vunpack.c.l.b16 %v1687
    %v1720 = vunpack.c.l.b16 %v1688
    %v1721 = vunpack.c.l.b16 %v1689
    %v1722 = vunpack.c.l.b16 %v1690
    %v1723 = vunpack.c.l.b16 %v1691
    %v1724 = vunpack.c.l.b16 %v1692
    %v1725 = vunpack.c.l.b16 %v1693
    %v1726 = vunpack.c.l.b16 %v1694
    %v1727 = vunpack.c.l.b16 %v1695
    %v1728 = vunpack.c.l.b16 %v1696
    %v1729 = vpack.c.b16 %v1714, %v1713
    %v1730 = vpack.c.b16 %v1716, %v1715
    %v1731 = vpack.c.b16 %v1718, %v1717
    %v1732 = vpack.c.b16 %v1720, %v1719
    %v1733 = vpack.c.b16 %v1722, %v1721
    %v1734 = vpack.c.b16 %v1724, %v1723
    %v1735 = vpack.c.b16 %v1726, %v1725
    %v1736 = vpack.c.b16 %v1728, %v1727
    %1745 = vmatprep.subr.bf16.mxu0 0
    %1746 = vmatpush1.bf16.msra.mxu0 %v1729
    %1747 = vmatprep.subr.bf16.mxu0 0
    %1748 = vmatpush1.bf16.msra.mxu0 %v1730
    %1749 = vmatprep.subr.bf16.mxu0 0
    %1750 = vmatpush1.bf16.msra.mxu0 %v1731
    %1751 = vmatprep.subr.bf16.mxu0 0
    %1752 = vmatpush1.bf16.msra.mxu0 %v1732
    %1753 = vmatprep.subr.bf16.mxu0 0
    %1754 = vmatpush1.bf16.msra.mxu0 %v1733
    %1755 = vmatprep.subr.bf16.mxu0 0
    %1756 = vmatpush1.bf16.msra.mxu0 %v1734
    %1757 = vmatprep.subr.bf16.mxu0 0
    %1758 = vmatpush1.bf16.msra.mxu0 %v1735
    %1759 = vmatprep.subr.bf16.mxu0 0
    %1760 = vmatpush1.bf16.msra.mxu0 %v1736
    %1761 = vmatprep.subr.bf16.mxu0 0
    %1762 = vmatpush1.bf16.msra.mxu0 0
    %1763 = vmatprep.subr.bf16.mxu0 0
    %1764 = vmatpush1.bf16.msra.mxu0 0
    %1765 = vmatprep.subr.bf16.mxu0 0
    %1766 = vmatpush1.bf16.msra.mxu0 0
    %1767 = vmatprep.subr.bf16.mxu0 0
    %1768 = vmatpush1.bf16.msra.mxu0 0
    %1769 = vmatprep.subr.bf16.mxu0 0
    %1770 = vmatpush1.bf16.msra.mxu0 0
    %1771 = vmatprep.subr.bf16.mxu0 0
    %1772 = vmatpush1.bf16.msra.mxu0 0
    %1773 = vmatprep.subr.bf16.mxu0 0
    %1774 = vmatpush1.bf16.msra.mxu0 0
    %1775 = vmatprep.subr.bf16.mxu0 0
    %1776 = vmatpush1.bf16.msra.mxu0 0
    %1777 = vmatprep.mubr.bf16.mxu0 0
    %1778 = vmatmul.mubr.bf16.gmra.mrb[0].mxu0 %v1679
    %v1779 = vpop.f32.mrb[0].mxu0
    %v1780 = vadd.f32 0.0, %v1779
    %v1781 = vpop.f32.mrb[0].mxu0
    %v1782 = vpop.f32.mrb[0].mxu0
    %v1783 = vadd.f32 0.0, %v1782
    %v1784 = vpop.f32.mrb[0].mxu0
    %1785 = vmatprep.mubr.bf16.mxu0 0
    %1786 = vmatmul.mubr.bf16.gmra.mrb[0].mxu0 %v1680
    %v1787 = vpop.f32.mrb[0].mxu0
    %v1788 = vadd.f32 0.0, %v1787
    %v1789 = vpop.f32.mrb[0].mxu0
    %v1790 = vpop.f32.mrb[0].mxu0
    %v1791 = vadd.f32 0.0, %v1790
    %v1792 = vpop.f32.mrb[0].mxu0
    %1793 = vdwg.mxu0
    %s1794 = scalar_lea.vmem %s4, 64
    %v1795 = vld [vmem:[%s1794] sm:$0xf]
    %v1796 = vld [vmem:[%s1794 + $0x4] sm:$0xf]
    %v1797 = vld [vmem:[%s1794 + $0x8] sm:$0xf]
    %v1798 = vld [vmem:[%s1794 + $0xc] sm:$0xf]
    %v1799 = vld [vmem:[%s1794 + $0x10] sm:$0xf]
    %v1800 = vld [vmem:[%s1794 + $0x14] sm:$0xf]
    %v1801 = vld [vmem:[%s1794 + $0x18] sm:$0xf]
    %v1802 = vld [vmem:[%s1794 + $0x1c] sm:$0xf]
    %v1803 = vld [vmem:[%s1794 + $0x20] sm:$0xf]
    %v1804 = vld [vmem:[%s1794 + $0x24] sm:$0xf]
    %v1805 = vld [vmem:[%s1794 + $0x28] sm:$0xf]
    %v1806 = vld [vmem:[%s1794 + $0x2c] sm:$0xf]
    %v1807 = vld [vmem:[%s1794 + $0x30] sm:$0xf]
    %v1808 = vld [vmem:[%s1794 + $0x34] sm:$0xf]
    %v1809 = vld [vmem:[%s1794 + $0x38] sm:$0xf]
    %v1810 = vld [vmem:[%s1794 + $0x3c] sm:$0xf]
    %v1827 = vunpack.c.l.b16 %v1795
    %v1828 = vunpack.c.l.b16 %v1796
    %v1829 = vunpack.c.l.b16 %v1797
    %v1830 = vunpack.c.l.b16 %v1798
    %v1831 = vunpack.c.l.b16 %v1799
    %v1832 = vunpack.c.l.b16 %v1800
    %v1833 = vunpack.c.l.b16 %v1801
    %v1834 = vunpack.c.l.b16 %v1802
    %v1835 = vunpack.c.l.b16 %v1803
    %v1836 = vunpack.c.l.b16 %v1804
    %v1837 = vunpack.c.l.b16 %v1805
    %v1838 = vunpack.c.l.b16 %v1806
    %v1839 = vunpack.c.l.b16 %v1807
    %v1840 = vunpack.c.l.b16 %v1808
    %v1841 = vunpack.c.l.b16 %v1809
    %v1842 = vunpack.c.l.b16 %v1810
    %v1843 = vpack.c.b16 %v1828, %v1827
    %v1844 = vpack.c.b16 %v1830, %v1829
    %v1845 = vpack.c.b16 %v1832, %v1831
    %v1846 = vpack.c.b16 %v1834, %v1833
    %v1847 = vpack.c.b16 %v1836, %v1835
    %v1848 = vpack.c.b16 %v1838, %v1837
    %v1849 = vpack.c.b16 %v1840, %v1839
    %v1850 = vpack.c.b16 %v1842, %v1841
    %1859 = vmatprep.subr.bf16.mxu0 0
    %1860 = vmatpush1.bf16.msra.mxu0 %v1843
    %1861 = vmatprep.subr.bf16.mxu0 0
    %1862 = vmatpush1.bf16.msra.mxu0 %v1844
    %1863 = vmatprep.subr.bf16.mxu0 0
    %1864 = vmatpush1.bf16.msra.mxu0 %v1845
    %1865 = vmatprep.subr.bf16.mxu0 0
    %1866 = vmatpush1.bf16.msra.mxu0 %v1846
    %1867 = vmatprep.subr.bf16.mxu0 0
    %1868 = vmatpush1.bf16.msra.mxu0 %v1847
    %1869 = vmatprep.subr.bf16.mxu0 0
    %1870 = vmatpush1.bf16.msra.mxu0 %v1848
    %1871 = vmatprep.subr.bf16.mxu0 0
    %1872 = vmatpush1.bf16.msra.mxu0 %v1849
    %1873 = vmatprep.subr.bf16.mxu0 0
    %1874 = vmatpush1.bf16.msra.mxu0 %v1850
    %1875 = vmatprep.subr.bf16.mxu0 0
    %1876 = vmatpush1.bf16.msra.mxu0 0
    %1877 = vmatprep.subr.bf16.mxu0 0
    %1878 = vmatpush1.bf16.msra.mxu0 0
    %1879 = vmatprep.subr.bf16.mxu0 0
    %1880 = vmatpush1.bf16.msra.mxu0 0
    %1881 = vmatprep.subr.bf16.mxu0 0
    %1882 = vmatpush1.bf16.msra.mxu0 0
    %1883 = vmatprep.subr.bf16.mxu0 0
    %1884 = vmatpush1.bf16.msra.mxu0 0
    %1885 = vmatprep.subr.bf16.mxu0 0
    %1886 = vmatpush1.bf16.msra.mxu0 0
    %1887 = vmatprep.subr.bf16.mxu0 0
    %1888 = vmatpush1.bf16.msra.mxu0 0
    %1889 = vmatprep.subr.bf16.mxu0 0
    %1890 = vmatpush1.bf16.msra.mxu0 0
    %1891 = vmatprep.mubr.bf16.mxu0 0
    %1892 = vmatmul.mubr.bf16.gmra.mrb[0].mxu0 %v1679
    %v1893 = vpop.f32.mrb[0].mxu0
    %v1894 = vadd.f32 0.0, %v1893
    %v1895 = vpop.f32.mrb[0].mxu0
    %v1896 = vpop.f32.mrb[0].mxu0
    %v1897 = vadd.f32 0.0, %v1896
    %v1898 = vpop.f32.mrb[0].mxu0
    %1899 = vmatprep.mubr.bf16.mxu0 0
    %1900 = vmatmul.mubr.bf16.gmra.mrb[0].mxu0 %v1680
    %v1901 = vpop.f32.mrb[0].mxu0
    %v1902 = vadd.f32 0.0, %v1901
    %v1903 = vpop.f32.mrb[0].mxu0
    %v1904 = vpop.f32.mrb[0].mxu0
    %v1905 = vadd.f32 0.0, %v1904
    %v1906 = vpop.f32.mrb[0].mxu0
    %1907 = vdwg.mxu0
    %v1908 = vmax.f32 %v1780, %v1894
    %v1909 = vmax.f32 %v1783, %v1897
    %v1910 = vmax.f32 %v1788, %v1902
    %v1911 = vmax.f32 %v1791, %v1905
    %s1912 = scalar_lea.vmem %s4, 128
    %v1913 = vld [vmem:[%s1912] sm:$0xf]
    %v1914 = vld [vmem:[%s1912 + $0x4] sm:$0xf]
    %v1915 = vld [vmem:[%s1912 + $0x8] sm:$0xf]
    %v1916 = vld [vmem:[%s1912 + $0xc] sm:$0xf]
    %v1917 = vld [vmem:[%s1912 + $0x10] sm:$0xf]
    %v1918 = vld [vmem:[%s1912 + $0x14] sm:$0xf]
    %v1919 = vld [vmem:[%s1912 + $0x18] sm:$0xf]
    %v1920 = vld [vmem:[%s1912 + $0x1c] sm:$0xf]
    %v1921 = vld [vmem:[%s1912 + $0x20] sm:$0xf]
    %v1922 = vld [vmem:[%s1912 + $0x24] sm:$0xf]
    %v1923 = vld [vmem:[%s1912 + $0x28] sm:$0xf]
    %v1924 = vld [vmem:[%s1912 + $0x2c] sm:$0xf]
    %v1925 = vld [vmem:[%s1912 + $0x30] sm:$0xf]
    %v1926 = vld [vmem:[%s1912 + $0x34] sm:$0xf]
    %v1927 = vld [vmem:[%s1912 + $0x38] sm:$0xf]
    %v1928 = vld [vmem:[%s1912 + $0x3c] sm:$0xf]
    %v1945 = vunpack.c.l.b16 %v1913
    %v1946 = vunpack.c.l.b16 %v1914
    %v1947 = vunpack.c.l.b16 %v1915
    %v1948 = vunpack.c.l.b16 %v1916
    %v1949 = vunpack.c.l.b16 %v1917
    %v1950 = vunpack.c.l.b16 %v1918
    %v1951 = vunpack.c.l.b16 %v1919
    %v1952 = vunpack.c.l.b16 %v1920
    %v1953 = vunpack.c.l.b16 %v1921
    %v1954 = vunpack.c.l.b16 %v1922
    %v1955 = vunpack.c.l.b16 %v1923
    %v1956 = vunpack.c.l.b16 %v1924
    %v1957 = vunpack.c.l.b16 %v1925
    %v1958 = vunpack.c.l.b16 %v1926
    %v1959 = vunpack.c.l.b16 %v1927
    %v1960 = vunpack.c.l.b16 %v1928
    %v1961 = vpack.c.b16 %v1946, %v1945
    %v1962 = vpack.c.b16 %v1948, %v1947
    %v1963 = vpack.c.b16 %v1950, %v1949
    %v1964 = vpack.c.b16 %v1952, %v1951
    %v1965 = vpack.c.b16 %v1954, %v1953
    %v1966 = vpack.c.b16 %v1956, %v1955
    %v1967 = vpack.c.b16 %v1958, %v1957
    %v1968 = vpack.c.b16 %v1960, %v1959
    %1977 = vmatprep.subr.bf16.mxu0 0
    %1978 = vmatpush1.bf16.msra.mxu0 %v1961
    %1979 = vmatprep.subr.bf16.mxu0 0
    %1980 = vmatpush1.bf16.msra.mxu0 %v1962
    %1981 = vmatprep.subr.bf16.mxu0 0
    %1982 = vmatpush1.bf16.msra.mxu0 %v1963
    %1983 = vmatprep.subr.bf16.mxu0 0
    %1984 = vmatpush1.bf16.msra.mxu0 %v1964
    %1985 = vmatprep.subr.bf16.mxu0 0
    %1986 = vmatpush1.bf16.msra.mxu0 %v1965
    %1987 = vmatprep.subr.bf16.mxu0 0
    %1988 = vmatpush1.bf16.msra.mxu0 %v1966
    %1989 = vmatprep.subr.bf16.mxu0 0
    %1990 = vmatpush1.bf16.msra.mxu0 %v1967
    %1991 = vmatprep.subr.bf16.mxu0 0
    %1992 = vmatpush1.bf16.msra.mxu0 %v1968
    %1993 = vmatprep.subr.bf16.mxu0 0
    %1994 = vmatpush1.bf16.msra.mxu0 0
    %1995 = vmatprep.subr.bf16.mxu0 0
    %1996 = vmatpush1.bf16.msra.mxu0 0
    %1997 = vmatprep.subr.bf16.mxu0 0
    %1998 = vmatpush1.bf16.msra.mxu0 0
    %1999 = vmatprep.subr.bf16.mxu0 0
    %2000 = vmatpush1.bf16.msra.mxu0 0
    %2001 = vmatprep.subr.bf16.mxu0 0
    %2002 = vmatpush1.bf16.msra.mxu0 0
    %2003 = vmatprep.subr.bf16.mxu0 0
    %2004 = vmatpush1.bf16.msra.mxu0 0
    %2005 = vmatprep.subr.bf16.mxu0 0
    %2006 = vmatpush1.bf16.msra.mxu0 0
    %2007 = vmatprep.subr.bf16.mxu0 0
    %2008 = vmatpush1.bf16.msra.mxu0 0
    %2009 = vmatprep.mubr.bf16.mxu0 0
    %2010 = vmatmul.mubr.bf16.gmra.mrb[0].mxu0 %v1679
    %v2011 = vpop.f32.mrb[0].mxu0
    %v2012 = vadd.f32 0.0, %v2011
    %v2013 = vpop.f32.mrb[0].mxu0
    %v2014 = vpop.f32.mrb[0].mxu0
    %v2015 = vadd.f32 0.0, %v2014
    %v2016 = vpop.f32.mrb[0].mxu0
    %2017 = vmatprep.mubr.bf16.mxu0 0
    %2018 = vmatmul.mubr.bf16.gmra.mrb[0].mxu0 %v1680
    %v2019 = vpop.f32.mrb[0].mxu0
    %v2020 = vadd.f32 0.0, %v2019
    %v2021 = vpop.f32.mrb[0].mxu0
    %v2022 = vpop.f32.mrb[0].mxu0
    %v2023 = vadd.f32 0.0, %v2022
    %v2024 = vpop.f32.mrb[0].mxu0
    %2025 = vdwg.mxu0
    %v2026 = vmax.f32 %v1908, %v2012
    %v2027 = vmax.f32 %v1909, %v2015
    %v2028 = vmax.f32 %v1910, %v2020
    %v2029 = vmax.f32 %v1911, %v2023
    %v2030 = vpack.c.bf16 %v2027, %v2026
    %v2031 = vpack.c.bf16 %v2029, %v2028
    %v2032 = vld [vmem:[#allocation7] sm:$0xf]
    %v2033 = vld [vmem:[#allocation7 + $0x4] sm:$0xf]
    %v2036 = vunpack.c.l.b16 %v2032
    %v2037 = vunpack.c.l.b16 %v2033
    %v2038 = vpack.c.b16 %v2037, %v2036
    %vm2039 = vcmask 261120
    %v2041 = vsel %vm2039, %v2038, 0
    %2043 = vmatprep.subr.bf16.mxu0 0
    %2044 = vmatpush1.bf16.msra.mxu0 %v2030
    %2045 = vmatprep.subr.bf16.mxu0 0
    %2046 = vmatpush1.bf16.msra.mxu0 %v2031
    %2047 = vmatprep.subr.bf16.mxu0 0
    %2048 = vmatpush1.bf16.msra.mxu0 0
    %2049 = vmatprep.subr.bf16.mxu0 0
    %2050 = vmatpush1.bf16.msra.mxu0 0
    %2051 = vmatprep.subr.bf16.mxu0 0
    %2052 = vmatpush1.bf16.msra.mxu0 0
    %2053 = vmatprep.subr.bf16.mxu0 0
    %2054 = vmatpush1.bf16.msra.mxu0 0
    %2055 = vmatprep.subr.bf16.mxu0 0
    %2056 = vmatpush1.bf16.msra.mxu0 0
    %2057 = vmatprep.subr.bf16.mxu0 0
    %2058 = vmatpush1.bf16.msra.mxu0 0
    %2059 = vmatprep.subr.bf16.mxu0 0
    %2060 = vmatpush1.bf16.msra.mxu0 0
    %2061 = vmatprep.subr.bf16.mxu0 0
    %2062 = vmatpush1.bf16.msra.mxu0 0
    %2063 = vmatprep.subr.bf16.mxu0 0
    %2064 = vmatpush1.bf16.msra.mxu0 0
    %2065 = vmatprep.subr.bf16.mxu0 0
    %2066 = vmatpush1.bf16.msra.mxu0 0
    %2067 = vmatprep.subr.bf16.mxu0 0
    %2068 = vmatpush1.bf16.msra.mxu0 0
    %2069 = vmatprep.subr.bf16.mxu0 0
    %2070 = vmatpush1.bf16.msra.mxu0 0
    %2071 = vmatprep.subr.bf16.mxu0 0
    %2072 = vmatpush1.bf16.msra.mxu0 0
    %2073 = vmatprep.subr.bf16.mxu0 0
    %2074 = vmatpush1.bf16.msra.mxu0 0
    %2075 = vmatprep.mubr.bf16.mxu0 0
    %2076 = vmatmul.mubr.bf16.gmra.mrb[0].mxu0 %v2041
    %v2077 = vpop.f32.mrb[0].mxu0
    %v2078 = vadd.f32 0.0, %v2077
    %v2079 = vpop.f32.mrb[0].mxu0
    %v2080 = vpop.f32.mrb[0].mxu0
    %v2081 = vadd.f32 0.0, %v2080
    %v2082 = vpop.f32.mrb[0].mxu0
    %2083 = vdwg.mxu0
    %s2084 = scalar_lea.vmem [#allocation7], 8
    %v2085 = vld [vmem:[%s2084] sm:$0xf]
    %v2086 = vld [vmem:[%s2084 + $0x4] sm:$0xf]
    %v2089 = vunpack.c.l.b16 %v2085
    %v2090 = vunpack.c.l.b16 %v2086
    %v2091 = vpack.c.b16 %v2090, %v2089
    %v2093 = vsel %vm2039, %v2091, 0
    %2095 = vmatprep.subr.bf16.mxu0 0
    %2096 = vmatpush1.bf16.msra.mxu0 %v2030
    %2097 = vmatprep.subr.bf16.mxu0 0
    %2098 = vmatpush1.bf16.msra.mxu0 %v2031
    %2099 = vmatprep.subr.bf16.mxu0 0
    %2100 = vmatpush1.bf16.msra.mxu0 0
    %2101 = vmatprep.subr.bf16.mxu0 0
    %2102 = vmatpush1.bf16.msra.mxu0 0
    %2103 = vmatprep.subr.bf16.mxu0 0
    %2104 = vmatpush1.bf16.msra.mxu0 0
    %2105 = vmatprep.subr.bf16.mxu0 0
    %2106 = vmatpush1.bf16.msra.mxu0 0
    %2107 = vmatprep.subr.bf16.mxu0 0
    %2108 = vmatpush1.bf16.msra.mxu0 0
    %2109 = vmatprep.subr.bf16.mxu0 0
    %2110 = vmatpush1.bf16.msra.mxu0 0
    %2111 = vmatprep.subr.bf16.mxu0 0
    %2112 = vmatpush1.bf16.msra.mxu0 0
    %2113 = vmatprep.subr.bf16.mxu0 0
    %2114 = vmatpush1.bf16.msra.mxu0 0
    %2115 = vmatprep.subr.bf16.mxu0 0
    %2116 = vmatpush1.bf16.msra.mxu0 0
    %2117 = vmatprep.subr.bf16.mxu0 0
    %2118 = vmatpush1.bf16.msra.mxu0 0
    %2119 = vmatprep.subr.bf16.mxu0 0
    %2120 = vmatpush1.bf16.msra.mxu0 0
    %2121 = vmatprep.subr.bf16.mxu0 0
    %2122 = vmatpush1.bf16.msra.mxu0 0
    %2123 = vmatprep.subr.bf16.mxu0 0
    %2124 = vmatpush1.bf16.msra.mxu0 0
    %2125 = vmatprep.subr.bf16.mxu0 0
    %2126 = vmatpush1.bf16.msra.mxu0 0
    %2127 = vmatprep.mubr.bf16.mxu0 0
    %2128 = vmatmul.mubr.bf16.gmra.mrb[0].mxu0 %v2093
    %v2129 = vpop.f32.mrb[0].mxu0
    %v2130 = vadd.f32 0.0, %v2129
    %v2131 = vpop.f32.mrb[0].mxu0
    %v2132 = vpop.f32.mrb[0].mxu0
    %v2133 = vadd.f32 0.0, %v2132
    %v2134 = vpop.f32.mrb[0].mxu0
    %2135 = vdwg.mxu0
    %v2136 = vmax.f32 %v2078, %v2130
    %v2137 = vmax.f32 %v2081, %v2133
    %s2138 = scalar_lea.vmem [#allocation7], 16
    %v2139 = vld [vmem:[%s2138] sm:$0xf]
    %v2140 = vld [vmem:[%s2138 + $0x4] sm:$0xf]
    %v2143 = vunpack.c.l.b16 %v2139
    %v2144 = vunpack.c.l.b16 %v2140
    %v2145 = vpack.c.b16 %v2144, %v2143
    %v2147 = vsel %vm2039, %v2145, 0
    %2149 = vmatprep.subr.bf16.mxu0 0
    %2150 = vmatpush1.bf16.msra.mxu0 %v2030
    %2151 = vmatprep.subr.bf16.mxu0 0
    %2152 = vmatpush1.bf16.msra.mxu0 %v2031
    %2153 = vmatprep.subr.bf16.mxu0 0
    %2154 = vmatpush1.bf16.msra.mxu0 0
    %2155 = vmatprep.subr.bf16.mxu0 0
    %2156 = vmatpush1.bf16.msra.mxu0 0
    %2157 = vmatprep.subr.bf16.mxu0 0
    %2158 = vmatpush1.bf16.msra.mxu0 0
    %2159 = vmatprep.subr.bf16.mxu0 0
    %2160 = vmatpush1.bf16.msra.mxu0 0
    %2161 = vmatprep.subr.bf16.mxu0 0
    %2162 = vmatpush1.bf16.msra.mxu0 0
    %2163 = vmatprep.subr.bf16.mxu0 0
    %2164 = vmatpush1.bf16.msra.mxu0 0
    %2165 = vmatprep.subr.bf16.mxu0 0
    %2166 = vmatpush1.bf16.msra.mxu0 0
    %2167 = vmatprep.subr.bf16.mxu0 0
    %2168 = vmatpush1.bf16.msra.mxu0 0
    %2169 = vmatprep.subr.bf16.mxu0 0
    %2170 = vmatpush1.bf16.msra.mxu0 0
    %2171 = vmatprep.subr.bf16.mxu0 0
    %2172 = vmatpush1.bf16.msra.mxu0 0
    %2173 = vmatprep.subr.bf16.mxu0 0
    %2174 = vmatpush1.bf16.msra.mxu0 0
    %2175 = vmatprep.subr.bf16.mxu0 0
    %2176 = vmatpush1.bf16.msra.mxu0 0
    %2177 = vmatprep.subr.bf16.mxu0 0
    %2178 = vmatpush1.bf16.msra.mxu0 0
    %2179 = vmatprep.subr.bf16.mxu0 0
    %2180 = vmatpush1.bf16.msra.mxu0 0
    %2181 = vmatprep.mubr.bf16.mxu0 0
    %2182 = vmatmul.mubr.bf16.gmra.mrb[0].mxu0 %v2147
    %v2183 = vpop.f32.mrb[0].mxu0
    %v2184 = vadd.f32 0.0, %v2183
    %v2185 = vpop.f32.mrb[0].mxu0
    %v2186 = vpop.f32.mrb[0].mxu0
    %v2187 = vadd.f32 0.0, %v2186
    %v2188 = vpop.f32.mrb[0].mxu0
    %2189 = vdwg.mxu0
    %v2190 = vmax.f32 %v2136, %v2184
    %v2191 = vmax.f32 %v2137, %v2187
    %v2192 = vpack.c.bf16 %v2191, %v2190
    %v2193 = vld [vmem:[#allocation8] sm:$0xf]
    %v2194 = vld [vmem:[#allocation8 + $0x4] sm:$0xf]
    %v2197 = vunpack.c.l.b16 %v2193
    %v2198 = vunpack.c.l.b16 %v2194
    %v2199 = vpack.c.b16 %v2198, %v2197
    %vm2200 = vcmask 130048
    %v2202 = vsel %vm2200, %v2199, 0
    %2204 = vmatprep.subr.bf16.mxu0 0
    %2205 = vmatpush1.bf16.msra.mxu0 %v2192
    %2206 = vmatprep.subr.bf16.mxu0 0
    %2207 = vmatpush1.bf16.msra.mxu0 0
    %2208 = vmatprep.subr.bf16.mxu0 0
    %2209 = vmatpush1.bf16.msra.mxu0 0
    %2210 = vmatprep.subr.bf16.mxu0 0
    %2211 = vmatpush1.bf16.msra.mxu0 0
    %2212 = vmatprep.subr.bf16.mxu0 0
    %2213 = vmatpush1.bf16.msra.mxu0 0
    %2214 = vmatprep.subr.bf16.mxu0 0
    %2215 = vmatpush1.bf16.msra.mxu0 0
    %2216 = vmatprep.subr.bf16.mxu0 0
    %2217 = vmatpush1.bf16.msra.mxu0 0
    %2218 = vmatprep.subr.bf16.mxu0 0
    %2219 = vmatpush1.bf16.msra.mxu0 0
    %2220 = vmatprep.subr.bf16.mxu0 0
    %2221 = vmatpush1.bf16.msra.mxu0 0
    %2222 = vmatprep.subr.bf16.mxu0 0
    %2223 = vmatpush1.bf16.msra.mxu0 0
    %2224 = vmatprep.subr.bf16.mxu0 0
    %2225 = vmatpush1.bf16.msra.mxu0 0
    %2226 = vmatprep.subr.bf16.mxu0 0
    %2227 = vmatpush1.bf16.msra.mxu0 0
    %2228 = vmatprep.subr.bf16.mxu0 0
    %2229 = vmatpush1.bf16.msra.mxu0 0
    %2230 = vmatprep.subr.bf16.mxu0 0
    %2231 = vmatpush1.bf16.msra.mxu0 0
    %2232 = vmatprep.subr.bf16.mxu0 0
    %2233 = vmatpush1.bf16.msra.mxu0 0
    %2234 = vmatprep.subr.bf16.mxu0 0
    %2235 = vmatpush1.bf16.msra.mxu0 0
    %2236 = vmatprep.mubr.bf16.mxu0 0
    %2237 = vmatmul.mubr.bf16.gmra.mrb[0].mxu0 %v2202
    %v2238 = vpop.f32.mrb[0].mxu0
    %v2239 = vadd.f32 0.0, %v2238
    %v2240 = vpop.f32.mrb[0].mxu0
    %v2241 = vpop.f32.mrb[0].mxu0
    %v2242 = vadd.f32 0.0, %v2241
    %v2243 = vpop.f32.mrb[0].mxu0
    %2244 = vdwg.mxu0
    %v2245 = vpack.c.bf16 %v2242, %v2239
    %v2246 = vld [vmem:[%s7] sm:$0xf]
    %v2247 = vld [vmem:[%s7 + $0x4] sm:$0xf]
    %v2248 = vld [vmem:[%s7 + $0x8] sm:$0xf]
    %v2249 = vld [vmem:[%s7 + $0xc] sm:$0xf]
    %v2250 = vld [vmem:[%s7 + $0x10] sm:$0xf]
    %v2251 = vld [vmem:[%s7 + $0x14] sm:$0xf]
    %v2252 = vld [vmem:[%s7 + $0x18] sm:$0xf]
    %v2253 = vld [vmem:[%s7 + $0x1c] sm:$0xf]
    %s2254 = scalar_lea.vmem [#allocation8], 8
    %v2255 = vld [vmem:[%s2254] sm:$0xf]
    %v2256 = vld [vmem:[%s2254 + $0x4] sm:$0xf]
    %v2259 = vunpack.c.l.b16 %v2255
    %v2260 = vunpack.c.l.b16 %v2256
    %v2261 = vpack.c.b16 %v2260, %v2259
    %v2263 = vsel %vm2200, %v2261, 0
    %2265 = vmatprep.subr.bf16.mxu0 0
    %2266 = vmatpush1.bf16.msra.mxu0 %v2192
    %2267 = vmatprep.subr.bf16.mxu0 0
    %2268 = vmatpush1.bf16.msra.mxu0 0
    %2269 = vmatprep.subr.bf16.mxu0 0
    %2270 = vmatpush1.bf16.msra.mxu0 0
    %2271 = vmatprep.subr.bf16.mxu0 0
    %2272 = vmatpush1.bf16.msra.mxu0 0
    %2273 = vmatprep.subr.bf16.mxu0 0
    %2274 = vmatpush1.bf16.msra.mxu0 0
    %2275 = vmatprep.subr.bf16.mxu0 0
    %2276 = vmatpush1.bf16.msra.mxu0 0
    %2277 = vmatprep.subr.bf16.mxu0 0
    %2278 = vmatpush1.bf16.msra.mxu0 0
    %2279 = vmatprep.subr.bf16.mxu0 0
    %2280 = vmatpush1.bf16.msra.mxu0 0
    %2281 = vmatprep.subr.bf16.mxu0 0
    %2282 = vmatpush1.bf16.msra.mxu0 0
    %2283 = vmatprep.subr.bf16.mxu0 0
    %2284 = vmatpush1.bf16.msra.mxu0 0
    %2285 = vmatprep.subr.bf16.mxu0 0
    %2286 = vmatpush1.bf16.msra.mxu0 0
    %2287 = vmatprep.subr.bf16.mxu0 0
    %2288 = vmatpush1.bf16.msra.mxu0 0
    %2289 = vmatprep.subr.bf16.mxu0 0
    %2290 = vmatpush1.bf16.msra.mxu0 0
    %2291 = vmatprep.subr.bf16.mxu0 0
    %2292 = vmatpush1.bf16.msra.mxu0 0
    %2293 = vmatprep.subr.bf16.mxu0 0
    %2294 = vmatpush1.bf16.msra.mxu0 0
    %2295 = vmatprep.subr.bf16.mxu0 0
    %2296 = vmatpush1.bf16.msra.mxu0 0
    %2297 = vmatprep.mubr.bf16.mxu0 0
    %2298 = vmatmul.mubr.bf16.gmra.mrb[0].mxu0 %v2263
    %v2299 = vpop.f32.mrb[0].mxu0
    %v2300 = vadd.f32 0.0, %v2299
    %v2301 = vpop.f32.mrb[0].mxu0
    %v2302 = vpop.f32.mrb[0].mxu0
    %v2303 = vadd.f32 0.0, %v2302
    %v2304 = vpop.f32.mrb[0].mxu0
    %2305 = vdwg.mxu0
    %v2306 = vpack.c.bf16 %v2303, %v2300
    %s2307 = scalar_lea.vmem %s7, 32
    %v2308 = vld [vmem:[%s2307] sm:$0xf]
    %v2309 = vld [vmem:[%s2307 + $0x4] sm:$0xf]
    %v2310 = vld [vmem:[%s2307 + $0x8] sm:$0xf]
    %v2311 = vld [vmem:[%s2307 + $0xc] sm:$0xf]
    %v2312 = vld [vmem:[%s2307 + $0x10] sm:$0xf]
    %v2313 = vld [vmem:[%s2307 + $0x14] sm:$0xf]
    %v2314 = vld [vmem:[%s2307 + $0x18] sm:$0xf]
    %v2315 = vld [vmem:[%s2307 + $0x1c] sm:$0xf]
    %v2324 = vunpack.c.l.b16 %v2308
    %v2325 = vunpack.c.l.b16 %v2309
    %v2326 = vunpack.c.l.b16 %v2310
    %v2327 = vunpack.c.l.b16 %v2311
    %v2328 = vunpack.c.l.b16 %v2312
    %v2329 = vunpack.c.l.b16 %v2313
    %v2330 = vunpack.c.l.b16 %v2314
    %v2331 = vunpack.c.l.b16 %v2315
    %v2332 = vpack.c.b16 %v2325, %v2324
    %v2333 = vpack.c.b16 %v2327, %v2326
    %v2334 = vpack.c.b16 %v2329, %v2328
    %v2335 = vpack.c.b16 %v2331, %v2330
    %v2341 = vsel %vm357, %v2306, 0
    %2343 = vmatprep.subr.bf16.mxu0 0
    %2344 = vmatpush1.bf16.msra.mxu0 %v2332
    %2345 = vmatprep.subr.bf16.mxu0 0
    %2346 = vmatpush1.bf16.msra.mxu0 %v2333
    %2347 = vmatprep.subr.bf16.mxu0 0
    %2348 = vmatpush1.bf16.msra.mxu0 %v2334
    %2349 = vmatprep.subr.bf16.mxu0 0
    %2350 = vmatpush1.bf16.msra.mxu0 %v2335
    %2351 = vmatprep.subr.bf16.mxu0 0
    %2352 = vmatpush1.bf16.msra.mxu0 0
    %2353 = vmatprep.subr.bf16.mxu0 0
    %2354 = vmatpush1.bf16.msra.mxu0 0
    %2355 = vmatprep.subr.bf16.mxu0 0
    %2356 = vmatpush1.bf16.msra.mxu0 0
    %2357 = vmatprep.subr.bf16.mxu0 0
    %2358 = vmatpush1.bf16.msra.mxu0 0
    %2359 = vmatprep.subr.bf16.mxu0 0
    %2360 = vmatpush1.bf16.msra.mxu0 0
    %2361 = vmatprep.subr.bf16.mxu0 0
    %2362 = vmatpush1.bf16.msra.mxu0 0
    %2363 = vmatprep.subr.bf16.mxu0 0
    %2364 = vmatpush1.bf16.msra.mxu0 0
    %2365 = vmatprep.subr.bf16.mxu0 0
    %2366 = vmatpush1.bf16.msra.mxu0 0
    %2367 = vmatprep.subr.bf16.mxu0 0
    %2368 = vmatpush1.bf16.msra.mxu0 0
    %2369 = vmatprep.subr.bf16.mxu0 0
    %2370 = vmatpush1.bf16.msra.mxu0 0
    %2371 = vmatprep.subr.bf16.mxu0 0
    %2372 = vmatpush1.bf16.msra.mxu0 0
    %2373 = vmatprep.subr.bf16.mxu0 0
    %2374 = vmatpush1.bf16.msra.mxu0 0
    %2375 = vmatprep.mubr.bf16.mxu0 0
    %2376 = vmatmul.mubr.bf16.gmra.mrb[0].mxu0 %v2341
    %v2377 = vpop.f32.mrb[0].mxu0
    %v2378 = vadd.f32 0.0, %v2377
    %v2379 = vpop.f32.mrb[0].mxu0
    %v2380 = vpop.f32.mrb[0].mxu0
    %v2381 = vadd.f32 0.0, %v2380
    %v2382 = vpop.f32.mrb[0].mxu0
    %2383 = vdwg.mxu0
    %v2392 = vunpack.c.l.b16 %v2246
    %v2393 = vunpack.c.l.b16 %v2247
    %v2394 = vunpack.c.l.b16 %v2248
    %v2395 = vunpack.c.l.b16 %v2249
    %v2396 = vunpack.c.l.b16 %v2250
    %v2397 = vunpack.c.l.b16 %v2251
    %v2398 = vunpack.c.l.b16 %v2252
    %v2399 = vunpack.c.l.b16 %v2253
    %v2400 = vpack.c.b16 %v2393, %v2392
    %v2401 = vpack.c.b16 %v2395, %v2394
    %v2402 = vpack.c.b16 %v2397, %v2396
    %v2403 = vpack.c.b16 %v2399, %v2398
    %v2409 = vsel %vm357, %v2245, 0
    %2411 = vmatprep.subr.bf16.mxu0 0
    %2412 = vmatpush1.bf16.msra.mxu0 %v2400
    %2413 = vmatprep.subr.bf16.mxu0 0
    %2414 = vmatpush1.bf16.msra.mxu0 %v2401
    %2415 = vmatprep.subr.bf16.mxu0 0
    %2416 = vmatpush1.bf16.msra.mxu0 %v2402
    %2417 = vmatprep.subr.bf16.mxu0 0
    %2418 = vmatpush1.bf16.msra.mxu0 %v2403
    %2419 = vmatprep.subr.bf16.mxu0 0
    %2420 = vmatpush1.bf16.msra.mxu0 0
    %2421 = vmatprep.subr.bf16.mxu0 0
    %2422 = vmatpush1.bf16.msra.mxu0 0
    %2423 = vmatprep.subr.bf16.mxu0 0
    %2424 = vmatpush1.bf16.msra.mxu0 0
    %2425 = vmatprep.subr.bf16.mxu0 0
    %2426 = vmatpush1.bf16.msra.mxu0 0
    %2427 = vmatprep.subr.bf16.mxu0 0
    %2428 = vmatpush1.bf16.msra.mxu0 0
    %2429 = vmatprep.subr.bf16.mxu0 0
    %2430 = vmatpush1.bf16.msra.mxu0 0
    %2431 = vmatprep.subr.bf16.mxu0 0
    %2432 = vmatpush1.bf16.msra.mxu0 0
    %2433 = vmatprep.subr.bf16.mxu0 0
    %2434 = vmatpush1.bf16.msra.mxu0 0
    %2435 = vmatprep.subr.bf16.mxu0 0
    %2436 = vmatpush1.bf16.msra.mxu0 0
    %2437 = vmatprep.subr.bf16.mxu0 0
    %2438 = vmatpush1.bf16.msra.mxu0 0
    %2439 = vmatprep.subr.bf16.mxu0 0
    %2440 = vmatpush1.bf16.msra.mxu0 0
    %2441 = vmatprep.subr.bf16.mxu0 0
    %2442 = vmatpush1.bf16.msra.mxu0 0
    %2443 = vmatprep.mubr.bf16.mxu0 0
    %2444 = vmatmul.mubr.bf16.gmra.mrb[0].mxu0 %v2409
    %v2445 = vpop.f32.mrb[0].mxu0
    %v2446 = vadd.f32 %v2378, %v2445
    %v2447 = vpop.f32.mrb[0].mxu0
    %v2448 = vpop.f32.mrb[0].mxu0
    %v2449 = vadd.f32 %v2381, %v2448
    %v2450 = vpop.f32.mrb[0].mxu0
    %2451 = vdwg.mxu0
    %s2452 = scalar_lea.vmem [#allocation8], 16
    %v2453 = vld [vmem:[%s2452] sm:$0xf]
    %v2454 = vld [vmem:[%s2452 + $0x4] sm:$0xf]
    %v2457 = vunpack.c.l.b16 %v2453
    %v2458 = vunpack.c.l.b16 %v2454
    %v2459 = vpack.c.b16 %v2458, %v2457
    %v2461 = vsel %vm2200, %v2459, 0
    %2463 = vmatprep.subr.bf16.mxu0 0
    %2464 = vmatpush1.bf16.msra.mxu0 %v2192
    %2465 = vmatprep.subr.bf16.mxu0 0
    %2466 = vmatpush1.bf16.msra.mxu0 0
    %2467 = vmatprep.subr.bf16.mxu0 0
    %2468 = vmatpush1.bf16.msra.mxu0 0
    %2469 = vmatprep.subr.bf16.mxu0 0
    %2470 = vmatpush1.bf16.msra.mxu0 0
    %2471 = vmatprep.subr.bf16.mxu0 0
    %2472 = vmatpush1.bf16.msra.mxu0 0
    %2473 = vmatprep.subr.bf16.mxu0 0
    %2474 = vmatpush1.bf16.msra.mxu0 0
    %2475 = vmatprep.subr.bf16.mxu0 0
    %2476 = vmatpush1.bf16.msra.mxu0 0
    %2477 = vmatprep.subr.bf16.mxu0 0
    %2478 = vmatpush1.bf16.msra.mxu0 0
    %2479 = vmatprep.subr.bf16.mxu0 0
    %2480 = vmatpush1.bf16.msra.mxu0 0
    %2481 = vmatprep.subr.bf16.mxu0 0
    %2482 = vmatpush1.bf16.msra.mxu0 0
    %2483 = vmatprep.subr.bf16.mxu0 0
    %2484 = vmatpush1.bf16.msra.mxu0 0
    %2485 = vmatprep.subr.bf16.mxu0 0
    %2486 = vmatpush1.bf16.msra.mxu0 0
    %2487 = vmatprep.subr.bf16.mxu0 0
    %2488 = vmatpush1.bf16.msra.mxu0 0
    %2489 = vmatprep.subr.bf16.mxu0 0
    %2490 = vmatpush1.bf16.msra.mxu0 0
    %2491 = vmatprep.subr.bf16.mxu0 0
    %2492 = vmatpush1.bf16.msra.mxu0 0
    %2493 = vmatprep.subr.bf16.mxu0 0
    %2494 = vmatpush1.bf16.msra.mxu0 0
    %2495 = vmatprep.mubr.bf16.mxu0 0
    %2496 = vmatmul.mubr.bf16.gmra.mrb[0].mxu0 %v2461
    %v2497 = vpop.f32.mrb[0].mxu0
    %v2498 = vadd.f32 0.0, %v2497
    %v2499 = vpop.f32.mrb[0].mxu0
    %v2500 = vpop.f32.mrb[0].mxu0
    %v2501 = vadd.f32 0.0, %v2500
    %v2502 = vpop.f32.mrb[0].mxu0
    %2503 = vdwg.mxu0
    %v2504 = vpack.c.bf16 %v2501, %v2498
    %s2505 = scalar_lea.vmem %s7, 64
    %v2506 = vld [vmem:[%s2505] sm:$0xf]
    %v2507 = vld [vmem:[%s2505 + $0x4] sm:$0xf]
    %v2508 = vld [vmem:[%s2505 + $0x8] sm:$0xf]
    %v2509 = vld [vmem:[%s2505 + $0xc] sm:$0xf]
    %v2510 = vld [vmem:[%s2505 + $0x10] sm:$0xf]
    %v2511 = vld [vmem:[%s2505 + $0x14] sm:$0xf]
    %v2512 = vld [vmem:[%s2505 + $0x18] sm:$0xf]
    %v2513 = vld [vmem:[%s2505 + $0x1c] sm:$0xf]
    %v2522 = vunpack.c.l.b16 %v2506
    %v2523 = vunpack.c.l.b16 %v2507
    %v2524 = vunpack.c.l.b16 %v2508
    %v2525 = vunpack.c.l.b16 %v2509
    %v2526 = vunpack.c.l.b16 %v2510
    %v2527 = vunpack.c.l.b16 %v2511
    %v2528 = vunpack.c.l.b16 %v2512
    %v2529 = vunpack.c.l.b16 %v2513
    %v2530 = vpack.c.b16 %v2523, %v2522
    %v2531 = vpack.c.b16 %v2525, %v2524
    %v2532 = vpack.c.b16 %v2527, %v2526
    %v2533 = vpack.c.b16 %v2529, %v2528
    %v2539 = vsel %vm357, %v2504, 0
    %2541 = vmatprep.subr.bf16.mxu0 0
    %2542 = vmatpush1.bf16.msra.mxu0 %v2530
    %2543 = vmatprep.subr.bf16.mxu0 0
    %2544 = vmatpush1.bf16.msra.mxu0 %v2531
    %2545 = vmatprep.subr.bf16.mxu0 0
    %2546 = vmatpush1.bf16.msra.mxu0 %v2532
    %2547 = vmatprep.subr.bf16.mxu0 0
    %2548 = vmatpush1.bf16.msra.mxu0 %v2533
    %2549 = vmatprep.subr.bf16.mxu0 0
    %2550 = vmatpush1.bf16.msra.mxu0 0
    %2551 = vmatprep.subr.bf16.mxu0 0
    %2552 = vmatpush1.bf16.msra.mxu0 0
    %2553 = vmatprep.subr.bf16.mxu0 0
    %2554 = vmatpush1.bf16.msra.mxu0 0
    %2555 = vmatprep.subr.bf16.mxu0 0
    %2556 = vmatpush1.bf16.msra.mxu0 0
    %2557 = vmatprep.subr.bf16.mxu0 0
    %2558 = vmatpush1.bf16.msra.mxu0 0
    %2559 = vmatprep.subr.bf16.mxu0 0
    %2560 = vmatpush1.bf16.msra.mxu0 0
    %2561 = vmatprep.subr.bf16.mxu0 0
    %2562 = vmatpush1.bf16.msra.mxu0 0
    %2563 = vmatprep.subr.bf16.mxu0 0
    %2564 = vmatpush1.bf16.msra.mxu0 0
    %2565 = vmatprep.subr.bf16.mxu0 0
    %2566 = vmatpush1.bf16.msra.mxu0 0
    %2567 = vmatprep.subr.bf16.mxu0 0
    %2568 = vmatpush1.bf16.msra.mxu0 0
    %2569 = vmatprep.subr.bf16.mxu0 0
    %2570 = vmatpush1.bf16.msra.mxu0 0
    %2571 = vmatprep.subr.bf16.mxu0 0
    %2572 = vmatpush1.bf16.msra.mxu0 0
    %2573 = vmatprep.mubr.bf16.mxu0 0
    %2574 = vmatmul.mubr.bf16.gmra.mrb[0].mxu0 %v2539
    %v2575 = vpop.f32.mrb[0].mxu0
    %v2576 = vadd.f32 0.0, %v2575
    %v2577 = vpop.f32.mrb[0].mxu0
    %v2578 = vpop.f32.mrb[0].mxu0
    %v2579 = vadd.f32 0.0, %v2578
    %v2580 = vpop.f32.mrb[0].mxu0
    %2581 = vdwg.mxu0
    %v2582 = vadd.f32 %v2446, %v2576
    %v2583 = vadd.f32 %v2449, %v2579
    %s2584 = scalar_lea.vmem [#allocation8], 24
    %v2585 = vld [vmem:[%s2584] sm:$0xf]
    %v2586 = vld [vmem:[%s2584 + $0x4] sm:$0xf]
    %v2589 = vunpack.c.l.b16 %v2585
    %v2590 = vunpack.c.l.b16 %v2586
    %v2591 = vpack.c.b16 %v2590, %v2589
    %v2593 = vsel %vm2200, %v2591, 0
    %2595 = vmatprep.subr.bf16.mxu0 0
    %2596 = vmatpush1.bf16.msra.mxu0 %v2192
    %2597 = vmatprep.subr.bf16.mxu0 0
    %2598 = vmatpush1.bf16.msra.mxu0 0
    %2599 = vmatprep.subr.bf16.mxu0 0
    %2600 = vmatpush1.bf16.msra.mxu0 0
    %2601 = vmatprep.subr.bf16.mxu0 0
    %2602 = vmatpush1.bf16.msra.mxu0 0
    %2603 = vmatprep.subr.bf16.mxu0 0
    %2604 = vmatpush1.bf16.msra.mxu0 0
    %2605 = vmatprep.subr.bf16.mxu0 0
    %2606 = vmatpush1.bf16.msra.mxu0 0
    %2607 = vmatprep.subr.bf16.mxu0 0
    %2608 = vmatpush1.bf16.msra.mxu0 0
    %2609 = vmatprep.subr.bf16.mxu0 0
    %2610 = vmatpush1.bf16.msra.mxu0 0
    %2611 = vmatprep.subr.bf16.mxu0 0
    %2612 = vmatpush1.bf16.msra.mxu0 0
    %2613 = vmatprep.subr.bf16.mxu0 0
    %2614 = vmatpush1.bf16.msra.mxu0 0
    %2615 = vmatprep.subr.bf16.mxu0 0
    %2616 = vmatpush1.bf16.msra.mxu0 0
    %2617 = vmatprep.subr.bf16.mxu0 0
    %2618 = vmatpush1.bf16.msra.mxu0 0
    %2619 = vmatprep.subr.bf16.mxu0 0
    %2620 = vmatpush1.bf16.msra.mxu0 0
    %2621 = vmatprep.subr.bf16.mxu0 0
    %2622 = vmatpush1.bf16.msra.mxu0 0
    %2623 = vmatprep.subr.bf16.mxu0 0
    %2624 = vmatpush1.bf16.msra.mxu0 0
    %2625 = vmatprep.subr.bf16.mxu0 0
    %2626 = vmatpush1.bf16.msra.mxu0 0
    %2627 = vmatprep.mubr.bf16.mxu0 0
    %2628 = vmatmul.mubr.bf16.gmra.mrb[0].mxu0 %v2593
    %v2629 = vpop.f32.mrb[0].mxu0
    %v2630 = vadd.f32 0.0, %v2629
    %v2631 = vpop.f32.mrb[0].mxu0
    %v2632 = vpop.f32.mrb[0].mxu0
    %v2633 = vadd.f32 0.0, %v2632
    %v2634 = vpop.f32.mrb[0].mxu0
    %2635 = vdwg.mxu0
    %v2636 = vpack.c.bf16 %v2633, %v2630
    %s2637 = scalar_lea.vmem %s7, 96
    %v2638 = vld [vmem:[%s2637] sm:$0xf]
    %v2639 = vld [vmem:[%s2637 + $0x4] sm:$0xf]
    %v2640 = vld [vmem:[%s2637 + $0x8] sm:$0xf]
    %v2641 = vld [vmem:[%s2637 + $0xc] sm:$0xf]
    %v2642 = vld [vmem:[%s2637 + $0x10] sm:$0xf]
    %v2643 = vld [vmem:[%s2637 + $0x14] sm:$0xf]
    %v2644 = vld [vmem:[%s2637 + $0x18] sm:$0xf]
    %v2645 = vld [vmem:[%s2637 + $0x1c] sm:$0xf]
    %v2654 = vunpack.c.l.b16 %v2638
    %v2655 = vunpack.c.l.b16 %v2639
    %v2656 = vunpack.c.l.b16 %v2640
    %v2657 = vunpack.c.l.b16 %v2641
    %v2658 = vunpack.c.l.b16 %v2642
    %v2659 = vunpack.c.l.b16 %v2643
    %v2660 = vunpack.c.l.b16 %v2644
    %v2661 = vunpack.c.l.b16 %v2645
    %v2662 = vpack.c.b16 %v2655, %v2654
    %v2663 = vpack.c.b16 %v2657, %v2656
    %v2664 = vpack.c.b16 %v2659, %v2658
    %v2665 = vpack.c.b16 %v2661, %v2660
    %v2671 = vsel %vm357, %v2636, 0
    %2673 = vmatprep.subr.bf16.mxu0 0
    %2674 = vmatpush1.bf16.msra.mxu0 %v2662
    %2675 = vmatprep.subr.bf16.mxu0 0
    %2676 = vmatpush1.bf16.msra.mxu0 %v2663
    %2677 = vmatprep.subr.bf16.mxu0 0
    %2678 = vmatpush1.bf16.msra.mxu0 %v2664
    %2679 = vmatprep.subr.bf16.mxu0 0
    %2680 = vmatpush1.bf16.msra.mxu0 %v2665
    %2681 = vmatprep.subr.bf16.mxu0 0
    %2682 = vmatpush1.bf16.msra.mxu0 0
    %2683 = vmatprep.subr.bf16.mxu0 0
    %2684 = vmatpush1.bf16.msra.mxu0 0
    %2685 = vmatprep.subr.bf16.mxu0 0
    %2686 = vmatpush1.bf16.msra.mxu0 0
    %2687 = vmatprep.subr.bf16.mxu0 0
    %2688 = vmatpush1.bf16.msra.mxu0 0
    %2689 = vmatprep.subr.bf16.mxu0 0
    %2690 = vmatpush1.bf16.msra.mxu0 0
    %2691 = vmatprep.subr.bf16.mxu0 0
    %2692 = vmatpush1.bf16.msra.mxu0 0
    %2693 = vmatprep.subr.bf16.mxu0 0
    %2694 = vmatpush1.bf16.msra.mxu0 0
    %2695 = vmatprep.subr.bf16.mxu0 0
    %2696 = vmatpush1.bf16.msra.mxu0 0
    %2697 = vmatprep.subr.bf16.mxu0 0
    %2698 = vmatpush1.bf16.msra.mxu0 0
    %2699 = vmatprep.subr.bf16.mxu0 0
    %2700 = vmatpush1.bf16.msra.mxu0 0
    %2701 = vmatprep.subr.bf16.mxu0 0
    %2702 = vmatpush1.bf16.msra.mxu0 0
    %2703 = vmatprep.subr.bf16.mxu0 0
    %2704 = vmatpush1.bf16.msra.mxu0 0
    %2705 = vmatprep.mubr.bf16.mxu0 0
    %2706 = vmatmul.mubr.bf16.gmra.mrb[0].mxu0 %v2671
    %v2707 = vpop.f32.mrb[0].mxu0
    %v2708 = vadd.f32 0.0, %v2707
    %v2709 = vpop.f32.mrb[0].mxu0
    %v2710 = vpop.f32.mrb[0].mxu0
    %v2711 = vadd.f32 0.0, %v2710
    %v2712 = vpop.f32.mrb[0].mxu0
    %2713 = vdwg.mxu0
    %v2714 = vadd.f32 %v2582, %v2708
    %v2715 = vadd.f32 %v2583, %v2711
    %s2716 = scalar_lea.vmem [#allocation8], 32
    %v2717 = vld [vmem:[%s2716] sm:$0xf]
    %v2718 = vld [vmem:[%s2716 + $0x4] sm:$0xf]
    %v2721 = vunpack.c.l.b16 %v2717
    %v2722 = vunpack.c.l.b16 %v2718
    %v2723 = vpack.c.b16 %v2722, %v2721
    %v2725 = vsel %vm2200, %v2723, 0
    %2727 = vmatprep.subr.bf16.mxu0 0
    %2728 = vmatpush1.bf16.msra.mxu0 %v2192
    %2729 = vmatprep.subr.bf16.mxu0 0
    %2730 = vmatpush1.bf16.msra.mxu0 0
    %2731 = vmatprep.subr.bf16.mxu0 0
    %2732 = vmatpush1.bf16.msra.mxu0 0
    %2733 = vmatprep.subr.bf16.mxu0 0
    %2734 = vmatpush1.bf16.msra.mxu0 0
    %2735 = vmatprep.subr.bf16.mxu0 0
    %2736 = vmatpush1.bf16.msra.mxu0 0
    %2737 = vmatprep.subr.bf16.mxu0 0
    %2738 = vmatpush1.bf16.msra.mxu0 0
    %2739 = vmatprep.subr.bf16.mxu0 0
    %2740 = vmatpush1.bf16.msra.mxu0 0
    %2741 = vmatprep.subr.bf16.mxu0 0
    %2742 = vmatpush1.bf16.msra.mxu0 0
    %2743 = vmatprep.subr.bf16.mxu0 0
    %2744 = vmatpush1.bf16.msra.mxu0 0
    %2745 = vmatprep.subr.bf16.mxu0 0
    %2746 = vmatpush1.bf16.msra.mxu0 0
    %2747 = vmatprep.subr.bf16.mxu0 0
    %2748 = vmatpush1.bf16.msra.mxu0 0
    %2749 = vmatprep.subr.bf16.mxu0 0
    %2750 = vmatpush1.bf16.msra.mxu0 0
    %2751 = vmatprep.subr.bf16.mxu0 0
    %2752 = vmatpush1.bf16.msra.mxu0 0
    %2753 = vmatprep.subr.bf16.mxu0 0
    %2754 = vmatpush1.bf16.msra.mxu0 0
    %2755 = vmatprep.subr.bf16.mxu0 0
    %2756 = vmatpush1.bf16.msra.mxu0 0
    %2757 = vmatprep.subr.bf16.mxu0 0
    %2758 = vmatpush1.bf16.msra.mxu0 0
    %2759 = vmatprep.mubr.bf16.mxu0 0
    %2760 = vmatmul.mubr.bf16.gmra.mrb[0].mxu0 %v2725
    %v2761 = vpop.f32.mrb[0].mxu0
    %v2762 = vadd.f32 0.0, %v2761
    %v2763 = vpop.f32.mrb[0].mxu0
    %v2764 = vpop.f32.mrb[0].mxu0
    %v2765 = vadd.f32 0.0, %v2764
    %v2766 = vpop.f32.mrb[0].mxu0
    %2767 = vdwg.mxu0
    %v2768 = vpack.c.bf16 %v2765, %v2762
    %s2769 = scalar_lea.vmem %s7, 128
    %v2770 = vld [vmem:[%s2769] sm:$0xf]
    %v2771 = vld [vmem:[%s2769 + $0x4] sm:$0xf]
    %v2772 = vld [vmem:[%s2769 + $0x8] sm:$0xf]
    %v2773 = vld [vmem:[%s2769 + $0xc] sm:$0xf]
    %v2774 = vld [vmem:[%s2769 + $0x10] sm:$0xf]
    %v2775 = vld [vmem:[%s2769 + $0x14] sm:$0xf]
    %v2776 = vld [vmem:[%s2769 + $0x18] sm:$0xf]
    %v2777 = vld [vmem:[%s2769 + $0x1c] sm:$0xf]
    %v2786 = vunpack.c.l.b16 %v2770
    %v2787 = vunpack.c.l.b16 %v2771
    %v2788 = vunpack.c.l.b16 %v2772
    %v2789 = vunpack.c.l.b16 %v2773
    %v2790 = vunpack.c.l.b16 %v2774
    %v2791 = vunpack.c.l.b16 %v2775
    %v2792 = vunpack.c.l.b16 %v2776
    %v2793 = vunpack.c.l.b16 %v2777
    %v2794 = vpack.c.b16 %v2787, %v2786
    %v2795 = vpack.c.b16 %v2789, %v2788
    %v2796 = vpack.c.b16 %v2791, %v2790
    %v2797 = vpack.c.b16 %v2793, %v2792
    %v2803 = vsel %vm357, %v2768, 0
    %2805 = vmatprep.subr.bf16.mxu0 0
    %2806 = vmatpush1.bf16.msra.mxu0 %v2794
    %2807 = vmatprep.subr.bf16.mxu0 0
    %2808 = vmatpush1.bf16.msra.mxu0 %v2795
    %2809 = vmatprep.subr.bf16.mxu0 0
    %2810 = vmatpush1.bf16.msra.mxu0 %v2796
    %2811 = vmatprep.subr.bf16.mxu0 0
    %2812 = vmatpush1.bf16.msra.mxu0 %v2797
    %2813 = vmatprep.subr.bf16.mxu0 0
    %2814 = vmatpush1.bf16.msra.mxu0 0
    %2815 = vmatprep.subr.bf16.mxu0 0
    %2816 = vmatpush1.bf16.msra.mxu0 0
    %2817 = vmatprep.subr.bf16.mxu0 0
    %2818 = vmatpush1.bf16.msra.mxu0 0
    %2819 = vmatprep.subr.bf16.mxu0 0
    %2820 = vmatpush1.bf16.msra.mxu0 0
    %2821 = vmatprep.subr.bf16.mxu0 0
    %2822 = vmatpush1.bf16.msra.mxu0 0
    %2823 = vmatprep.subr.bf16.mxu0 0
    %2824 = vmatpush1.bf16.msra.mxu0 0
    %2825 = vmatprep.subr.bf16.mxu0 0
    %2826 = vmatpush1.bf16.msra.mxu0 0
    %2827 = vmatprep.subr.bf16.mxu0 0
    %2828 = vmatpush1.bf16.msra.mxu0 0
    %2829 = vmatprep.subr.bf16.mxu0 0
    %2830 = vmatpush1.bf16.msra.mxu0 0
    %2831 = vmatprep.subr.bf16.mxu0 0
    %2832 = vmatpush1.bf16.msra.mxu0 0
    %2833 = vmatprep.subr.bf16.mxu0 0
    %2834 = vmatpush1.bf16.msra.mxu0 0
    %2835 = vmatprep.subr.bf16.mxu0 0
    %2836 = vmatpush1.bf16.msra.mxu0 0
    %2837 = vmatprep.mubr.bf16.mxu0 0
    %2838 = vmatmul.mubr.bf16.gmra.mrb[0].mxu0 %v2803
    %v2839 = vpop.f32.mrb[0].mxu0
    %v2840 = vadd.f32 0.0, %v2839
    %v2841 = vpop.f32.mrb[0].mxu0
    %v2842 = vpop.f32.mrb[0].mxu0
    %v2843 = vadd.f32 0.0, %v2842
    %v2844 = vpop.f32.mrb[0].mxu0
    %2845 = vdwg.mxu0
    %v2846 = vadd.f32 %v2714, %v2840
    %v2847 = vadd.f32 %v2715, %v2843
    %v2848 = vld [vmem:[#allocation10] sm:$0x1]
    %v2850 = vlaneseq
    %v2851 = vshrl.u32 %v2850, 7
    %v2852 = vsub.s32 0, %v2851
    %v2853 = vrot.slane %v2848, %v2852
    %v2855 = vadd.f32 %v2846, %v2853
    %v2856 = vadd.f32 %v2847, %v2853
    %v2857 = vmax.f32 %v2855, 0.0
    %v2858 = vmax.f32 %v2856, 0.0
    %v2859 = vpack.c.bf16 %v2858, %v2857
    %v2860 = vld [vmem:[%s9] sm:$0xf]
    %v2861 = vld [vmem:[%s9 + $0x4] sm:$0xf]
    %v2862 = vld [vmem:[%s9 + $0x8] sm:$0xf]
    %v2863 = vld [vmem:[%s9 + $0xc] sm:$0xf]
    %v2864 = vld [vmem:[%s9 + $0x10] sm:$0xf]
    %v2865 = vld [vmem:[%s9 + $0x14] sm:$0xf]
    %v2866 = vld [vmem:[%s9 + $0x18] sm:$0xf]
    %v2867 = vld [vmem:[%s9 + $0x1c] sm:$0xf]
    %v2868 = vld [vmem:[%s9 + $0x20] sm:$0xf]
    %v2869 = vld [vmem:[%s9 + $0x24] sm:$0xf]
    %v2870 = vld [vmem:[%s9 + $0x28] sm:$0xf]
    %v2871 = vld [vmem:[%s9 + $0x2c] sm:$0xf]
    %v2872 = vld [vmem:[%s9 + $0x30] sm:$0xf]
    %v2873 = vld [vmem:[%s9 + $0x34] sm:$0xf]
    %v2874 = vld [vmem:[%s9 + $0x38] sm:$0xf]
    %v2875 = vld [vmem:[%s9 + $0x3c] sm:$0xf]
    %v2892 = vunpack.c.l.b16 %v2860
    %v2893 = vunpack.c.l.b16 %v2861
    %v2894 = vunpack.c.l.b16 %v2862
    %v2895 = vunpack.c.l.b16 %v2863
    %v2896 = vunpack.c.l.b16 %v2864
    %v2897 = vunpack.c.l.b16 %v2865
    %v2898 = vunpack.c.l.b16 %v2866
    %v2899 = vunpack.c.l.b16 %v2867
    %v2900 = vunpack.c.l.b16 %v2868
    %v2901 = vunpack.c.l.b16 %v2869
    %v2902 = vunpack.c.l.b16 %v2870
    %v2903 = vunpack.c.l.b16 %v2871
    %v2904 = vunpack.c.l.b16 %v2872
    %v2905 = vunpack.c.l.b16 %v2873
    %v2906 = vunpack.c.l.b16 %v2874
    %v2907 = vunpack.c.l.b16 %v2875
    %v2908 = vpack.c.b16 %v2893, %v2892
    %v2909 = vpack.c.b16 %v2895, %v2894
    %v2910 = vpack.c.b16 %v2897, %v2896
    %v2911 = vpack.c.b16 %v2899, %v2898
    %v2912 = vpack.c.b16 %v2901, %v2900
    %v2913 = vpack.c.b16 %v2903, %v2902
    %v2914 = vpack.c.b16 %v2905, %v2904
    %v2915 = vpack.c.b16 %v2907, %v2906
    %2924 = vmatprep.subr.bf16.mxu0 0
    %2925 = vmatpush1.bf16.msra.mxu0 %v2908
    %2926 = vmatprep.subr.bf16.mxu0 0
    %2927 = vmatpush1.bf16.msra.mxu0 %v2909
    %2928 = vmatprep.subr.bf16.mxu0 0
    %2929 = vmatpush1.bf16.msra.mxu0 %v2910
    %2930 = vmatprep.subr.bf16.mxu0 0
    %2931 = vmatpush1.bf16.msra.mxu0 %v2911
    %2932 = vmatprep.subr.bf16.mxu0 0
    %2933 = vmatpush1.bf16.msra.mxu0 %v2912
    %2934 = vmatprep.subr.bf16.mxu0 0
    %2935 = vmatpush1.bf16.msra.mxu0 %v2913
    %2936 = vmatprep.subr.bf16.mxu0 0
    %2937 = vmatpush1.bf16.msra.mxu0 %v2914
    %2938 = vmatprep.subr.bf16.mxu0 0
    %2939 = vmatpush1.bf16.msra.mxu0 %v2915
    %2940 = vmatprep.subr.bf16.mxu0 0
    %2941 = vmatpush1.bf16.msra.mxu0 0
    %2942 = vmatprep.subr.bf16.mxu0 0
    %2943 = vmatpush1.bf16.msra.mxu0 0
    %2944 = vmatprep.subr.bf16.mxu0 0
    %2945 = vmatpush1.bf16.msra.mxu0 0
    %2946 = vmatprep.subr.bf16.mxu0 0
    %2947 = vmatpush1.bf16.msra.mxu0 0
    %2948 = vmatprep.subr.bf16.mxu0 0
    %2949 = vmatpush1.bf16.msra.mxu0 0
    %2950 = vmatprep.subr.bf16.mxu0 0
    %2951 = vmatpush1.bf16.msra.mxu0 0
    %2952 = vmatprep.subr.bf16.mxu0 0
    %2953 = vmatpush1.bf16.msra.mxu0 0
    %2954 = vmatprep.subr.bf16.mxu0 0
    %2955 = vmatpush1.bf16.msra.mxu0 0
    %2956 = vmatprep.mubr.bf16.mxu0 0
    %2957 = vmatmul.mubr.bf16.gmra.mrb[0].mxu0 %v2859
    %v2958 = vpop.f32.mrb[0].mxu0
    %v2959 = vadd.f32 0.0, %v2958
    %v2960 = vpop.f32.mrb[0].mxu0
    %v2961 = vpop.f32.mrb[0].mxu0
    %v2962 = vadd.f32 0.0, %v2961
    %v2963 = vpop.f32.mrb[0].mxu0
    %2964 = vdwg.mxu0
    %s2965 = scalar_lea.vmem %s9, 64
    %v2966 = vld [vmem:[%s2965] sm:$0xf]
    %v2967 = vld [vmem:[%s2965 + $0x4] sm:$0xf]
    %v2968 = vld [vmem:[%s2965 + $0x8] sm:$0xf]
    %v2969 = vld [vmem:[%s2965 + $0xc] sm:$0xf]
    %v2970 = vld [vmem:[%s2965 + $0x10] sm:$0xf]
    %v2971 = vld [vmem:[%s2965 + $0x14] sm:$0xf]
    %v2972 = vld [vmem:[%s2965 + $0x18] sm:$0xf]
    %v2973 = vld [vmem:[%s2965 + $0x1c] sm:$0xf]
    %v2974 = vld [vmem:[%s2965 + $0x20] sm:$0xf]
    %v2975 = vld [vmem:[%s2965 + $0x24] sm:$0xf]
    %v2976 = vld [vmem:[%s2965 + $0x28] sm:$0xf]
    %v2977 = vld [vmem:[%s2965 + $0x2c] sm:$0xf]
    %v2978 = vld [vmem:[%s2965 + $0x30] sm:$0xf]
    %v2979 = vld [vmem:[%s2965 + $0x34] sm:$0xf]
    %v2980 = vld [vmem:[%s2965 + $0x38] sm:$0xf]
    %v2981 = vld [vmem:[%s2965 + $0x3c] sm:$0xf]
    %v2998 = vunpack.c.l.b16 %v2966
    %v2999 = vunpack.c.l.b16 %v2967
    %v3000 = vunpack.c.l.b16 %v2968
    %v3001 = vunpack.c.l.b16 %v2969
    %v3002 = vunpack.c.l.b16 %v2970
    %v3003 = vunpack.c.l.b16 %v2971
    %v3004 = vunpack.c.l.b16 %v2972
    %v3005 = vunpack.c.l.b16 %v2973
    %v3006 = vunpack.c.l.b16 %v2974
    %v3007 = vunpack.c.l.b16 %v2975
    %v3008 = vunpack.c.l.b16 %v2976
    %v3009 = vunpack.c.l.b16 %v2977
    %v3010 = vunpack.c.l.b16 %v2978
    %v3011 = vunpack.c.l.b16 %v2979
    %v3012 = vunpack.c.l.b16 %v2980
    %v3013 = vunpack.c.l.b16 %v2981
    %v3014 = vpack.c.b16 %v2999, %v2998
    %v3015 = vpack.c.b16 %v3001, %v3000
    %v3016 = vpack.c.b16 %v3003, %v3002
    %v3017 = vpack.c.b16 %v3005, %v3004
    %v3018 = vpack.c.b16 %v3007, %v3006
    %v3019 = vpack.c.b16 %v3009, %v3008
    %v3020 = vpack.c.b16 %v3011, %v3010
    %v3021 = vpack.c.b16 %v3013, %v3012
    %3030 = vmatprep.subr.bf16.mxu0 0
    %3031 = vmatpush1.bf16.msra.mxu0 %v3014
    %3032 = vmatprep.subr.bf16.mxu0 0
    %3033 = vmatpush1.bf16.msra.mxu0 %v3015
    %3034 = vmatprep.subr.bf16.mxu0 0
    %3035 = vmatpush1.bf16.msra.mxu0 %v3016
    %3036 = vmatprep.subr.bf16.mxu0 0
    %3037 = vmatpush1.bf16.msra.mxu0 %v3017
    %3038 = vmatprep.subr.bf16.mxu0 0
    %3039 = vmatpush1.bf16.msra.mxu0 %v3018
    %3040 = vmatprep.subr.bf16.mxu0 0
    %3041 = vmatpush1.bf16.msra.mxu0 %v3019
    %3042 = vmatprep.subr.bf16.mxu0 0
    %3043 = vmatpush1.bf16.msra.mxu0 %v3020
    %3044 = vmatprep.subr.bf16.mxu0 0
    %3045 = vmatpush1.bf16.msra.mxu0 %v3021
    %3046 = vmatprep.subr.bf16.mxu0 0
    %3047 = vmatpush1.bf16.msra.mxu0 0
    %3048 = vmatprep.subr.bf16.mxu0 0
    %3049 = vmatpush1.bf16.msra.mxu0 0
    %3050 = vmatprep.subr.bf16.mxu0 0
    %3051 = vmatpush1.bf16.msra.mxu0 0
    %3052 = vmatprep.subr.bf16.mxu0 0
    %3053 = vmatpush1.bf16.msra.mxu0 0
    %3054 = vmatprep.subr.bf16.mxu0 0
    %3055 = vmatpush1.bf16.msra.mxu0 0
    %3056 = vmatprep.subr.bf16.mxu0 0
    %3057 = vmatpush1.bf16.msra.mxu0 0
    %3058 = vmatprep.subr.bf16.mxu0 0
    %3059 = vmatpush1.bf16.msra.mxu0 0
    %3060 = vmatprep.subr.bf16.mxu0 0
    %3061 = vmatpush1.bf16.msra.mxu0 0
    %3062 = vmatprep.mubr.bf16.mxu0 0
    %3063 = vmatmul.mubr.bf16.gmra.mrb[0].mxu0 %v2859
    %v3064 = vpop.f32.mrb[0].mxu0
    %v3065 = vadd.f32 0.0, %v3064
    %v3066 = vpop.f32.mrb[0].mxu0
    %v3067 = vpop.f32.mrb[0].mxu0
    %v3068 = vadd.f32 0.0, %v3067
    %v3069 = vpop.f32.mrb[0].mxu0
    %3070 = vdwg.mxu0
    %v3071 = vmax.f32 %v2959, %v3065
    %v3072 = vmax.f32 %v2962, %v3068
    %s3073 = scalar_lea.vmem %s9, 128
    %v3074 = vld [vmem:[%s3073] sm:$0xf]
    %v3075 = vld [vmem:[%s3073 + $0x4] sm:$0xf]
    %v3076 = vld [vmem:[%s3073 + $0x8] sm:$0xf]
    %v3077 = vld [vmem:[%s3073 + $0xc] sm:$0xf]
    %v3078 = vld [vmem:[%s3073 + $0x10] sm:$0xf]
    %v3079 = vld [vmem:[%s3073 + $0x14] sm:$0xf]
    %v3080 = vld [vmem:[%s3073 + $0x18] sm:$0xf]
    %v3081 = vld [vmem:[%s3073 + $0x1c] sm:$0xf]
    %v3082 = vld [vmem:[%s3073 + $0x20] sm:$0xf]
    %v3083 = vld [vmem:[%s3073 + $0x24] sm:$0xf]
    %v3084 = vld [vmem:[%s3073 + $0x28] sm:$0xf]
    %v3085 = vld [vmem:[%s3073 + $0x2c] sm:$0xf]
    %v3086 = vld [vmem:[%s3073 + $0x30] sm:$0xf]
    %v3087 = vld [vmem:[%s3073 + $0x34] sm:$0xf]
    %v3088 = vld [vmem:[%s3073 + $0x38] sm:$0xf]
    %v3089 = vld [vmem:[%s3073 + $0x3c] sm:$0xf]
    %v3106 = vunpack.c.l.b16 %v3074
    %v3107 = vunpack.c.l.b16 %v3075
    %v3108 = vunpack.c.l.b16 %v3076
    %v3109 = vunpack.c.l.b16 %v3077
    %v3110 = vunpack.c.l.b16 %v3078
    %v3111 = vunpack.c.l.b16 %v3079
    %v3112 = vunpack.c.l.b16 %v3080
    %v3113 = vunpack.c.l.b16 %v3081
    %v3114 = vunpack.c.l.b16 %v3082
    %v3115 = vunpack.c.l.b16 %v3083
    %v3116 = vunpack.c.l.b16 %v3084
    %v3117 = vunpack.c.l.b16 %v3085
    %v3118 = vunpack.c.l.b16 %v3086
    %v3119 = vunpack.c.l.b16 %v3087
    %v3120 = vunpack.c.l.b16 %v3088
    %v3121 = vunpack.c.l.b16 %v3089
    %v3122 = vpack.c.b16 %v3107, %v3106
    %v3123 = vpack.c.b16 %v3109, %v3108
    %v3124 = vpack.c.b16 %v3111, %v3110
    %v3125 = vpack.c.b16 %v3113, %v3112
    %v3126 = vpack.c.b16 %v3115, %v3114
    %v3127 = vpack.c.b16 %v3117, %v3116
    %v3128 = vpack.c.b16 %v3119, %v3118
    %v3129 = vpack.c.b16 %v3121, %v3120
    %3138 = vmatprep.subr.bf16.mxu0 0
    %3139 = vmatpush1.bf16.msra.mxu0 %v3122
    %3140 = vmatprep.subr.bf16.mxu0 0
    %3141 = vmatpush1.bf16.msra.mxu0 %v3123
    %3142 = vmatprep.subr.bf16.mxu0 0
    %3143 = vmatpush1.bf16.msra.mxu0 %v3124
    %3144 = vmatprep.subr.bf16.mxu0 0
    %3145 = vmatpush1.bf16.msra.mxu0 %v3125
    %3146 = vmatprep.subr.bf16.mxu0 0
    %3147 = vmatpush1.bf16.msra.mxu0 %v3126
    %3148 = vmatprep.subr.bf16.mxu0 0
    %3149 = vmatpush1.bf16.msra.mxu0 %v3127
    %3150 = vmatprep.subr.bf16.mxu0 0
    %3151 = vmatpush1.bf16.msra.mxu0 %v3128
    %3152 = vmatprep.subr.bf16.mxu0 0
    %3153 = vmatpush1.bf16.msra.mxu0 %v3129
    %3154 = vmatprep.subr.bf16.mxu0 0
    %3155 = vmatpush1.bf16.msra.mxu0 0
    %3156 = vmatprep.subr.bf16.mxu0 0
    %3157 = vmatpush1.bf16.msra.mxu0 0
    %3158 = vmatprep.subr.bf16.mxu0 0
    %3159 = vmatpush1.bf16.msra.mxu0 0
    %3160 = vmatprep.subr.bf16.mxu0 0
    %3161 = vmatpush1.bf16.msra.mxu0 0
    %3162 = vmatprep.subr.bf16.mxu0 0
    %3163 = vmatpush1.bf16.msra.mxu0 0
    %3164 = vmatprep.subr.bf16.mxu0 0
    %3165 = vmatpush1.bf16.msra.mxu0 0
    %3166 = vmatprep.subr.bf16.mxu0 0
    %3167 = vmatpush1.bf16.msra.mxu0 0
    %3168 = vmatprep.subr.bf16.mxu0 0
    %3169 = vmatpush1.bf16.msra.mxu0 0
    %3170 = vmatprep.mubr.bf16.mxu0 0
    %3171 = vmatmul.mubr.bf16.gmra.mrb[0].mxu0 %v2859
    %v3172 = vpop.f32.mrb[0].mxu0
    %v3173 = vadd.f32 0.0, %v3172
    %v3174 = vpop.f32.mrb[0].mxu0
    %v3175 = vpop.f32.mrb[0].mxu0
    %v3176 = vadd.f32 0.0, %v3175
    %v3177 = vpop.f32.mrb[0].mxu0
    %3178 = vdwg.mxu0
    %v3179 = vmax.f32 %v3071, %v3173
    %v3180 = vmax.f32 %v3072, %v3176
    %v3181 = vpack.c.bf16 %v3180, %v3179
    %v3182 = vld [vmem:[#allocation11] sm:$0xf]
    %v3184 = vsel %vm2200, %v3182, 0
    %3186 = vmatprep.subr.bf16.mxu0 0
    %3187 = vmatpush1.bf16.msra.mxu0 %v3181
    %3188 = vmatprep.subr.bf16.mxu0 0
    %3189 = vmatpush1.bf16.msra.mxu0 0
    %3190 = vmatprep.subr.bf16.mxu0 0
    %3191 = vmatpush1.bf16.msra.mxu0 0
    %3192 = vmatprep.subr.bf16.mxu0 0
    %3193 = vmatpush1.bf16.msra.mxu0 0
    %3194 = vmatprep.subr.bf16.mxu0 0
    %3195 = vmatpush1.bf16.msra.mxu0 0
    %3196 = vmatprep.subr.bf16.mxu0 0
    %3197 = vmatpush1.bf16.msra.mxu0 0
    %3198 = vmatprep.subr.bf16.mxu0 0
    %3199 = vmatpush1.bf16.msra.mxu0 0
    %3200 = vmatprep.subr.bf16.mxu0 0
    %3201 = vmatpush1.bf16.msra.mxu0 0
    %3202 = vmatprep.subr.bf16.mxu0 0
    %3203 = vmatpush1.bf16.msra.mxu0 0
    %3204 = vmatprep.subr.bf16.mxu0 0
    %3205 = vmatpush1.bf16.msra.mxu0 0
    %3206 = vmatprep.subr.bf16.mxu0 0
    %3207 = vmatpush1.bf16.msra.mxu0 0
    %3208 = vmatprep.subr.bf16.mxu0 0
    %3209 = vmatpush1.bf16.msra.mxu0 0
    %3210 = vmatprep.subr.bf16.mxu0 0
    %3211 = vmatpush1.bf16.msra.mxu0 0
    %3212 = vmatprep.subr.bf16.mxu0 0
    %3213 = vmatpush1.bf16.msra.mxu0 0
    %3214 = vmatprep.subr.bf16.mxu0 0
    %3215 = vmatpush1.bf16.msra.mxu0 0
    %3216 = vmatprep.subr.bf16.mxu0 0
    %3217 = vmatpush1.bf16.msra.mxu0 0
    %3218 = vmatprep.mubr.bf16.mxu0 0
    %3219 = vmatmul.mubr.bf16.gmra.mrb[0].mxu0 %v3184
    %v3220 = vpop.f32.mrb[0].mxu0
    %v3221 = vadd.f32 0.0, %v3220
    %v3222 = vpop.f32.mrb[0].mxu0
    %v3223 = vpop.f32.mrb[0].mxu0
    %v3224 = vpop.f32.mrb[0].mxu0
    %3225 = vdwg.mxu0
    %s3226 = scalar_lea.vmem [#allocation11], 4
    %v3227 = vld [vmem:[%s3226] sm:$0xf]
    %v3229 = vsel %vm2200, %v3227, 0
    %3231 = vmatprep.subr.bf16.mxu0 0
    %3232 = vmatpush1.bf16.msra.mxu0 %v3181
    %3233 = vmatprep.subr.bf16.mxu0 0
    %3234 = vmatpush1.bf16.msra.mxu0 0
    %3235 = vmatprep.subr.bf16.mxu0 0
    %3236 = vmatpush1.bf16.msra.mxu0 0
    %3237 = vmatprep.subr.bf16.mxu0 0
    %3238 = vmatpush1.bf16.msra.mxu0 0
    %3239 = vmatprep.subr.bf16.mxu0 0
    %3240 = vmatpush1.bf16.msra.mxu0 0
    %3241 = vmatprep.subr.bf16.mxu0 0
    %3242 = vmatpush1.bf16.msra.mxu0 0
    %3243 = vmatprep.subr.bf16.mxu0 0
    %3244 = vmatpush1.bf16.msra.mxu0 0
    %3245 = vmatprep.subr.bf16.mxu0 0
    %3246 = vmatpush1.bf16.msra.mxu0 0
    %3247 = vmatprep.subr.bf16.mxu0 0
    %3248 = vmatpush1.bf16.msra.mxu0 0
    %3249 = vmatprep.subr.bf16.mxu0 0
    %3250 = vmatpush1.bf16.msra.mxu0 0
    %3251 = vmatprep.subr.bf16.mxu0 0
    %3252 = vmatpush1.bf16.msra.mxu0 0
    %3253 = vmatprep.subr.bf16.mxu0 0
    %3254 = vmatpush1.bf16.msra.mxu0 0
    %3255 = vmatprep.subr.bf16.mxu0 0
    %3256 = vmatpush1.bf16.msra.mxu0 0
    %3257 = vmatprep.subr.bf16.mxu0 0
    %3258 = vmatpush1.bf16.msra.mxu0 0
    %3259 = vmatprep.subr.bf16.mxu0 0
    %3260 = vmatpush1.bf16.msra.mxu0 0
    %3261 = vmatprep.subr.bf16.mxu0 0
    %3262 = vmatpush1.bf16.msra.mxu0 0
    %3263 = vmatprep.mubr.bf16.mxu0 0
    %3264 = vmatmul.mubr.bf16.gmra.mrb[0].mxu0 %v3229
    %v3265 = vpop.f32.mrb[0].mxu0
    %v3266 = vadd.f32 0.0, %v3265
    %v3267 = vpop.f32.mrb[0].mxu0
    %v3268 = vpop.f32.mrb[0].mxu0
    %v3269 = vpop.f32.mrb[0].mxu0
    %3270 = vdwg.mxu0
    %v3271 = vmax.f32 %v3221, %v3266
    %s3272 = scalar_lea.vmem [#allocation11], 8
    %v3273 = vld [vmem:[%s3272] sm:$0xf]
    %v3275 = vsel %vm2200, %v3273, 0
    %3277 = vmatprep.subr.bf16.mxu0 0
    %3278 = vmatpush1.bf16.msra.mxu0 %v3181
    %3279 = vmatprep.subr.bf16.mxu0 0
    %3280 = vmatpush1.bf16.msra.mxu0 0
    %3281 = vmatprep.subr.bf16.mxu0 0
    %3282 = vmatpush1.bf16.msra.mxu0 0
    %3283 = vmatprep.subr.bf16.mxu0 0
    %3284 = vmatpush1.bf16.msra.mxu0 0
    %3285 = vmatprep.subr.bf16.mxu0 0
    %3286 = vmatpush1.bf16.msra.mxu0 0
    %3287 = vmatprep.subr.bf16.mxu0 0
    %3288 = vmatpush1.bf16.msra.mxu0 0
    %3289 = vmatprep.subr.bf16.mxu0 0
    %3290 = vmatpush1.bf16.msra.mxu0 0
    %3291 = vmatprep.subr.bf16.mxu0 0
    %3292 = vmatpush1.bf16.msra.mxu0 0
    %3293 = vmatprep.subr.bf16.mxu0 0
    %3294 = vmatpush1.bf16.msra.mxu0 0
    %3295 = vmatprep.subr.bf16.mxu0 0
    %3296 = vmatpush1.bf16.msra.mxu0 0
    %3297 = vmatprep.subr.bf16.mxu0 0
    %3298 = vmatpush1.bf16.msra.mxu0 0
    %3299 = vmatprep.subr.bf16.mxu0 0
    %3300 = vmatpush1.bf16.msra.mxu0 0
    %3301 = vmatprep.subr.bf16.mxu0 0
    %3302 = vmatpush1.bf16.msra.mxu0 0
    %3303 = vmatprep.subr.bf16.mxu0 0
    %3304 = vmatpush1.bf16.msra.mxu0 0
    %3305 = vmatprep.subr.bf16.mxu0 0
    %3306 = vmatpush1.bf16.msra.mxu0 0
    %3307 = vmatprep.subr.bf16.mxu0 0
    %3308 = vmatpush1.bf16.msra.mxu0 0
    %3309 = vmatprep.mubr.bf16.mxu0 0
    %3310 = vmatmul.mubr.bf16.gmra.mrb[0].mxu0 %v3275
    %v3311 = vpop.f32.mrb[0].mxu0
    %v3312 = vadd.f32 0.0, %v3311
    %v3313 = vpop.f32.mrb[0].mxu0
    %v3314 = vpop.f32.mrb[0].mxu0
    %v3315 = vpop.f32.mrb[0].mxu0
    %3316 = vdwg.mxu0
    %v3317 = vmax.f32 %v3271, %v3312
    %v3318 = vpack.c.bf16 %v3317, %v3317
    %v3319 = vld [vmem:[#allocation13] sm:$0xf]
    %vm3320 = vcmask 64512
    %v3322 = vsel %vm3320, %v3319, 0
    %vm3324 = vcmask 1043456
    %v3326 = vsel %vm3324, %v3318, 0
    %3328 = vmatprep.subr.bf16.mxu0 0
    %3329 = vmatpush1.bf16.msra.mxu0 %v3326
    %3330 = vmatprep.subr.bf16.mxu0 0
    %3331 = vmatpush1.bf16.msra.mxu0 0
    %3332 = vmatprep.subr.bf16.mxu0 0
    %3333 = vmatpush1.bf16.msra.mxu0 0
    %3334 = vmatprep.subr.bf16.mxu0 0
    %3335 = vmatpush1.bf16.msra.mxu0 0
    %3336 = vmatprep.subr.bf16.mxu0 0
    %3337 = vmatpush1.bf16.msra.mxu0 0
    %3338 = vmatprep.subr.bf16.mxu0 0
    %3339 = vmatpush1.bf16.msra.mxu0 0
    %3340 = vmatprep.subr.bf16.mxu0 0
    %3341 = vmatpush1.bf16.msra.mxu0 0
    %3342 = vmatprep.subr.bf16.mxu0 0
    %3343 = vmatpush1.bf16.msra.mxu0 0
    %3344 = vmatprep.subr.bf16.mxu0 0
    %3345 = vmatpush1.bf16.msra.mxu0 0
    %3346 = vmatprep.subr.bf16.mxu0 0
    %3347 = vmatpush1.bf16.msra.mxu0 0
    %3348 = vmatprep.subr.bf16.mxu0 0
    %3349 = vmatpush1.bf16.msra.mxu0 0
    %3350 = vmatprep.subr.bf16.mxu0 0
    %3351 = vmatpush1.bf16.msra.mxu0 0
    %3352 = vmatprep.subr.bf16.mxu0 0
    %3353 = vmatpush1.bf16.msra.mxu0 0
    %3354 = vmatprep.subr.bf16.mxu0 0
    %3355 = vmatpush1.bf16.msra.mxu0 0
    %3356 = vmatprep.subr.bf16.mxu0 0
    %3357 = vmatpush1.bf16.msra.mxu0 0
    %3358 = vmatprep.subr.bf16.mxu0 0
    %3359 = vmatpush1.bf16.msra.mxu0 0
    %3360 = vmatprep.mubr.bf16.mxu0 0
    %3361 = vmatmul.mubr.bf16.gmra.mrb[0].mxu0 %v3322
    %v3362 = vpop.f32.mrb[0].mxu0
    %v3363 = vadd.f32 0.0, %v3362
    %v3364 = vpop.f32.mrb[0].mxu0
    %v3365 = vpop.f32.mrb[0].mxu0
    %v3366 = vpop.f32.mrb[0].mxu0
    %3367 = vdwg.mxu0
    %v3368 = vpack.c.bf16 %v3363, %v3363
    %v3369 = vld [vmem:[#allocation14] sm:$0xf]
    %v3370 = vld [vmem:[#allocation14 + $0x4] sm:$0xf]
    %v3371 = vld [vmem:[#allocation14 + $0x8] sm:$0xf]
    %v3372 = vld [vmem:[#allocation14 + $0xc] sm:$0xf]
    %v3373 = vld [vmem:[#allocation14 + $0x10] sm:$0xf]
    %v3374 = vld [vmem:[#allocation14 + $0x14] sm:$0xf]
    %v3375 = vld [vmem:[#allocation14 + $0x18] sm:$0xf]
    %v3376 = vld [vmem:[#allocation14 + $0x1c] sm:$0xf]
    %s3377 = scalar_lea.vmem [#allocation13], 4
    %v3378 = vld [vmem:[%s3377] sm:$0xf]
    %v3380 = vsel %vm3320, %v3378, 0
    %3382 = vmatprep.subr.bf16.mxu0 0
    %3383 = vmatpush1.bf16.msra.mxu0 %v3326
    %3384 = vmatprep.subr.bf16.mxu0 0
    %3385 = vmatpush1.bf16.msra.mxu0 0
    %3386 = vmatprep.subr.bf16.mxu0 0
    %3387 = vmatpush1.bf16.msra.mxu0 0
    %3388 = vmatprep.subr.bf16.mxu0 0
    %3389 = vmatpush1.bf16.msra.mxu0 0
    %3390 = vmatprep.subr.bf16.mxu0 0
    %3391 = vmatpush1.bf16.msra.mxu0 0
    %3392 = vmatprep.subr.bf16.mxu0 0
    %3393 = vmatpush1.bf16.msra.mxu0 0
    %3394 = vmatprep.subr.bf16.mxu0 0
    %3395 = vmatpush1.bf16.msra.mxu0 0
    %3396 = vmatprep.subr.bf16.mxu0 0
    %3397 = vmatpush1.bf16.msra.mxu0 0
    %3398 = vmatprep.subr.bf16.mxu0 0
    %3399 = vmatpush1.bf16.msra.mxu0 0
    %3400 = vmatprep.subr.bf16.mxu0 0
    %3401 = vmatpush1.bf16.msra.mxu0 0
    %3402 = vmatprep.subr.bf16.mxu0 0
    %3403 = vmatpush1.bf16.msra.mxu0 0
    %3404 = vmatprep.subr.bf16.mxu0 0
    %3405 = vmatpush1.bf16.msra.mxu0 0
    %3406 = vmatprep.subr.bf16.mxu0 0
    %3407 = vmatpush1.bf16.msra.mxu0 0
    %3408 = vmatprep.subr.bf16.mxu0 0
    %3409 = vmatpush1.bf16.msra.mxu0 0
    %3410 = vmatprep.subr.bf16.mxu0 0
    %3411 = vmatpush1.bf16.msra.mxu0 0
    %3412 = vmatprep.subr.bf16.mxu0 0
    %3413 = vmatpush1.bf16.msra.mxu0 0
    %3414 = vmatprep.mubr.bf16.mxu0 0
    %3415 = vmatmul.mubr.bf16.gmra.mrb[0].mxu0 %v3380
    %v3416 = vpop.f32.mrb[0].mxu0
    %v3417 = vadd.f32 0.0, %v3416
    %v3418 = vpop.f32.mrb[0].mxu0
    %v3419 = vpop.f32.mrb[0].mxu0
    %v3420 = vpop.f32.mrb[0].mxu0
    %3421 = vdwg.mxu0
    %v3422 = vpack.c.bf16 %v3417, %v3417
    %s3423 = scalar_lea.vmem [#allocation14], 32
    %v3424 = vld [vmem:[%s3423] sm:$0xf]
    %v3425 = vld [vmem:[%s3423 + $0x4] sm:$0xf]
    %v3426 = vld [vmem:[%s3423 + $0x8] sm:$0xf]
    %v3427 = vld [vmem:[%s3423 + $0xc] sm:$0xf]
    %v3428 = vld [vmem:[%s3423 + $0x10] sm:$0xf]
    %v3429 = vld [vmem:[%s3423 + $0x14] sm:$0xf]
    %v3430 = vld [vmem:[%s3423 + $0x18] sm:$0xf]
    %v3431 = vld [vmem:[%s3423 + $0x1c] sm:$0xf]
    %v3440 = vunpack.c.l.b16 %v3424
    %v3441 = vunpack.c.l.b16 %v3425
    %v3442 = vunpack.c.l.b16 %v3426
    %v3443 = vunpack.c.l.b16 %v3427
    %v3444 = vunpack.c.l.b16 %v3428
    %v3445 = vunpack.c.l.b16 %v3429
    %v3446 = vunpack.c.l.b16 %v3430
    %v3447 = vunpack.c.l.b16 %v3431
    %v3448 = vpack.c.b16 %v3441, %v3440
    %v3449 = vpack.c.b16 %v3443, %v3442
    %v3450 = vpack.c.b16 %v3445, %v3444
    %v3451 = vpack.c.b16 %v3447, %v3446
    %v3457 = vsel %vm357, %v3422, 0
    %3459 = vmatprep.subr.bf16.mxu0 0
    %3460 = vmatpush1.bf16.msra.mxu0 %v3448
    %3461 = vmatprep.subr.bf16.mxu0 0
    %3462 = vmatpush1.bf16.msra.mxu0 %v3449
    %3463 = vmatprep.subr.bf16.mxu0 0
    %3464 = vmatpush1.bf16.msra.mxu0 %v3450
    %3465 = vmatprep.subr.bf16.mxu0 0
    %3466 = vmatpush1.bf16.msra.mxu0 %v3451
    %3467 = vmatprep.subr.bf16.mxu0 0
    %3468 = vmatpush1.bf16.msra.mxu0 0
    %3469 = vmatprep.subr.bf16.mxu0 0
    %3470 = vmatpush1.bf16.msra.mxu0 0
    %3471 = vmatprep.subr.bf16.mxu0 0
    %3472 = vmatpush1.bf16.msra.mxu0 0
    %3473 = vmatprep.subr.bf16.mxu0 0
    %3474 = vmatpush1.bf16.msra.mxu0 0
    %3475 = vmatprep.subr.bf16.mxu0 0
    %3476 = vmatpush1.bf16.msra.mxu0 0
    %3477 = vmatprep.subr.bf16.mxu0 0
    %3478 = vmatpush1.bf16.msra.mxu0 0
    %3479 = vmatprep.subr.bf16.mxu0 0
    %3480 = vmatpush1.bf16.msra.mxu0 0
    %3481 = vmatprep.subr.bf16.mxu0 0
    %3482 = vmatpush1.bf16.msra.mxu0 0
    %3483 = vmatprep.subr.bf16.mxu0 0
    %3484 = vmatpush1.bf16.msra.mxu0 0
    %3485 = vmatprep.subr.bf16.mxu0 0
    %3486 = vmatpush1.bf16.msra.mxu0 0
    %3487 = vmatprep.subr.bf16.mxu0 0
    %3488 = vmatpush1.bf16.msra.mxu0 0
    %3489 = vmatprep.subr.bf16.mxu0 0
    %3490 = vmatpush1.bf16.msra.mxu0 0
    %3491 = vmatprep.mubr.bf16.mxu0 0
    %3492 = vmatmul.mubr.bf16.gmra.mrb[0].mxu0 %v3457
    %v3493 = vpop.f32.mrb[0].mxu0
    %v3494 = vadd.f32 0.0, %v3493
    %v3495 = vpop.f32.mrb[0].mxu0
    %v3496 = vpop.f32.mrb[0].mxu0
    %v3497 = vpop.f32.mrb[0].mxu0
    %3498 = vdwg.mxu0
    %v3507 = vunpack.c.l.b16 %v3369
    %v3508 = vunpack.c.l.b16 %v3370
    %v3509 = vunpack.c.l.b16 %v3371
    %v3510 = vunpack.c.l.b16 %v3372
    %v3511 = vunpack.c.l.b16 %v3373
    %v3512 = vunpack.c.l.b16 %v3374
    %v3513 = vunpack.c.l.b16 %v3375
    %v3514 = vunpack.c.l.b16 %v3376
    %v3515 = vpack.c.b16 %v3508, %v3507
    %v3516 = vpack.c.b16 %v3510, %v3509
    %v3517 = vpack.c.b16 %v3512, %v3511
    %v3518 = vpack.c.b16 %v3514, %v3513
    %v3524 = vsel %vm357, %v3368, 0
    %3526 = vmatprep.subr.bf16.mxu0 0
    %3527 = vmatpush1.bf16.msra.mxu0 %v3515
    %3528 = vmatprep.subr.bf16.mxu0 0
    %3529 = vmatpush1.bf16.msra.mxu0 %v3516
    %3530 = vmatprep.subr.bf16.mxu0 0
    %3531 = vmatpush1.bf16.msra.mxu0 %v3517
    %3532 = vmatprep.subr.bf16.mxu0 0
    %3533 = vmatpush1.bf16.msra.mxu0 %v3518
    %3534 = vmatprep.subr.bf16.mxu0 0
    %3535 = vmatpush1.bf16.msra.mxu0 0
    %3536 = vmatprep.subr.bf16.mxu0 0
    %3537 = vmatpush1.bf16.msra.mxu0 0
    %3538 = vmatprep.subr.bf16.mxu0 0
    %3539 = vmatpush1.bf16.msra.mxu0 0
    %3540 = vmatprep.subr.bf16.mxu0 0
    %3541 = vmatpush1.bf16.msra.mxu0 0
    %3542 = vmatprep.subr.bf16.mxu0 0
    %3543 = vmatpush1.bf16.msra.mxu0 0
    %3544 = vmatprep.subr.bf16.mxu0 0
    %3545 = vmatpush1.bf16.msra.mxu0 0
    %3546 = vmatprep.subr.bf16.mxu0 0
    %3547 = vmatpush1.bf16.msra.mxu0 0
    %3548 = vmatprep.subr.bf16.mxu0 0
    %3549 = vmatpush1.bf16.msra.mxu0 0
    %3550 = vmatprep.subr.bf16.mxu0 0
    %3551 = vmatpush1.bf16.msra.mxu0 0
    %3552 = vmatprep.subr.bf16.mxu0 0
    %3553 = vmatpush1.bf16.msra.mxu0 0
    %3554 = vmatprep.subr.bf16.mxu0 0
    %3555 = vmatpush1.bf16.msra.mxu0 0
    %3556 = vmatprep.subr.bf16.mxu0 0
    %3557 = vmatpush1.bf16.msra.mxu0 0
    %3558 = vmatprep.mubr.bf16.mxu0 0
    %3559 = vmatmul.mubr.bf16.gmra.mrb[0].mxu0 %v3524
    %v3560 = vpop.f32.mrb[0].mxu0
    %v3561 = vadd.f32 %v3494, %v3560
    %v3562 = vpop.f32.mrb[0].mxu0
    %v3563 = vpop.f32.mrb[0].mxu0
    %v3564 = vpop.f32.mrb[0].mxu0
    %3565 = vdwg.mxu0
    %s3566 = scalar_lea.vmem [#allocation13], 8
    %v3567 = vld [vmem:[%s3566] sm:$0xf]
    %v3569 = vsel %vm3320, %v3567, 0
    %3571 = vmatprep.subr.bf16.mxu0 0
    %3572 = vmatpush1.bf16.msra.mxu0 %v3326
    %3573 = vmatprep.subr.bf16.mxu0 0
    %3574 = vmatpush1.bf16.msra.mxu0 0
    %3575 = vmatprep.subr.bf16.mxu0 0
    %3576 = vmatpush1.bf16.msra.mxu0 0
    %3577 = vmatprep.subr.bf16.mxu0 0
    %3578 = vmatpush1.bf16.msra.mxu0 0
    %3579 = vmatprep.subr.bf16.mxu0 0
    %3580 = vmatpush1.bf16.msra.mxu0 0
    %3581 = vmatprep.subr.bf16.mxu0 0
    %3582 = vmatpush1.bf16.msra.mxu0 0
    %3583 = vmatprep.subr.bf16.mxu0 0
    %3584 = vmatpush1.bf16.msra.mxu0 0
    %3585 = vmatprep.subr.bf16.mxu0 0
    %3586 = vmatpush1.bf16.msra.mxu0 0
    %3587 = vmatprep.subr.bf16.mxu0 0
    %3588 = vmatpush1.bf16.msra.mxu0 0
    %3589 = vmatprep.subr.bf16.mxu0 0
    %3590 = vmatpush1.bf16.msra.mxu0 0
    %3591 = vmatprep.subr.bf16.mxu0 0
    %3592 = vmatpush1.bf16.msra.mxu0 0
    %3593 = vmatprep.subr.bf16.mxu0 0
    %3594 = vmatpush1.bf16.msra.mxu0 0
    %3595 = vmatprep.subr.bf16.mxu0 0
    %3596 = vmatpush1.bf16.msra.mxu0 0
    %3597 = vmatprep.subr.bf16.mxu0 0
    %3598 = vmatpush1.bf16.msra.mxu0 0
    %3599 = vmatprep.subr.bf16.mxu0 0
    %3600 = vmatpush1.bf16.msra.mxu0 0
    %3601 = vmatprep.subr.bf16.mxu0 0
    %3602 = vmatpush1.bf16.msra.mxu0 0
    %3603 = vmatprep.mubr.bf16.mxu0 0
    %3604 = vmatmul.mubr.bf16.gmra.mrb[0].mxu0 %v3569
    %v3605 = vpop.f32.mrb[0].mxu0
    %v3606 = vadd.f32 0.0, %v3605
    %v3607 = vpop.f32.mrb[0].mxu0
    %v3608 = vpop.f32.mrb[0].mxu0
    %v3609 = vpop.f32.mrb[0].mxu0
    %3610 = vdwg.mxu0
    %v3611 = vpack.c.bf16 %v3606, %v3606
    %s3612 = scalar_lea.vmem [#allocation14], 64
    %v3613 = vld [vmem:[%s3612] sm:$0xf]
    %v3614 = vld [vmem:[%s3612 + $0x4] sm:$0xf]
    %v3615 = vld [vmem:[%s3612 + $0x8] sm:$0xf]
    %v3616 = vld [vmem:[%s3612 + $0xc] sm:$0xf]
    %v3617 = vld [vmem:[%s3612 + $0x10] sm:$0xf]
    %v3618 = vld [vmem:[%s3612 + $0x14] sm:$0xf]
    %v3619 = vld [vmem:[%s3612 + $0x18] sm:$0xf]
    %v3620 = vld [vmem:[%s3612 + $0x1c] sm:$0xf]
    %v3629 = vunpack.c.l.b16 %v3613
    %v3630 = vunpack.c.l.b16 %v3614
    %v3631 = vunpack.c.l.b16 %v3615
    %v3632 = vunpack.c.l.b16 %v3616
    %v3633 = vunpack.c.l.b16 %v3617
    %v3634 = vunpack.c.l.b16 %v3618
    %v3635 = vunpack.c.l.b16 %v3619
    %v3636 = vunpack.c.l.b16 %v3620
    %v3637 = vpack.c.b16 %v3630, %v3629
    %v3638 = vpack.c.b16 %v3632, %v3631
    %v3639 = vpack.c.b16 %v3634, %v3633
    %v3640 = vpack.c.b16 %v3636, %v3635
    %v3646 = vsel %vm357, %v3611, 0
    %3648 = vmatprep.subr.bf16.mxu0 0
    %3649 = vmatpush1.bf16.msra.mxu0 %v3637
    %3650 = vmatprep.subr.bf16.mxu0 0
    %3651 = vmatpush1.bf16.msra.mxu0 %v3638
    %3652 = vmatprep.subr.bf16.mxu0 0
    %3653 = vmatpush1.bf16.msra.mxu0 %v3639
    %3654 = vmatprep.subr.bf16.mxu0 0
    %3655 = vmatpush1.bf16.msra.mxu0 %v3640
    %3656 = vmatprep.subr.bf16.mxu0 0
    %3657 = vmatpush1.bf16.msra.mxu0 0
    %3658 = vmatprep.subr.bf16.mxu0 0
    %3659 = vmatpush1.bf16.msra.mxu0 0
    %3660 = vmatprep.subr.bf16.mxu0 0
    %3661 = vmatpush1.bf16.msra.mxu0 0
    %3662 = vmatprep.subr.bf16.mxu0 0
    %3663 = vmatpush1.bf16.msra.mxu0 0
    %3664 = vmatprep.subr.bf16.mxu0 0
    %3665 = vmatpush1.bf16.msra.mxu0 0
    %3666 = vmatprep.subr.bf16.mxu0 0
    %3667 = vmatpush1.bf16.msra.mxu0 0
    %3668 = vmatprep.subr.bf16.mxu0 0
    %3669 = vmatpush1.bf16.msra.mxu0 0
    %3670 = vmatprep.subr.bf16.mxu0 0
    %3671 = vmatpush1.bf16.msra.mxu0 0
    %3672 = vmatprep.subr.bf16.mxu0 0
    %3673 = vmatpush1.bf16.msra.mxu0 0
    %3674 = vmatprep.subr.bf16.mxu0 0
    %3675 = vmatpush1.bf16.msra.mxu0 0
    %3676 = vmatprep.subr.bf16.mxu0 0
    %3677 = vmatpush1.bf16.msra.mxu0 0
    %3678 = vmatprep.subr.bf16.mxu0 0
    %3679 = vmatpush1.bf16.msra.mxu0 0
    %3680 = vmatprep.mubr.bf16.mxu0 0
    %3681 = vmatmul.mubr.bf16.gmra.mrb[0].mxu0 %v3646
    %v3682 = vpop.f32.mrb[0].mxu0
    %v3683 = vadd.f32 0.0, %v3682
    %v3684 = vpop.f32.mrb[0].mxu0
    %v3685 = vpop.f32.mrb[0].mxu0
    %v3686 = vpop.f32.mrb[0].mxu0
    %3687 = vdwg.mxu0
    %v3688 = vadd.f32 %v3561, %v3683
    %v3689 = vld [vmem:[#allocation16] sm:$0x1]
    %v3691 = vlaneseq
    %v3692 = vshrl.u32 %v3691, 7
    %v3693 = vsub.s32 0, %v3692
    %v3694 = vrot.slane %v3689, %v3693
    %v3696 = vadd.f32 %v3688, %v3694
    %v3697 = vmax.f32 %v3696, 0.0
    %v3698 = vpack.c.bf16 %v3697, %v3697
    %v3699 = vld [vmem:[%s14] sm:$0xf]
    %v3700 = vld [vmem:[%s14 + $0x4] sm:$0xf]
    %v3701 = vld [vmem:[%s14 + $0x8] sm:$0xf]
    %v3702 = vld [vmem:[%s14 + $0xc] sm:$0xf]
    %v3703 = vld [vmem:[%s14 + $0x10] sm:$0xf]
    %v3704 = vld [vmem:[%s14 + $0x14] sm:$0xf]
    %v3705 = vld [vmem:[%s14 + $0x18] sm:$0xf]
    %v3706 = vld [vmem:[%s14 + $0x1c] sm:$0xf]
    %v3707 = vld [vmem:[%s14 + $0x20] sm:$0xf]
    %v3708 = vld [vmem:[%s14 + $0x24] sm:$0xf]
    %v3709 = vld [vmem:[%s14 + $0x28] sm:$0xf]
    %v3710 = vld [vmem:[%s14 + $0x2c] sm:$0xf]
    %v3711 = vld [vmem:[%s14 + $0x30] sm:$0xf]
    %v3712 = vld [vmem:[%s14 + $0x34] sm:$0xf]
    %v3713 = vld [vmem:[%s14 + $0x38] sm:$0xf]
    %v3714 = vld [vmem:[%s14 + $0x3c] sm:$0xf]
    %v3731 = vunpack.c.l.b16 %v3699
    %v3732 = vunpack.c.l.b16 %v3700
    %v3733 = vunpack.c.l.b16 %v3701
    %v3734 = vunpack.c.l.b16 %v3702
    %v3735 = vunpack.c.l.b16 %v3703
    %v3736 = vunpack.c.l.b16 %v3704
    %v3737 = vunpack.c.l.b16 %v3705
    %v3738 = vunpack.c.l.b16 %v3706
    %v3739 = vunpack.c.l.b16 %v3707
    %v3740 = vunpack.c.l.b16 %v3708
    %v3741 = vunpack.c.l.b16 %v3709
    %v3742 = vunpack.c.l.b16 %v3710
    %v3743 = vunpack.c.l.b16 %v3711
    %v3744 = vunpack.c.l.b16 %v3712
    %v3745 = vunpack.c.l.b16 %v3713
    %v3746 = vunpack.c.l.b16 %v3714
    %v3747 = vpack.c.b16 %v3732, %v3731
    %v3748 = vpack.c.b16 %v3734, %v3733
    %v3749 = vpack.c.b16 %v3736, %v3735
    %v3750 = vpack.c.b16 %v3738, %v3737
    %v3751 = vpack.c.b16 %v3740, %v3739
    %v3752 = vpack.c.b16 %v3742, %v3741
    %v3753 = vpack.c.b16 %v3744, %v3743
    %v3754 = vpack.c.b16 %v3746, %v3745
    %3763 = vmatprep.subr.bf16.mxu0 0
    %3764 = vmatpush1.bf16.msra.mxu0 %v3747
    %3765 = vmatprep.subr.bf16.mxu0 0
    %3766 = vmatpush1.bf16.msra.mxu0 %v3748
    %3767 = vmatprep.subr.bf16.mxu0 0
    %3768 = vmatpush1.bf16.msra.mxu0 %v3749
    %3769 = vmatprep.subr.bf16.mxu0 0
    %3770 = vmatpush1.bf16.msra.mxu0 %v3750
    %3771 = vmatprep.subr.bf16.mxu0 0
    %3772 = vmatpush1.bf16.msra.mxu0 %v3751
    %3773 = vmatprep.subr.bf16.mxu0 0
    %3774 = vmatpush1.bf16.msra.mxu0 %v3752
    %3775 = vmatprep.subr.bf16.mxu0 0
    %3776 = vmatpush1.bf16.msra.mxu0 %v3753
    %3777 = vmatprep.subr.bf16.mxu0 0
    %3778 = vmatpush1.bf16.msra.mxu0 %v3754
    %3779 = vmatprep.subr.bf16.mxu0 0
    %3780 = vmatpush1.bf16.msra.mxu0 0
    %3781 = vmatprep.subr.bf16.mxu0 0
    %3782 = vmatpush1.bf16.msra.mxu0 0
    %3783 = vmatprep.subr.bf16.mxu0 0
    %3784 = vmatpush1.bf16.msra.mxu0 0
    %3785 = vmatprep.subr.bf16.mxu0 0
    %3786 = vmatpush1.bf16.msra.mxu0 0
    %3787 = vmatprep.subr.bf16.mxu0 0
    %3788 = vmatpush1.bf16.msra.mxu0 0
    %3789 = vmatprep.subr.bf16.mxu0 0
    %3790 = vmatpush1.bf16.msra.mxu0 0
    %3791 = vmatprep.subr.bf16.mxu0 0
    %3792 = vmatpush1.bf16.msra.mxu0 0
    %3793 = vmatprep.subr.bf16.mxu0 0
    %3794 = vmatpush1.bf16.msra.mxu0 0
    %3795 = vmatprep.mubr.bf16.mxu0 0
    %3796 = vmatmul.mubr.bf16.gmra.mrb[0].mxu0 %v3698
    %v3797 = vpop.f32.mrb[0].mxu0
    %v3798 = vadd.f32 0.0, %v3797
    %v3799 = vpop.f32.mrb[0].mxu0
    %v3800 = vpop.f32.mrb[0].mxu0
    %v3801 = vpop.f32.mrb[0].mxu0
    %3802 = vdwg.mxu0
    %s3803 = scalar_lea.vmem %s14, 64
    %v3804 = vld [vmem:[%s3803] sm:$0xf]
    %v3805 = vld [vmem:[%s3803 + $0x4] sm:$0xf]
    %v3806 = vld [vmem:[%s3803 + $0x8] sm:$0xf]
    %v3807 = vld [vmem:[%s3803 + $0xc] sm:$0xf]
    %v3808 = vld [vmem:[%s3803 + $0x10] sm:$0xf]
    %v3809 = vld [vmem:[%s3803 + $0x14] sm:$0xf]
    %v3810 = vld [vmem:[%s3803 + $0x18] sm:$0xf]
    %v3811 = vld [vmem:[%s3803 + $0x1c] sm:$0xf]
    %v3812 = vld [vmem:[%s3803 + $0x20] sm:$0xf]
    %v3813 = vld [vmem:[%s3803 + $0x24] sm:$0xf]
    %v3814 = vld [vmem:[%s3803 + $0x28] sm:$0xf]
    %v3815 = vld [vmem:[%s3803 + $0x2c] sm:$0xf]
    %v3816 = vld [vmem:[%s3803 + $0x30] sm:$0xf]
    %v3817 = vld [vmem:[%s3803 + $0x34] sm:$0xf]
    %v3818 = vld [vmem:[%s3803 + $0x38] sm:$0xf]
    %v3819 = vld [vmem:[%s3803 + $0x3c] sm:$0xf]
    %v3836 = vunpack.c.l.b16 %v3804
    %v3837 = vunpack.c.l.b16 %v3805
    %v3838 = vunpack.c.l.b16 %v3806
    %v3839 = vunpack.c.l.b16 %v3807
    %v3840 = vunpack.c.l.b16 %v3808
    %v3841 = vunpack.c.l.b16 %v3809
    %v3842 = vunpack.c.l.b16 %v3810
    %v3843 = vunpack.c.l.b16 %v3811
    %v3844 = vunpack.c.l.b16 %v3812
    %v3845 = vunpack.c.l.b16 %v3813
    %v3846 = vunpack.c.l.b16 %v3814
    %v3847 = vunpack.c.l.b16 %v3815
    %v3848 = vunpack.c.l.b16 %v3816
    %v3849 = vunpack.c.l.b16 %v3817
    %v3850 = vunpack.c.l.b16 %v3818
    %v3851 = vunpack.c.l.b16 %v3819
    %v3852 = vpack.c.b16 %v3837, %v3836
    %v3853 = vpack.c.b16 %v3839, %v3838
    %v3854 = vpack.c.b16 %v3841, %v3840
    %v3855 = vpack.c.b16 %v3843, %v3842
    %v3856 = vpack.c.b16 %v3845, %v3844
    %v3857 = vpack.c.b16 %v3847, %v3846
    %v3858 = vpack.c.b16 %v3849, %v3848
    %v3859 = vpack.c.b16 %v3851, %v3850
    %3868 = vmatprep.subr.bf16.mxu0 0
    %3869 = vmatpush1.bf16.msra.mxu0 %v3852
    %3870 = vmatprep.subr.bf16.mxu0 0
    %3871 = vmatpush1.bf16.msra.mxu0 %v3853
    %3872 = vmatprep.subr.bf16.mxu0 0
    %3873 = vmatpush1.bf16.msra.mxu0 %v3854
    %3874 = vmatprep.subr.bf16.mxu0 0
    %3875 = vmatpush1.bf16.msra.mxu0 %v3855
    %3876 = vmatprep.subr.bf16.mxu0 0
    %3877 = vmatpush1.bf16.msra.mxu0 %v3856
    %3878 = vmatprep.subr.bf16.mxu0 0
    %3879 = vmatpush1.bf16.msra.mxu0 %v3857
    %3880 = vmatprep.subr.bf16.mxu0 0
    %3881 = vmatpush1.bf16.msra.mxu0 %v3858
    %3882 = vmatprep.subr.bf16.mxu0 0
    %3883 = vmatpush1.bf16.msra.mxu0 %v3859
    %3884 = vmatprep.subr.bf16.mxu0 0
    %3885 = vmatpush1.bf16.msra.mxu0 0
    %3886 = vmatprep.subr.bf16.mxu0 0
    %3887 = vmatpush1.bf16.msra.mxu0 0
    %3888 = vmatprep.subr.bf16.mxu0 0
    %3889 = vmatpush1.bf16.msra.mxu0 0
    %3890 = vmatprep.subr.bf16.mxu0 0
    %3891 = vmatpush1.bf16.msra.mxu0 0
    %3892 = vmatprep.subr.bf16.mxu0 0
    %3893 = vmatpush1.bf16.msra.mxu0 0
    %3894 = vmatprep.subr.bf16.mxu0 0
    %3895 = vmatpush1.bf16.msra.mxu0 0
    %3896 = vmatprep.subr.bf16.mxu0 0
    %3897 = vmatpush1.bf16.msra.mxu0 0
    %3898 = vmatprep.subr.bf16.mxu0 0
    %3899 = vmatpush1.bf16.msra.mxu0 0
    %3900 = vmatprep.mubr.bf16.mxu0 0
    %3901 = vmatmul.mubr.bf16.gmra.mrb[0].mxu0 %v3698
    %v3902 = vpop.f32.mrb[0].mxu0
    %v3903 = vadd.f32 0.0, %v3902
    %v3904 = vpop.f32.mrb[0].mxu0
    %v3905 = vpop.f32.mrb[0].mxu0
    %v3906 = vpop.f32.mrb[0].mxu0
    %3907 = vdwg.mxu0
    %v3908 = vmax.f32 %v3798, %v3903
    %s3909 = scalar_lea.vmem %s14, 128
    %v3910 = vld [vmem:[%s3909] sm:$0xf]
    %v3911 = vld [vmem:[%s3909 + $0x4] sm:$0xf]
    %v3912 = vld [vmem:[%s3909 + $0x8] sm:$0xf]
    %v3913 = vld [vmem:[%s3909 + $0xc] sm:$0xf]
    %v3914 = vld [vmem:[%s3909 + $0x10] sm:$0xf]
    %v3915 = vld [vmem:[%s3909 + $0x14] sm:$0xf]
    %v3916 = vld [vmem:[%s3909 + $0x18] sm:$0xf]
    %v3917 = vld [vmem:[%s3909 + $0x1c] sm:$0xf]
    %v3918 = vld [vmem:[%s3909 + $0x20] sm:$0xf]
    %v3919 = vld [vmem:[%s3909 + $0x24] sm:$0xf]
    %v3920 = vld [vmem:[%s3909 + $0x28] sm:$0xf]
    %v3921 = vld [vmem:[%s3909 + $0x2c] sm:$0xf]
    %v3922 = vld [vmem:[%s3909 + $0x30] sm:$0xf]
    %v3923 = vld [vmem:[%s3909 + $0x34] sm:$0xf]
    %v3924 = vld [vmem:[%s3909 + $0x38] sm:$0xf]
    %v3925 = vld [vmem:[%s3909 + $0x3c] sm:$0xf]
    %v3942 = vunpack.c.l.b16 %v3910
    %v3943 = vunpack.c.l.b16 %v3911
    %v3944 = vunpack.c.l.b16 %v3912
    %v3945 = vunpack.c.l.b16 %v3913
    %v3946 = vunpack.c.l.b16 %v3914
    %v3947 = vunpack.c.l.b16 %v3915
    %v3948 = vunpack.c.l.b16 %v3916
    %v3949 = vunpack.c.l.b16 %v3917
    %v3950 = vunpack.c.l.b16 %v3918
    %v3951 = vunpack.c.l.b16 %v3919
    %v3952 = vunpack.c.l.b16 %v3920
    %v3953 = vunpack.c.l.b16 %v3921
    %v3954 = vunpack.c.l.b16 %v3922
    %v3955 = vunpack.c.l.b16 %v3923
    %v3956 = vunpack.c.l.b16 %v3924
    %v3957 = vunpack.c.l.b16 %v3925
    %v3958 = vpack.c.b16 %v3943, %v3942
    %v3959 = vpack.c.b16 %v3945, %v3944
    %v3960 = vpack.c.b16 %v3947, %v3946
    %v3961 = vpack.c.b16 %v3949, %v3948
    %v3962 = vpack.c.b16 %v3951, %v3950
    %v3963 = vpack.c.b16 %v3953, %v3952
    %v3964 = vpack.c.b16 %v3955, %v3954
    %v3965 = vpack.c.b16 %v3957, %v3956
    %3974 = vmatprep.subr.bf16.mxu0 0
    %3975 = vmatpush1.bf16.msra.mxu0 %v3958
    %3976 = vmatprep.subr.bf16.mxu0 0
    %3977 = vmatpush1.bf16.msra.mxu0 %v3959
    %3978 = vmatprep.subr.bf16.mxu0 0
    %3979 = vmatpush1.bf16.msra.mxu0 %v3960
    %3980 = vmatprep.subr.bf16.mxu0 0
    %3981 = vmatpush1.bf16.msra.mxu0 %v3961
    %3982 = vmatprep.subr.bf16.mxu0 0
    %3983 = vmatpush1.bf16.msra.mxu0 %v3962
    %3984 = vmatprep.subr.bf16.mxu0 0
    %3985 = vmatpush1.bf16.msra.mxu0 %v3963
    %3986 = vmatprep.subr.bf16.mxu0 0
    %3987 = vmatpush1.bf16.msra.mxu0 %v3964
    %3988 = vmatprep.subr.bf16.mxu0 0
    %3989 = vmatpush1.bf16.msra.mxu0 %v3965
    %3990 = vmatprep.subr.bf16.mxu0 0
    %3991 = vmatpush1.bf16.msra.mxu0 0
    %3992 = vmatprep.subr.bf16.mxu0 0
    %3993 = vmatpush1.bf16.msra.mxu0 0
    %3994 = vmatprep.subr.bf16.mxu0 0
    %3995 = vmatpush1.bf16.msra.mxu0 0
    %3996 = vmatprep.subr.bf16.mxu0 0
    %3997 = vmatpush1.bf16.msra.mxu0 0
    %3998 = vmatprep.subr.bf16.mxu0 0
    %3999 = vmatpush1.bf16.msra.mxu0 0
    %4000 = vmatprep.subr.bf16.mxu0 0
    %4001 = vmatpush1.bf16.msra.mxu0 0
    %4002 = vmatprep.subr.bf16.mxu0 0
    %4003 = vmatpush1.bf16.msra.mxu0 0
    %4004 = vmatprep.subr.bf16.mxu0 0
    %4005 = vmatpush1.bf16.msra.mxu0 0
    %4006 = vmatprep.mubr.bf16.mxu0 0
    %4007 = vmatmul.mubr.bf16.gmra.mrb[0].mxu0 %v3698
    %v4008 = vpop.f32.mrb[0].mxu0
    %v4009 = vadd.f32 0.0, %v4008
    %v4010 = vpop.f32.mrb[0].mxu0
    %v4011 = vpop.f32.mrb[0].mxu0
    %v4012 = vpop.f32.mrb[0].mxu0
    %4013 = vdwg.mxu0
    %v4014 = vmax.f32 %v3908, %v4009
    %v4015 = vpack.c.bf16 %v4014, %v4014
    %v4016 = vld [vmem:[#allocation17] sm:$0x3]
    %v4018 = vsel %vm3320, %v4016, 0
    %v4021 = vsel %vm3324, %v4015, 0
    %4023 = vmatprep.subr.bf16.mxu0 0
    %4024 = vmatpush1.bf16.msra.mxu0 %v4021
    %4025 = vmatprep.subr.bf16.mxu0 0
    %4026 = vmatpush1.bf16.msra.mxu0 0
    %4027 = vmatprep.subr.bf16.mxu0 0
    %4028 = vmatpush1.bf16.msra.mxu0 0
    %4029 = vmatprep.subr.bf16.mxu0 0
    %4030 = vmatpush1.bf16.msra.mxu0 0
    %4031 = vmatprep.subr.bf16.mxu0 0
    %4032 = vmatpush1.bf16.msra.mxu0 0
    %4033 = vmatprep.subr.bf16.mxu0 0
    %4034 = vmatpush1.bf16.msra.mxu0 0
    %4035 = vmatprep.subr.bf16.mxu0 0
    %4036 = vmatpush1.bf16.msra.mxu0 0
    %4037 = vmatprep.subr.bf16.mxu0 0
    %4038 = vmatpush1.bf16.msra.mxu0 0
    %4039 = vmatprep.subr.bf16.mxu0 0
    %4040 = vmatpush1.bf16.msra.mxu0 0
    %4041 = vmatprep.subr.bf16.mxu0 0
    %4042 = vmatpush1.bf16.msra.mxu0 0
    %4043 = vmatprep.subr.bf16.mxu0 0
    %4044 = vmatpush1.bf16.msra.mxu0 0
    %4045 = vmatprep.subr.bf16.mxu0 0
    %4046 = vmatpush1.bf16.msra.mxu0 0
    %4047 = vmatprep.subr.bf16.mxu0 0
    %4048 = vmatpush1.bf16.msra.mxu0 0
    %4049 = vmatprep.subr.bf16.mxu0 0
    %4050 = vmatpush1.bf16.msra.mxu0 0
    %4051 = vmatprep.subr.bf16.mxu0 0
    %4052 = vmatpush1.bf16.msra.mxu0 0
    %4053 = vmatprep.subr.bf16.mxu0 0
    %4054 = vmatpush1.bf16.msra.mxu0 0
    %4055 = vmatprep.mubr.bf16.mxu0 0
    %4056 = vmatmul.mubr.bf16.gmra.mrb[0].mxu0 %v4018
    %v4057 = vpop.f32.mrb[0].mxu0
    %v4058 = vadd.f32 0.0, %v4057
    %v4059 = vpop.f32.mrb[0].mxu0
    %v4060 = vpop.f32.mrb[0].mxu0
    %v4061 = vpop.f32.mrb[0].mxu0
    %4062 = vdwg.mxu0
    %s4063 = scalar_lea.vmem [#allocation17], 2
    %v4064 = vld [vmem:[%s4063] sm:$0x3]
    %v4066 = vsel %vm3320, %v4064, 0
    %4068 = vmatprep.subr.bf16.mxu0 0
    %4069 = vmatpush1.bf16.msra.mxu0 %v4021
    %4070 = vmatprep.subr.bf16.mxu0 0
    %4071 = vmatpush1.bf16.msra.mxu0 0
    %4072 = vmatprep.subr.bf16.mxu0 0
    %4073 = vmatpush1.bf16.msra.mxu0 0
    %4074 = vmatprep.subr.bf16.mxu0 0
    %4075 = vmatpush1.bf16.msra.mxu0 0
    %4076 = vmatprep.subr.bf16.mxu0 0
    %4077 = vmatpush1.bf16.msra.mxu0 0
    %4078 = vmatprep.subr.bf16.mxu0 0
    %4079 = vmatpush1.bf16.msra.mxu0 0
    %4080 = vmatprep.subr.bf16.mxu0 0
    %4081 = vmatpush1.bf16.msra.mxu0 0
    %4082 = vmatprep.subr.bf16.mxu0 0
    %4083 = vmatpush1.bf16.msra.mxu0 0
    %4084 = vmatprep.subr.bf16.mxu0 0
    %4085 = vmatpush1.bf16.msra.mxu0 0
    %4086 = vmatprep.subr.bf16.mxu0 0
    %4087 = vmatpush1.bf16.msra.mxu0 0
    %4088 = vmatprep.subr.bf16.mxu0 0
    %4089 = vmatpush1.bf16.msra.mxu0 0
    %4090 = vmatprep.subr.bf16.mxu0 0
    %4091 = vmatpush1.bf16.msra.mxu0 0
    %4092 = vmatprep.subr.bf16.mxu0 0
    %4093 = vmatpush1.bf16.msra.mxu0 0
    %4094 = vmatprep.subr.bf16.mxu0 0
    %4095 = vmatpush1.bf16.msra.mxu0 0
    %4096 = vmatprep.subr.bf16.mxu0 0
    %4097 = vmatpush1.bf16.msra.mxu0 0
    %4098 = vmatprep.subr.bf16.mxu0 0
    %4099 = vmatpush1.bf16.msra.mxu0 0
    %4100 = vmatprep.mubr.bf16.mxu0 0
    %4101 = vmatmul.mubr.bf16.gmra.mrb[0].mxu0 %v4066
    %v4102 = vpop.f32.mrb[0].mxu0
    %v4103 = vadd.f32 0.0, %v4102
    %v4104 = vpop.f32.mrb[0].mxu0
    %v4105 = vpop.f32.mrb[0].mxu0
    %v4106 = vpop.f32.mrb[0].mxu0
    %4107 = vdwg.mxu0
    %v4108 = vmax.f32 %v4058, %v4103
    %s4109 = scalar_lea.vmem [#allocation17], 4
    %v4110 = vld [vmem:[%s4109] sm:$0x3]
    %v4112 = vsel %vm3320, %v4110, 0
    %4114 = vmatprep.subr.bf16.mxu0 0
    %4115 = vmatpush1.bf16.msra.mxu0 %v4021
    %4116 = vmatprep.subr.bf16.mxu0 0
    %4117 = vmatpush1.bf16.msra.mxu0 0
    %4118 = vmatprep.subr.bf16.mxu0 0
    %4119 = vmatpush1.bf16.msra.mxu0 0
    %4120 = vmatprep.subr.bf16.mxu0 0
    %4121 = vmatpush1.bf16.msra.mxu0 0
    %4122 = vmatprep.subr.bf16.mxu0 0
    %4123 = vmatpush1.bf16.msra.mxu0 0
    %4124 = vmatprep.subr.bf16.mxu0 0
    %4125 = vmatpush1.bf16.msra.mxu0 0
    %4126 = vmatprep.subr.bf16.mxu0 0
    %4127 = vmatpush1.bf16.msra.mxu0 0
    %4128 = vmatprep.subr.bf16.mxu0 0
    %4129 = vmatpush1.bf16.msra.mxu0 0
    %4130 = vmatprep.subr.bf16.mxu0 0
    %4131 = vmatpush1.bf16.msra.mxu0 0
    %4132 = vmatprep.subr.bf16.mxu0 0
    %4133 = vmatpush1.bf16.msra.mxu0 0
    %4134 = vmatprep.subr.bf16.mxu0 0
    %4135 = vmatpush1.bf16.msra.mxu0 0
    %4136 = vmatprep.subr.bf16.mxu0 0
    %4137 = vmatpush1.bf16.msra.mxu0 0
    %4138 = vmatprep.subr.bf16.mxu0 0
    %4139 = vmatpush1.bf16.msra.mxu0 0
    %4140 = vmatprep.subr.bf16.mxu0 0
    %4141 = vmatpush1.bf16.msra.mxu0 0
    %4142 = vmatprep.subr.bf16.mxu0 0
    %4143 = vmatpush1.bf16.msra.mxu0 0
    %4144 = vmatprep.subr.bf16.mxu0 0
    %4145 = vmatpush1.bf16.msra.mxu0 0
    %4146 = vmatprep.mubr.bf16.mxu0 0
    %4147 = vmatmul.mubr.bf16.gmra.mrb[0].mxu0 %v4112
    %v4148 = vpop.f32.mrb[0].mxu0
    %v4149 = vadd.f32 0.0, %v4148
    %v4150 = vpop.f32.mrb[0].mxu0
    %v4151 = vpop.f32.mrb[0].mxu0
    %v4152 = vpop.f32.mrb[0].mxu0
    %4153 = vdwg.mxu0
    %v4154 = vmax.f32 %v4108, %v4149
    %v4155 = vpack.c.bf16 %v4154, %v4154
    %v4156 = vld [vmem:[%s16] sm:$0x3]
    %vm4157 = vcmask 31744
    %v4159 = vsel %vm4157, %v4156, 0
    %vm4161 = vcmask 1041408
    %v4163 = vsel %vm4161, %v4155, 0
    %4165 = vmatprep.subr.bf16.mxu0 0
    %4166 = vmatpush1.bf16.msra.mxu0 %v4163
    %4167 = vmatprep.subr.bf16.mxu0 0
    %4168 = vmatpush1.bf16.msra.mxu0 0
    %4169 = vmatprep.subr.bf16.mxu0 0
    %4170 = vmatpush1.bf16.msra.mxu0 0
    %4171 = vmatprep.subr.bf16.mxu0 0
    %4172 = vmatpush1.bf16.msra.mxu0 0
    %4173 = vmatprep.subr.bf16.mxu0 0
    %4174 = vmatpush1.bf16.msra.mxu0 0
    %4175 = vmatprep.subr.bf16.mxu0 0
    %4176 = vmatpush1.bf16.msra.mxu0 0
    %4177 = vmatprep.subr.bf16.mxu0 0
    %4178 = vmatpush1.bf16.msra.mxu0 0
    %4179 = vmatprep.subr.bf16.mxu0 0
    %4180 = vmatpush1.bf16.msra.mxu0 0
    %4181 = vmatprep.subr.bf16.mxu0 0
    %4182 = vmatpush1.bf16.msra.mxu0 0
    %4183 = vmatprep.subr.bf16.mxu0 0
    %4184 = vmatpush1.bf16.msra.mxu0 0
    %4185 = vmatprep.subr.bf16.mxu0 0
    %4186 = vmatpush1.bf16.msra.mxu0 0
    %4187 = vmatprep.subr.bf16.mxu0 0
    %4188 = vmatpush1.bf16.msra.mxu0 0
    %4189 = vmatprep.subr.bf16.mxu0 0
    %4190 = vmatpush1.bf16.msra.mxu0 0
    %4191 = vmatprep.subr.bf16.mxu0 0
    %4192 = vmatpush1.bf16.msra.mxu0 0
    %4193 = vmatprep.subr.bf16.mxu0 0
    %4194 = vmatpush1.bf16.msra.mxu0 0
    %4195 = vmatprep.subr.bf16.mxu0 0
    %4196 = vmatpush1.bf16.msra.mxu0 0
    %4197 = vmatprep.mubr.bf16.mxu0 0
    %4198 = vmatmul.mubr.bf16.gmra.mrb[0].mxu0 %v4159
    %v4199 = vpop.f32.mrb[0].mxu0
    %v4200 = vadd.f32 0.0, %v4199
    %v4201 = vpop.f32.mrb[0].mxu0
    %v4202 = vpop.f32.mrb[0].mxu0
    %v4203 = vpop.f32.mrb[0].mxu0
    %4204 = vdwg.mxu0
    %v4205 = vpack.c.bf16 %v4200, %v4200
    %v4206 = vld [vmem:[#allocation19] sm:$0xf]
    %v4207 = vld [vmem:[#allocation19 + $0x4] sm:$0xf]
    %v4208 = vld [vmem:[#allocation19 + $0x8] sm:$0xf]
    %v4209 = vld [vmem:[#allocation19 + $0xc] sm:$0xf]
    %v4210 = vld [vmem:[#allocation19 + $0x10] sm:$0xf]
    %v4211 = vld [vmem:[#allocation19 + $0x14] sm:$0xf]
    %v4212 = vld [vmem:[#allocation19 + $0x18] sm:$0xf]
    %v4213 = vld [vmem:[#allocation19 + $0x1c] sm:$0xf]
    %s4214 = scalar_lea.vmem %s16, 2
    %v4215 = vld [vmem:[%s4214] sm:$0x3]
    %v4217 = vsel %vm4157, %v4215, 0
    %4219 = vmatprep.subr.bf16.mxu0 0
    %4220 = vmatpush1.bf16.msra.mxu0 %v4163
    %4221 = vmatprep.subr.bf16.mxu0 0
    %4222 = vmatpush1.bf16.msra.mxu0 0
    %4223 = vmatprep.subr.bf16.mxu0 0
    %4224 = vmatpush1.bf16.msra.mxu0 0
    %4225 = vmatprep.subr.bf16.mxu0 0
    %4226 = vmatpush1.bf16.msra.mxu0 0
    %4227 = vmatprep.subr.bf16.mxu0 0
    %4228 = vmatpush1.bf16.msra.mxu0 0
    %4229 = vmatprep.subr.bf16.mxu0 0
    %4230 = vmatpush1.bf16.msra.mxu0 0
    %4231 = vmatprep.subr.bf16.mxu0 0
    %4232 = vmatpush1.bf16.msra.mxu0 0
    %4233 = vmatprep.subr.bf16.mxu0 0
    %4234 = vmatpush1.bf16.msra.mxu0 0
    %4235 = vmatprep.subr.bf16.mxu0 0
    %4236 = vmatpush1.bf16.msra.mxu0 0
    %4237 = vmatprep.subr.bf16.mxu0 0
    %4238 = vmatpush1.bf16.msra.mxu0 0
    %4239 = vmatprep.subr.bf16.mxu0 0
    %4240 = vmatpush1.bf16.msra.mxu0 0
    %4241 = vmatprep.subr.bf16.mxu0 0
    %4242 = vmatpush1.bf16.msra.mxu0 0
    %4243 = vmatprep.subr.bf16.mxu0 0
    %4244 = vmatpush1.bf16.msra.mxu0 0
    %4245 = vmatprep.subr.bf16.mxu0 0
    %4246 = vmatpush1.bf16.msra.mxu0 0
    %4247 = vmatprep.subr.bf16.mxu0 0
    %4248 = vmatpush1.bf16.msra.mxu0 0
    %4249 = vmatprep.subr.bf16.mxu0 0
    %4250 = vmatpush1.bf16.msra.mxu0 0
    %4251 = vmatprep.mubr.bf16.mxu0 0
    %4252 = vmatmul.mubr.bf16.gmra.mrb[0].mxu0 %v4217
    %v4253 = vpop.f32.mrb[0].mxu0
    %v4254 = vadd.f32 0.0, %v4253
    %v4255 = vpop.f32.mrb[0].mxu0
    %v4256 = vpop.f32.mrb[0].mxu0
    %v4257 = vpop.f32.mrb[0].mxu0
    %4258 = vdwg.mxu0
    %v4259 = vpack.c.bf16 %v4254, %v4254
    %s4260 = scalar_lea.vmem [#allocation19], 32
    %v4261 = vld [vmem:[%s4260] sm:$0xf]
    %v4262 = vld [vmem:[%s4260 + $0x4] sm:$0xf]
    %v4263 = vld [vmem:[%s4260 + $0x8] sm:$0xf]
    %v4264 = vld [vmem:[%s4260 + $0xc] sm:$0xf]
    %v4265 = vld [vmem:[%s4260 + $0x10] sm:$0xf]
    %v4266 = vld [vmem:[%s4260 + $0x14] sm:$0xf]
    %v4267 = vld [vmem:[%s4260 + $0x18] sm:$0xf]
    %v4268 = vld [vmem:[%s4260 + $0x1c] sm:$0xf]
    %v4277 = vunpack.c.l.b16 %v4261
    %v4278 = vunpack.c.l.b16 %v4262
    %v4279 = vunpack.c.l.b16 %v4263
    %v4280 = vunpack.c.l.b16 %v4264
    %v4281 = vunpack.c.l.b16 %v4265
    %v4282 = vunpack.c.l.b16 %v4266
    %v4283 = vunpack.c.l.b16 %v4267
    %v4284 = vunpack.c.l.b16 %v4268
    %v4285 = vpack.c.b16 %v4278, %v4277
    %v4286 = vpack.c.b16 %v4280, %v4279
    %v4287 = vpack.c.b16 %v4282, %v4281
    %v4288 = vpack.c.b16 %v4284, %v4283
    %v4294 = vsel %vm357, %v4259, 0
    %4296 = vmatprep.subr.bf16.mxu0 0
    %4297 = vmatpush1.bf16.msra.mxu0 %v4285
    %4298 = vmatprep.subr.bf16.mxu0 0
    %4299 = vmatpush1.bf16.msra.mxu0 %v4286
    %4300 = vmatprep.subr.bf16.mxu0 0
    %4301 = vmatpush1.bf16.msra.mxu0 %v4287
    %4302 = vmatprep.subr.bf16.mxu0 0
    %4303 = vmatpush1.bf16.msra.mxu0 %v4288
    %4304 = vmatprep.subr.bf16.mxu0 0
    %4305 = vmatpush1.bf16.msra.mxu0 0
    %4306 = vmatprep.subr.bf16.mxu0 0
    %4307 = vmatpush1.bf16.msra.mxu0 0
    %4308 = vmatprep.subr.bf16.mxu0 0
    %4309 = vmatpush1.bf16.msra.mxu0 0
    %4310 = vmatprep.subr.bf16.mxu0 0
    %4311 = vmatpush1.bf16.msra.mxu0 0
    %4312 = vmatprep.subr.bf16.mxu0 0
    %4313 = vmatpush1.bf16.msra.mxu0 0
    %4314 = vmatprep.subr.bf16.mxu0 0
    %4315 = vmatpush1.bf16.msra.mxu0 0
    %4316 = vmatprep.subr.bf16.mxu0 0
    %4317 = vmatpush1.bf16.msra.mxu0 0
    %4318 = vmatprep.subr.bf16.mxu0 0
    %4319 = vmatpush1.bf16.msra.mxu0 0
    %4320 = vmatprep.subr.bf16.mxu0 0
    %4321 = vmatpush1.bf16.msra.mxu0 0
    %4322 = vmatprep.subr.bf16.mxu0 0
    %4323 = vmatpush1.bf16.msra.mxu0 0
    %4324 = vmatprep.subr.bf16.mxu0 0
    %4325 = vmatpush1.bf16.msra.mxu0 0
    %4326 = vmatprep.subr.bf16.mxu0 0
    %4327 = vmatpush1.bf16.msra.mxu0 0
    %4328 = vmatprep.mubr.bf16.mxu0 0
    %4329 = vmatmul.mubr.bf16.gmra.mrb[0].mxu0 %v4294
    %v4330 = vpop.f32.mrb[0].mxu0
    %v4331 = vadd.f32 0.0, %v4330
    %v4332 = vpop.f32.mrb[0].mxu0
    %v4333 = vpop.f32.mrb[0].mxu0
    %v4334 = vpop.f32.mrb[0].mxu0
    %4335 = vdwg.mxu0
    %v4344 = vunpack.c.l.b16 %v4206
    %v4345 = vunpack.c.l.b16 %v4207
    %v4346 = vunpack.c.l.b16 %v4208
    %v4347 = vunpack.c.l.b16 %v4209
    %v4348 = vunpack.c.l.b16 %v4210
    %v4349 = vunpack.c.l.b16 %v4211
    %v4350 = vunpack.c.l.b16 %v4212
    %v4351 = vunpack.c.l.b16 %v4213
    %v4352 = vpack.c.b16 %v4345, %v4344
    %v4353 = vpack.c.b16 %v4347, %v4346
    %v4354 = vpack.c.b16 %v4349, %v4348
    %v4355 = vpack.c.b16 %v4351, %v4350
    %v4361 = vsel %vm357, %v4205, 0
    %4363 = vmatprep.subr.bf16.mxu0 0
    %4364 = vmatpush1.bf16.msra.mxu0 %v4352
    %4365 = vmatprep.subr.bf16.mxu0 0
    %4366 = vmatpush1.bf16.msra.mxu0 %v4353
    %4367 = vmatprep.subr.bf16.mxu0 0
    %4368 = vmatpush1.bf16.msra.mxu0 %v4354
    %4369 = vmatprep.subr.bf16.mxu0 0
    %4370 = vmatpush1.bf16.msra.mxu0 %v4355
    %4371 = vmatprep.subr.bf16.mxu0 0
    %4372 = vmatpush1.bf16.msra.mxu0 0
    %4373 = vmatprep.subr.bf16.mxu0 0
    %4374 = vmatpush1.bf16.msra.mxu0 0
    %4375 = vmatprep.subr.bf16.mxu0 0
    %4376 = vmatpush1.bf16.msra.mxu0 0
    %4377 = vmatprep.subr.bf16.mxu0 0
    %4378 = vmatpush1.bf16.msra.mxu0 0
    %4379 = vmatprep.subr.bf16.mxu0 0
    %4380 = vmatpush1.bf16.msra.mxu0 0
    %4381 = vmatprep.subr.bf16.mxu0 0
    %4382 = vmatpush1.bf16.msra.mxu0 0
    %4383 = vmatprep.subr.bf16.mxu0 0
    %4384 = vmatpush1.bf16.msra.mxu0 0
    %4385 = vmatprep.subr.bf16.mxu0 0
    %4386 = vmatpush1.bf16.msra.mxu0 0
    %4387 = vmatprep.subr.bf16.mxu0 0
    %4388 = vmatpush1.bf16.msra.mxu0 0
    %4389 = vmatprep.subr.bf16.mxu0 0
    %4390 = vmatpush1.bf16.msra.mxu0 0
    %4391 = vmatprep.subr.bf16.mxu0 0
    %4392 = vmatpush1.bf16.msra.mxu0 0
    %4393 = vmatprep.subr.bf16.mxu0 0
    %4394 = vmatpush1.bf16.msra.mxu0 0
    %4395 = vmatprep.mubr.bf16.mxu0 0
    %4396 = vmatmul.mubr.bf16.gmra.mrb[0].mxu0 %v4361
    %v4397 = vpop.f32.mrb[0].mxu0
    %v4398 = vadd.f32 %v4331, %v4397
    %v4399 = vpop.f32.mrb[0].mxu0
    %v4400 = vpop.f32.mrb[0].mxu0
    %v4401 = vpop.f32.mrb[0].mxu0
    %4402 = vdwg.mxu0
    %s4403 = scalar_lea.vmem %s16, 4
    %v4404 = vld [vmem:[%s4403] sm:$0x3]
    %v4406 = vsel %vm4157, %v4404, 0
    %4408 = vmatprep.subr.bf16.mxu0 0
    %4409 = vmatpush1.bf16.msra.mxu0 %v4163
    %4410 = vmatprep.subr.bf16.mxu0 0
    %4411 = vmatpush1.bf16.msra.mxu0 0
    %4412 = vmatprep.subr.bf16.mxu0 0
    %4413 = vmatpush1.bf16.msra.mxu0 0
    %4414 = vmatprep.subr.bf16.mxu0 0
    %4415 = vmatpush1.bf16.msra.mxu0 0
    %4416 = vmatprep.subr.bf16.mxu0 0
    %4417 = vmatpush1.bf16.msra.mxu0 0
    %4418 = vmatprep.subr.bf16.mxu0 0
    %4419 = vmatpush1.bf16.msra.mxu0 0
    %4420 = vmatprep.subr.bf16.mxu0 0
    %4421 = vmatpush1.bf16.msra.mxu0 0
    %4422 = vmatprep.subr.bf16.mxu0 0
    %4423 = vmatpush1.bf16.msra.mxu0 0
    %4424 = vmatprep.subr.bf16.mxu0 0
    %4425 = vmatpush1.bf16.msra.mxu0 0
    %4426 = vmatprep.subr.bf16.mxu0 0
    %4427 = vmatpush1.bf16.msra.mxu0 0
    %4428 = vmatprep.subr.bf16.mxu0 0
    %4429 = vmatpush1.bf16.msra.mxu0 0
    %4430 = vmatprep.subr.bf16.mxu0 0
    %4431 = vmatpush1.bf16.msra.mxu0 0
    %4432 = vmatprep.subr.bf16.mxu0 0
    %4433 = vmatpush1.bf16.msra.mxu0 0
    %4434 = vmatprep.subr.bf16.mxu0 0
    %4435 = vmatpush1.bf16.msra.mxu0 0
    %4436 = vmatprep.subr.bf16.mxu0 0
    %4437 = vmatpush1.bf16.msra.mxu0 0
    %4438 = vmatprep.subr.bf16.mxu0 0
    %4439 = vmatpush1.bf16.msra.mxu0 0
    %4440 = vmatprep.mubr.bf16.mxu0 0
    %4441 = vmatmul.mubr.bf16.gmra.mrb[0].mxu0 %v4406
    %v4442 = vpop.f32.mrb[0].mxu0
    %v4443 = vadd.f32 0.0, %v4442
    %v4444 = vpop.f32.mrb[0].mxu0
    %v4445 = vpop.f32.mrb[0].mxu0
    %v4446 = vpop.f32.mrb[0].mxu0
    %4447 = vdwg.mxu0
    %v4448 = vpack.c.bf16 %v4443, %v4443
    %s4449 = scalar_lea.vmem [#allocation19], 64
    %v4450 = vld [vmem:[%s4449] sm:$0xf]
    %v4451 = vld [vmem:[%s4449 + $0x4] sm:$0xf]
    %v4452 = vld [vmem:[%s4449 + $0x8] sm:$0xf]
    %v4453 = vld [vmem:[%s4449 + $0xc] sm:$0xf]
    %v4454 = vld [vmem:[%s4449 + $0x10] sm:$0xf]
    %v4455 = vld [vmem:[%s4449 + $0x14] sm:$0xf]
    %v4456 = vld [vmem:[%s4449 + $0x18] sm:$0xf]
    %v4457 = vld [vmem:[%s4449 + $0x1c] sm:$0xf]
    %v4466 = vunpack.c.l.b16 %v4450
    %v4467 = vunpack.c.l.b16 %v4451
    %v4468 = vunpack.c.l.b16 %v4452
    %v4469 = vunpack.c.l.b16 %v4453
    %v4470 = vunpack.c.l.b16 %v4454
    %v4471 = vunpack.c.l.b16 %v4455
    %v4472 = vunpack.c.l.b16 %v4456
    %v4473 = vunpack.c.l.b16 %v4457
    %v4474 = vpack.c.b16 %v4467, %v4466
    %v4475 = vpack.c.b16 %v4469, %v4468
    %v4476 = vpack.c.b16 %v4471, %v4470
    %v4477 = vpack.c.b16 %v4473, %v4472
    %v4483 = vsel %vm357, %v4448, 0
    %4485 = vmatprep.subr.bf16.mxu0 0
    %4486 = vmatpush1.bf16.msra.mxu0 %v4474
    %4487 = vmatprep.subr.bf16.mxu0 0
    %4488 = vmatpush1.bf16.msra.mxu0 %v4475
    %4489 = vmatprep.subr.bf16.mxu0 0
    %4490 = vmatpush1.bf16.msra.mxu0 %v4476
    %4491 = vmatprep.subr.bf16.mxu0 0
    %4492 = vmatpush1.bf16.msra.mxu0 %v4477
    %4493 = vmatprep.subr.bf16.mxu0 0
    %4494 = vmatpush1.bf16.msra.mxu0 0
    %4495 = vmatprep.subr.bf16.mxu0 0
    %4496 = vmatpush1.bf16.msra.mxu0 0
    %4497 = vmatprep.subr.bf16.mxu0 0
    %4498 = vmatpush1.bf16.msra.mxu0 0
    %4499 = vmatprep.subr.bf16.mxu0 0
    %4500 = vmatpush1.bf16.msra.mxu0 0
    %4501 = vmatprep.subr.bf16.mxu0 0
    %4502 = vmatpush1.bf16.msra.mxu0 0
    %4503 = vmatprep.subr.bf16.mxu0 0
    %4504 = vmatpush1.bf16.msra.mxu0 0
    %4505 = vmatprep.subr.bf16.mxu0 0
    %4506 = vmatpush1.bf16.msra.mxu0 0
    %4507 = vmatprep.subr.bf16.mxu0 0
    %4508 = vmatpush1.bf16.msra.mxu0 0
    %4509 = vmatprep.subr.bf16.mxu0 0
    %4510 = vmatpush1.bf16.msra.mxu0 0
    %4511 = vmatprep.subr.bf16.mxu0 0
    %4512 = vmatpush1.bf16.msra.mxu0 0
    %4513 = vmatprep.subr.bf16.mxu0 0
    %4514 = vmatpush1.bf16.msra.mxu0 0
    %4515 = vmatprep.subr.bf16.mxu0 0
    %4516 = vmatpush1.bf16.msra.mxu0 0
    %4517 = vmatprep.mubr.bf16.mxu0 0
    %4518 = vmatmul.mubr.bf16.gmra.mrb[0].mxu0 %v4483
    %v4519 = vpop.f32.mrb[0].mxu0
    %v4520 = vadd.f32 0.0, %v4519
    %v4521 = vpop.f32.mrb[0].mxu0
    %v4522 = vpop.f32.mrb[0].mxu0
    %v4523 = vpop.f32.mrb[0].mxu0
    %4524 = vdwg.mxu0
    %v4525 = vadd.f32 %v4398, %v4520
    %v4526 = vld [vmem:[#allocation20] sm:$0x1]
    %v4528 = vlaneseq
    %v4529 = vshrl.u32 %v4528, 7
    %v4530 = vsub.s32 0, %v4529
    %v4531 = vrot.slane %v4526, %v4530
    %v4533 = vadd.f32 %v4525, %v4531
    %v4534 = vmax.f32 %v4533, 0.0
    %v4535 = vpack.c.bf16 %v4534, %v4534
    %v4536 = vld [vmem:[#allocation22] sm:$0xf]
    %v4537 = vld [vmem:[#allocation22 + $0x4] sm:$0xf]
    %v4538 = vld [vmem:[#allocation22 + $0x8] sm:$0xf]
    %v4539 = vld [vmem:[#allocation22 + $0xc] sm:$0xf]
    %v4540 = vld [vmem:[#allocation22 + $0x10] sm:$0xf]
    %v4541 = vld [vmem:[#allocation22 + $0x14] sm:$0xf]
    %v4542 = vld [vmem:[#allocation22 + $0x18] sm:$0xf]
    %v4543 = vld [vmem:[#allocation22 + $0x1c] sm:$0xf]
    %v4552 = vunpack.c.l.b16 %v4536
    %v4553 = vunpack.c.l.b16 %v4537
    %v4554 = vunpack.c.l.b16 %v4538
    %v4555 = vunpack.c.l.b16 %v4539
    %v4556 = vunpack.c.l.b16 %v4540
    %v4557 = vunpack.c.l.b16 %v4541
    %v4558 = vunpack.c.l.b16 %v4542
    %v4559 = vunpack.c.l.b16 %v4543
    %v4560 = vpack.c.b16 %v4553, %v4552
    %v4561 = vpack.c.b16 %v4555, %v4554
    %v4562 = vpack.c.b16 %v4557, %v4556
    %v4563 = vpack.c.b16 %v4559, %v4558
    %v4569 = vsel %vm357, %v4535, 0
    %4571 = vmatprep.subr.bf16.mxu0 0
    %4572 = vmatpush1.bf16.msra.mxu0 %v4560
    %4573 = vmatprep.subr.bf16.mxu0 0
    %4574 = vmatpush1.bf16.msra.mxu0 %v4561
    %4575 = vmatprep.subr.bf16.mxu0 0
    %4576 = vmatpush1.bf16.msra.mxu0 %v4562
    %4577 = vmatprep.subr.bf16.mxu0 0
    %4578 = vmatpush1.bf16.msra.mxu0 %v4563
    %4579 = vmatprep.subr.bf16.mxu0 0
    %4580 = vmatpush1.bf16.msra.mxu0 0
    %4581 = vmatprep.subr.bf16.mxu0 0
    %4582 = vmatpush1.bf16.msra.mxu0 0
    %4583 = vmatprep.subr.bf16.mxu0 0
    %4584 = vmatpush1.bf16.msra.mxu0 0
    %4585 = vmatprep.subr.bf16.mxu0 0
    %4586 = vmatpush1.bf16.msra.mxu0 0
    %4587 = vmatprep.subr.bf16.mxu0 0
    %4588 = vmatpush1.bf16.msra.mxu0 0
    %4589 = vmatprep.subr.bf16.mxu0 0
    %4590 = vmatpush1.bf16.msra.mxu0 0
    %4591 = vmatprep.subr.bf16.mxu0 0
    %4592 = vmatpush1.bf16.msra.mxu0 0
    %4593 = vmatprep.subr.bf16.mxu0 0
    %4594 = vmatpush1.bf16.msra.mxu0 0
    %4595 = vmatprep.subr.bf16.mxu0 0
    %4596 = vmatpush1.bf16.msra.mxu0 0
    %4597 = vmatprep.subr.bf16.mxu0 0
    %4598 = vmatpush1.bf16.msra.mxu0 0
    %4599 = vmatprep.subr.bf16.mxu0 0
    %4600 = vmatpush1.bf16.msra.mxu0 0
    %4601 = vmatprep.subr.bf16.mxu0 0
    %4602 = vmatpush1.bf16.msra.mxu0 0
    %4603 = vmatprep.mubr.bf16.mxu0 0
    %4604 = vmatmul.mubr.bf16.gmra.mrb[0].mxu0 %v4569
    %v4605 = vpop.f32.mrb[0].mxu0
    %v4606 = vadd.f32 0.0, %v4605
    %v4607 = vpop.f32.mrb[0].mxu0
    %v4608 = vpop.f32.mrb[0].mxu0
    %v4609 = vpop.f32.mrb[0].mxu0
    %4610 = vdwg.mxu0
    %s4611 = scalar_lea.vmem [#allocation22], 32
    %v4612 = vld [vmem:[%s4611] sm:$0xf]
    %v4613 = vld [vmem:[%s4611 + $0x4] sm:$0xf]
    %v4614 = vld [vmem:[%s4611 + $0x8] sm:$0xf]
    %v4615 = vld [vmem:[%s4611 + $0xc] sm:$0xf]
    %v4616 = vld [vmem:[%s4611 + $0x10] sm:$0xf]
    %v4617 = vld [vmem:[%s4611 + $0x14] sm:$0xf]
    %v4618 = vld [vmem:[%s4611 + $0x18] sm:$0xf]
    %v4619 = vld [vmem:[%s4611 + $0x1c] sm:$0xf]
    %v4628 = vunpack.c.l.b16 %v4612
    %v4629 = vunpack.c.l.b16 %v4613
    %v4630 = vunpack.c.l.b16 %v4614
    %v4631 = vunpack.c.l.b16 %v4615
    %v4632 = vunpack.c.l.b16 %v4616
    %v4633 = vunpack.c.l.b16 %v4617
    %v4634 = vunpack.c.l.b16 %v4618
    %v4635 = vunpack.c.l.b16 %v4619
    %v4636 = vpack.c.b16 %v4629, %v4628
    %v4637 = vpack.c.b16 %v4631, %v4630
    %v4638 = vpack.c.b16 %v4633, %v4632
    %v4639 = vpack.c.b16 %v4635, %v4634
    %4644 = vmatprep.subr.bf16.mxu0 0
    %4645 = vmatpush1.bf16.msra.mxu0 %v4636
    %4646 = vmatprep.subr.bf16.mxu0 0
    %4647 = vmatpush1.bf16.msra.mxu0 %v4637
    %4648 = vmatprep.subr.bf16.mxu0 0
    %4649 = vmatpush1.bf16.msra.mxu0 %v4638
    %4650 = vmatprep.subr.bf16.mxu0 0
    %4651 = vmatpush1.bf16.msra.mxu0 %v4639
    %4652 = vmatprep.subr.bf16.mxu0 0
    %4653 = vmatpush1.bf16.msra.mxu0 0
    %4654 = vmatprep.subr.bf16.mxu0 0
    %4655 = vmatpush1.bf16.msra.mxu0 0
    %4656 = vmatprep.subr.bf16.mxu0 0
    %4657 = vmatpush1.bf16.msra.mxu0 0
    %4658 = vmatprep.subr.bf16.mxu0 0
    %4659 = vmatpush1.bf16.msra.mxu0 0
    %4660 = vmatprep.subr.bf16.mxu0 0
    %4661 = vmatpush1.bf16.msra.mxu0 0
    %4662 = vmatprep.subr.bf16.mxu0 0
    %4663 = vmatpush1.bf16.msra.mxu0 0
    %4664 = vmatprep.subr.bf16.mxu0 0
    %4665 = vmatpush1.bf16.msra.mxu0 0
    %4666 = vmatprep.subr.bf16.mxu0 0
    %4667 = vmatpush1.bf16.msra.mxu0 0
    %4668 = vmatprep.subr.bf16.mxu0 0
    %4669 = vmatpush1.bf16.msra.mxu0 0
    %4670 = vmatprep.subr.bf16.mxu0 0
    %4671 = vmatpush1.bf16.msra.mxu0 0
    %4672 = vmatprep.subr.bf16.mxu0 0
    %4673 = vmatpush1.bf16.msra.mxu0 0
    %4674 = vmatprep.subr.bf16.mxu0 0
    %4675 = vmatpush1.bf16.msra.mxu0 0
    %4676 = vmatprep.mubr.bf16.mxu0 0
    %4677 = vmatmul.mubr.bf16.gmra.mrb[0].mxu0 %v4569
    %v4678 = vpop.f32.mrb[0].mxu0
    %v4679 = vadd.f32 0.0, %v4678
    %v4680 = vpop.f32.mrb[0].mxu0
    %v4681 = vpop.f32.mrb[0].mxu0
    %v4682 = vpop.f32.mrb[0].mxu0
    %4683 = vdwg.mxu0
    %v4684 = vmax.f32 %v4606, %v4679
    %s4685 = scalar_lea.vmem [#allocation22], 64
    %v4686 = vld [vmem:[%s4685] sm:$0xf]
    %v4687 = vld [vmem:[%s4685 + $0x4] sm:$0xf]
    %v4688 = vld [vmem:[%s4685 + $0x8] sm:$0xf]
    %v4689 = vld [vmem:[%s4685 + $0xc] sm:$0xf]
    %v4690 = vld [vmem:[%s4685 + $0x10] sm:$0xf]
    %v4691 = vld [vmem:[%s4685 + $0x14] sm:$0xf]
    %v4692 = vld [vmem:[%s4685 + $0x18] sm:$0xf]
    %v4693 = vld [vmem:[%s4685 + $0x1c] sm:$0xf]
    %v4702 = vunpack.c.l.b16 %v4686
    %v4703 = vunpack.c.l.b16 %v4687
    %v4704 = vunpack.c.l.b16 %v4688
    %v4705 = vunpack.c.l.b16 %v4689
    %v4706 = vunpack.c.l.b16 %v4690
    %v4707 = vunpack.c.l.b16 %v4691
    %v4708 = vunpack.c.l.b16 %v4692
    %v4709 = vunpack.c.l.b16 %v4693
    %v4710 = vpack.c.b16 %v4703, %v4702
    %v4711 = vpack.c.b16 %v4705, %v4704
    %v4712 = vpack.c.b16 %v4707, %v4706
    %v4713 = vpack.c.b16 %v4709, %v4708
    %4718 = vmatprep.subr.bf16.mxu0 0
    %4719 = vmatpush1.bf16.msra.mxu0 %v4710
    %4720 = vmatprep.subr.bf16.mxu0 0
    %4721 = vmatpush1.bf16.msra.mxu0 %v4711
    %4722 = vmatprep.subr.bf16.mxu0 0
    %4723 = vmatpush1.bf16.msra.mxu0 %v4712
    %4724 = vmatprep.subr.bf16.mxu0 0
    %4725 = vmatpush1.bf16.msra.mxu0 %v4713
    %4726 = vmatprep.subr.bf16.mxu0 0
    %4727 = vmatpush1.bf16.msra.mxu0 0
    %4728 = vmatprep.subr.bf16.mxu0 0
    %4729 = vmatpush1.bf16.msra.mxu0 0
    %4730 = vmatprep.subr.bf16.mxu0 0
    %4731 = vmatpush1.bf16.msra.mxu0 0
    %4732 = vmatprep.subr.bf16.mxu0 0
    %4733 = vmatpush1.bf16.msra.mxu0 0
    %4734 = vmatprep.subr.bf16.mxu0 0
    %4735 = vmatpush1.bf16.msra.mxu0 0
    %4736 = vmatprep.subr.bf16.mxu0 0
    %4737 = vmatpush1.bf16.msra.mxu0 0
    %4738 = vmatprep.subr.bf16.mxu0 0
    %4739 = vmatpush1.bf16.msra.mxu0 0
    %4740 = vmatprep.subr.bf16.mxu0 0
    %4741 = vmatpush1.bf16.msra.mxu0 0
    %4742 = vmatprep.subr.bf16.mxu0 0
    %4743 = vmatpush1.bf16.msra.mxu0 0
    %4744 = vmatprep.subr.bf16.mxu0 0
    %4745 = vmatpush1.bf16.msra.mxu0 0
    %4746 = vmatprep.subr.bf16.mxu0 0
    %4747 = vmatpush1.bf16.msra.mxu0 0
    %4748 = vmatprep.subr.bf16.mxu0 0
    %4749 = vmatpush1.bf16.msra.mxu0 0
    %4750 = vmatprep.mubr.bf16.mxu0 0
    %4751 = vmatmul.mubr.bf16.gmra.mrb[0].mxu0 %v4569
    %v4752 = vpop.f32.mrb[0].mxu0
    %v4753 = vadd.f32 0.0, %v4752
    %v4754 = vpop.f32.mrb[0].mxu0
    %v4755 = vpop.f32.mrb[0].mxu0
    %v4756 = vpop.f32.mrb[0].mxu0
    %4757 = vdwg.mxu0
    %v4758 = vmax.f32 %v4684, %v4753
    %v4759 = vpack.c.bf16 %v4758, %v4758
    %v4760 = vld [vmem:[%s20] sm:$0x1]
    %v4762 = vsel %vm4157, %v4760, 0
    %v4765 = vsel %vm4161, %v4759, 0
    %4767 = vmatprep.subr.bf16.mxu0 0
    %4768 = vmatpush1.bf16.msra.mxu0 %v4765
    %4769 = vmatprep.subr.bf16.mxu0 0
    %4770 = vmatpush1.bf16.msra.mxu0 0
    %4771 = vmatprep.subr.bf16.mxu0 0
    %4772 = vmatpush1.bf16.msra.mxu0 0
    %4773 = vmatprep.subr.bf16.mxu0 0
    %4774 = vmatpush1.bf16.msra.mxu0 0
    %4775 = vmatprep.subr.bf16.mxu0 0
    %4776 = vmatpush1.bf16.msra.mxu0 0
    %4777 = vmatprep.subr.bf16.mxu0 0
    %4778 = vmatpush1.bf16.msra.mxu0 0
    %4779 = vmatprep.subr.bf16.mxu0 0
    %4780 = vmatpush1.bf16.msra.mxu0 0
    %4781 = vmatprep.subr.bf16.mxu0 0
    %4782 = vmatpush1.bf16.msra.mxu0 0
    %4783 = vmatprep.subr.bf16.mxu0 0
    %4784 = vmatpush1.bf16.msra.mxu0 0
    %4785 = vmatprep.subr.bf16.mxu0 0
    %4786 = vmatpush1.bf16.msra.mxu0 0
    %4787 = vmatprep.subr.bf16.mxu0 0
    %4788 = vmatpush1.bf16.msra.mxu0 0
    %4789 = vmatprep.subr.bf16.mxu0 0
    %4790 = vmatpush1.bf16.msra.mxu0 0
    %4791 = vmatprep.subr.bf16.mxu0 0
    %4792 = vmatpush1.bf16.msra.mxu0 0
    %4793 = vmatprep.subr.bf16.mxu0 0
    %4794 = vmatpush1.bf16.msra.mxu0 0
    %4795 = vmatprep.subr.bf16.mxu0 0
    %4796 = vmatpush1.bf16.msra.mxu0 0
    %4797 = vmatprep.subr.bf16.mxu0 0
    %4798 = vmatpush1.bf16.msra.mxu0 0
    %4799 = vmatprep.mubr.bf16.mxu0 0
    %4800 = vmatmul.mubr.bf16.gmra.mrb[0].mxu0 %v4762
    %v4801 = vpop.f32.mrb[0].mxu0
    %v4802 = vadd.f32 0.0, %v4801
    %v4803 = vpop.f32.mrb[0].mxu0
    %v4804 = vpop.f32.mrb[0].mxu0
    %v4805 = vpop.f32.mrb[0].mxu0
    %4806 = vdwg.mxu0
    %s4807 = scalar_lea.vmem %s20, 1
    %v4808 = vld [vmem:[%s4807] sm:$0x1]
    %v4810 = vsel %vm4157, %v4808, 0
    %4812 = vmatprep.subr.bf16.mxu0 0
    %4813 = vmatpush1.bf16.msra.mxu0 %v4765
    %4814 = vmatprep.subr.bf16.mxu0 0
    %4815 = vmatpush1.bf16.msra.mxu0 0
    %4816 = vmatprep.subr.bf16.mxu0 0
    %4817 = vmatpush1.bf16.msra.mxu0 0
    %4818 = vmatprep.subr.bf16.mxu0 0
    %4819 = vmatpush1.bf16.msra.mxu0 0
    %4820 = vmatprep.subr.bf16.mxu0 0
    %4821 = vmatpush1.bf16.msra.mxu0 0
    %4822 = vmatprep.subr.bf16.mxu0 0
    %4823 = vmatpush1.bf16.msra.mxu0 0
    %4824 = vmatprep.subr.bf16.mxu0 0
    %4825 = vmatpush1.bf16.msra.mxu0 0
    %4826 = vmatprep.subr.bf16.mxu0 0
    %4827 = vmatpush1.bf16.msra.mxu0 0
    %4828 = vmatprep.subr.bf16.mxu0 0
    %4829 = vmatpush1.bf16.msra.mxu0 0
    %4830 = vmatprep.subr.bf16.mxu0 0
    %4831 = vmatpush1.bf16.msra.mxu0 0
    %4832 = vmatprep.subr.bf16.mxu0 0
    %4833 = vmatpush1.bf16.msra.mxu0 0
    %4834 = vmatprep.subr.bf16.mxu0 0
    %4835 = vmatpush1.bf16.msra.mxu0 0
    %4836 = vmatprep.subr.bf16.mxu0 0
    %4837 = vmatpush1.bf16.msra.mxu0 0
    %4838 = vmatprep.subr.bf16.mxu0 0
    %4839 = vmatpush1.bf16.msra.mxu0 0
    %4840 = vmatprep.subr.bf16.mxu0 0
    %4841 = vmatpush1.bf16.msra.mxu0 0
    %4842 = vmatprep.subr.bf16.mxu0 0
    %4843 = vmatpush1.bf16.msra.mxu0 0
    %4844 = vmatprep.mubr.bf16.mxu0 0
    %4845 = vmatmul.mubr.bf16.gmra.mrb[0].mxu0 %v4810
    %v4846 = vpop.f32.mrb[0].mxu0
    %v4847 = vadd.f32 0.0, %v4846
    %v4848 = vpop.f32.mrb[0].mxu0
    %v4849 = vpop.f32.mrb[0].mxu0
    %v4850 = vpop.f32.mrb[0].mxu0
    %4851 = vdwg.mxu0
    %v4852 = vmax.f32 %v4802, %v4847
    %s4853 = scalar_lea.vmem %s20, 2
    %v4854 = vld [vmem:[%s4853] sm:$0x1]
    %v4856 = vsel %vm4157, %v4854, 0
    %4858 = vmatprep.subr.bf16.mxu0 0
    %4859 = vmatpush1.bf16.msra.mxu0 %v4765
    %4860 = vmatprep.subr.bf16.mxu0 0
    %4861 = vmatpush1.bf16.msra.mxu0 0
    %4862 = vmatprep.subr.bf16.mxu0 0
    %4863 = vmatpush1.bf16.msra.mxu0 0
    %4864 = vmatprep.subr.bf16.mxu0 0
    %4865 = vmatpush1.bf16.msra.mxu0 0
    %4866 = vmatprep.subr.bf16.mxu0 0
    %4867 = vmatpush1.bf16.msra.mxu0 0
    %4868 = vmatprep.subr.bf16.mxu0 0
    %4869 = vmatpush1.bf16.msra.mxu0 0
    %4870 = vmatprep.subr.bf16.mxu0 0
    %4871 = vmatpush1.bf16.msra.mxu0 0
    %4872 = vmatprep.subr.bf16.mxu0 0
    %4873 = vmatpush1.bf16.msra.mxu0 0
    %4874 = vmatprep.subr.bf16.mxu0 0
    %4875 = vmatpush1.bf16.msra.mxu0 0
    %4876 = vmatprep.subr.bf16.mxu0 0
    %4877 = vmatpush1.bf16.msra.mxu0 0
    %4878 = vmatprep.subr.bf16.mxu0 0
    %4879 = vmatpush1.bf16.msra.mxu0 0
    %4880 = vmatprep.subr.bf16.mxu0 0
    %4881 = vmatpush1.bf16.msra.mxu0 0
    %4882 = vmatprep.subr.bf16.mxu0 0
    %4883 = vmatpush1.bf16.msra.mxu0 0
    %4884 = vmatprep.subr.bf16.mxu0 0
    %4885 = vmatpush1.bf16.msra.mxu0 0
    %4886 = vmatprep.subr.bf16.mxu0 0
    %4887 = vmatpush1.bf16.msra.mxu0 0
    %4888 = vmatprep.subr.bf16.mxu0 0
    %4889 = vmatpush1.bf16.msra.mxu0 0
    %4890 = vmatprep.mubr.bf16.mxu0 0
    %4891 = vmatmul.mubr.bf16.gmra.mrb[0].mxu0 %v4856
    %v4892 = vpop.f32.mrb[0].mxu0
    %v4893 = vadd.f32 0.0, %v4892
    %v4894 = vpop.f32.mrb[0].mxu0
    %v4895 = vpop.f32.mrb[0].mxu0
    %v4896 = vpop.f32.mrb[0].mxu0
    %4897 = vdwg.mxu0
    %v4898 = vmax.f32 %v4852, %v4893
    %v4899 = vld [vmem:[#allocation23] sm:$0xff]
    %v4900 = vld [vmem:[#allocation23 + $0x8] sm:$0xff]
    %v4901 = vld [vmem:[#allocation23 + $0x10] sm:$0xff]
    %v4902 = vld [vmem:[#allocation23 + $0x18] sm:$0xff]
    %v4903 = vld [vmem:[#allocation25] sm:$0x1]
    %v4905 = vlaneseq
    %v4906 = vshrl.u32 %v4905, 7
    %v4907 = vsub.s32 0, %v4906
    %v4908 = vrot.slane %v4903, %v4907
    %v4911 = vsel %vm2039, %v4898, 0
    %4913 = vmatprep.subr.mxu0 0.0
    %4914 = vmatpush1.msra.mxu0 %v4899
    %4915 = vmatprep.subr.mxu0 0.0
    %4916 = vmatpush1.msra.mxu0 %v4900
    %4917 = vmatprep.subr.mxu0 0.0
    %4918 = vmatpush1.msra.mxu0 %v4901
    %4919 = vmatprep.subr.mxu0 0.0
    %4920 = vmatpush1.msra.mxu0 %v4902
    %4921 = vmatprep.subr.mxu0 0.0
    %4922 = vmatpush1.msra.mxu0 0.0
    %4923 = vmatprep.subr.mxu0 0.0
    %4924 = vmatpush1.msra.mxu0 0.0
    %4925 = vmatprep.subr.mxu0 0.0
    %4926 = vmatpush1.msra.mxu0 0.0
    %4927 = vmatprep.subr.mxu0 0.0
    %4928 = vmatpush1.msra.mxu0 0.0
    %4929 = vmatprep.subr.mxu0 0.0
    %4930 = vmatpush1.msra.mxu0 0.0
    %4931 = vmatprep.subr.mxu0 0.0
    %4932 = vmatpush1.msra.mxu0 0.0
    %4933 = vmatprep.subr.mxu0 0.0
    %4934 = vmatpush1.msra.mxu0 0.0
    %4935 = vmatprep.subr.mxu0 0.0
    %4936 = vmatpush1.msra.mxu0 0.0
    %4937 = vmatprep.subr.mxu0 0.0
    %4938 = vmatpush1.msra.mxu0 0.0
    %4939 = vmatprep.subr.mxu0 0.0
    %4940 = vmatpush1.msra.mxu0 0.0
    %4941 = vmatprep.subr.mxu0 0.0
    %4942 = vmatpush1.msra.mxu0 0.0
    %4943 = vmatprep.subr.mxu0 0.0
    %4944 = vmatpush1.msra.mxu0 0.0
    %4945 = vmatprep.subr.mxu0 0.0
    %4946 = vmatpush1.msra.mxu0 0.0
    %4947 = vmatprep.subr.mxu0 0.0
    %4948 = vmatpush1.msra.mxu0 0.0
    %4949 = vmatprep.subr.mxu0 0.0
    %4950 = vmatpush1.msra.mxu0 0.0
    %4951 = vmatprep.subr.mxu0 0.0
    %4952 = vmatpush1.msra.mxu0 0.0
    %4953 = vmatprep.subr.mxu0 0.0
    %4954 = vmatpush1.msra.mxu0 0.0
    %4955 = vmatprep.subr.mxu0 0.0
    %4956 = vmatpush1.msra.mxu0 0.0
    %4957 = vmatprep.subr.mxu0 0.0
    %4958 = vmatpush1.msra.mxu0 0.0
    %4959 = vmatprep.subr.mxu0 0.0
    %4960 = vmatpush1.msra.mxu0 0.0
    %4961 = vmatprep.subr.mxu0 0.0
    %4962 = vmatpush1.msra.mxu0 0.0
    %4963 = vmatprep.subr.mxu0 0.0
    %4964 = vmatpush1.msra.mxu0 0.0
    %4965 = vmatprep.subr.mxu0 0.0
    %4966 = vmatpush1.msra.mxu0 0.0
    %4967 = vmatprep.subr.mxu0 0.0
    %4968 = vmatpush1.msra.mxu0 0.0
    %4969 = vmatprep.subr.mxu0 0.0
    %4970 = vmatpush1.msra.mxu0 0.0
    %4971 = vmatprep.subr.mxu0 0.0
    %4972 = vmatpush1.msra.mxu0 0.0
    %4973 = vmatprep.subr.mxu0 0.0
    %4974 = vmatpush1.msra.mxu0 0.0
    %4975 = vmatprep.subr.mxu0 0.0
    %4976 = vmatpush1.msra.mxu0 0.0
    %4977 = vmatprep.mubr.f32.mxu0 0.0
    %4978 = vmatmul.mubr.f32.gmra.mrb[0].mxu0 %v4911
    %v4979 = vpop.f32.mrb[0].mxu0
    %v4980 = vadd.f32 %v4908, %v4979
    %v4981 = vpop.f32.mrb[0].mxu0
    %4982 = vdwg.mxu0
    %v4983 = vmax.f32 %v4980, 0.0
    %v4984 = vld [vmem:[#allocation26] sm:$0xff]
    %v4985 = vld [vmem:[#allocation26 + $0x8] sm:$0xff]
    %v4986 = vld [vmem:[#allocation26 + $0x10] sm:$0xff]
    %v4987 = vld [vmem:[#allocation26 + $0x18] sm:$0xff]
    %v4988 = vld [vmem:[#allocation28] sm:$0x1]
    %v4990 = vlaneseq
    %v4991 = vshrl.u32 %v4990, 7
    %v4992 = vsub.s32 0, %v4991
    %v4993 = vrot.slane %v4988, %v4992
    %v4996 = vsel %vm2039, %v4983, 0
    %4998 = vmatprep.subr.mxu0 0.0
    %4999 = vmatpush1.msra.mxu0 %v4984
    %5000 = vmatprep.subr.mxu0 0.0
    %5001 = vmatpush1.msra.mxu0 %v4985
    %5002 = vmatprep.subr.mxu0 0.0
    %5003 = vmatpush1.msra.mxu0 %v4986
    %5004 = vmatprep.subr.mxu0 0.0
    %5005 = vmatpush1.msra.mxu0 %v4987
    %5006 = vmatprep.subr.mxu0 0.0
    %5007 = vmatpush1.msra.mxu0 0.0
    %5008 = vmatprep.subr.mxu0 0.0
    %5009 = vmatpush1.msra.mxu0 0.0
    %5010 = vmatprep.subr.mxu0 0.0
    %5011 = vmatpush1.msra.mxu0 0.0
    %5012 = vmatprep.subr.mxu0 0.0
    %5013 = vmatpush1.msra.mxu0 0.0
    %5014 = vmatprep.subr.mxu0 0.0
    %5015 = vmatpush1.msra.mxu0 0.0
    %5016 = vmatprep.subr.mxu0 0.0
    %5017 = vmatpush1.msra.mxu0 0.0
    %5018 = vmatprep.subr.mxu0 0.0
    %5019 = vmatpush1.msra.mxu0 0.0
    %5020 = vmatprep.subr.mxu0 0.0
    %5021 = vmatpush1.msra.mxu0 0.0
    %5022 = vmatprep.subr.mxu0 0.0
    %5023 = vmatpush1.msra.mxu0 0.0
    %5024 = vmatprep.subr.mxu0 0.0
    %5025 = vmatpush1.msra.mxu0 0.0
    %5026 = vmatprep.subr.mxu0 0.0
    %5027 = vmatpush1.msra.mxu0 0.0
    %5028 = vmatprep.subr.mxu0 0.0
    %5029 = vmatpush1.msra.mxu0 0.0
    %5030 = vmatprep.subr.mxu0 0.0
    %5031 = vmatpush1.msra.mxu0 0.0
    %5032 = vmatprep.subr.mxu0 0.0
    %5033 = vmatpush1.msra.mxu0 0.0
    %5034 = vmatprep.subr.mxu0 0.0
    %5035 = vmatpush1.msra.mxu0 0.0
    %5036 = vmatprep.subr.mxu0 0.0
    %5037 = vmatpush1.msra.mxu0 0.0
    %5038 = vmatprep.subr.mxu0 0.0
    %5039 = vmatpush1.msra.mxu0 0.0
    %5040 = vmatprep.subr.mxu0 0.0
    %5041 = vmatpush1.msra.mxu0 0.0
    %5042 = vmatprep.subr.mxu0 0.0
    %5043 = vmatpush1.msra.mxu0 0.0
    %5044 = vmatprep.subr.mxu0 0.0
    %5045 = vmatpush1.msra.mxu0 0.0
    %5046 = vmatprep.subr.mxu0 0.0
    %5047 = vmatpush1.msra.mxu0 0.0
    %5048 = vmatprep.subr.mxu0 0.0
    %5049 = vmatpush1.msra.mxu0 0.0
    %5050 = vmatprep.subr.mxu0 0.0
    %5051 = vmatpush1.msra.mxu0 0.0
    %5052 = vmatprep.subr.mxu0 0.0
    %5053 = vmatpush1.msra.mxu0 0.0
    %5054 = vmatprep.subr.mxu0 0.0
    %5055 = vmatpush1.msra.mxu0 0.0
    %5056 = vmatprep.subr.mxu0 0.0
    %5057 = vmatpush1.msra.mxu0 0.0
    %5058 = vmatprep.subr.mxu0 0.0
    %5059 = vmatpush1.msra.mxu0 0.0
    %5060 = vmatprep.subr.mxu0 0.0
    %5061 = vmatpush1.msra.mxu0 0.0
    %5062 = vmatprep.mubr.f32.mxu0 0.0
    %5063 = vmatmul.mubr.f32.gmra.mrb[0].mxu0 %v4996
    %v5064 = vpop.f32.mrb[0].mxu0
    %v5065 = vadd.f32 %v4993, %v5064
    %v5066 = vpop.f32.mrb[0].mxu0
    %5067 = vdwg.mxu0
    %v5068 = vmax.f32 %v5065, 0.0
    %v5069 = vld [vmem:[#allocation29] sm:$0xff]
    %v5070 = vld [vmem:[#allocation29 + $0x8] sm:$0xff]
    %v5071 = vld [vmem:[#allocation31] sm:$0x1]
    %v5073 = vlaneseq
    %v5074 = vshrl.u32 %v5073, 7
    %v5075 = vsub.s32 0, %v5074
    %v5076 = vrot.slane %v5071, %v5075
    %v5079 = vsel %vm2200, %v5068, 0
    %5081 = vmatprep.subr.mxu0 0.0
    %5082 = vmatpush1.msra.mxu0 %v5069
    %5083 = vmatprep.subr.mxu0 0.0
    %5084 = vmatpush1.msra.mxu0 %v5070
    %5085 = vmatprep.subr.mxu0 0.0
    %5086 = vmatpush1.msra.mxu0 0.0
    %5087 = vmatprep.subr.mxu0 0.0
    %5088 = vmatpush1.msra.mxu0 0.0
    %5089 = vmatprep.subr.mxu0 0.0
    %5090 = vmatpush1.msra.mxu0 0.0
    %5091 = vmatprep.subr.mxu0 0.0
    %5092 = vmatpush1.msra.mxu0 0.0
    %5093 = vmatprep.subr.mxu0 0.0
    %5094 = vmatpush1.msra.mxu0 0.0
    %5095 = vmatprep.subr.mxu0 0.0
    %5096 = vmatpush1.msra.mxu0 0.0
    %5097 = vmatprep.subr.mxu0 0.0
    %5098 = vmatpush1.msra.mxu0 0.0
    %5099 = vmatprep.subr.mxu0 0.0
    %5100 = vmatpush1.msra.mxu0 0.0
    %5101 = vmatprep.subr.mxu0 0.0
    %5102 = vmatpush1.msra.mxu0 0.0
    %5103 = vmatprep.subr.mxu0 0.0
    %5104 = vmatpush1.msra.mxu0 0.0
    %5105 = vmatprep.subr.mxu0 0.0
    %5106 = vmatpush1.msra.mxu0 0.0
    %5107 = vmatprep.subr.mxu0 0.0
    %5108 = vmatpush1.msra.mxu0 0.0
    %5109 = vmatprep.subr.mxu0 0.0
    %5110 = vmatpush1.msra.mxu0 0.0
    %5111 = vmatprep.subr.mxu0 0.0
    %5112 = vmatpush1.msra.mxu0 0.0
    %5113 = vmatprep.subr.mxu0 0.0
    %5114 = vmatpush1.msra.mxu0 0.0
    %5115 = vmatprep.subr.mxu0 0.0
    %5116 = vmatpush1.msra.mxu0 0.0
    %5117 = vmatprep.subr.mxu0 0.0
    %5118 = vmatpush1.msra.mxu0 0.0
    %5119 = vmatprep.subr.mxu0 0.0
    %5120 = vmatpush1.msra.mxu0 0.0
    %5121 = vmatprep.subr.mxu0 0.0
    %5122 = vmatpush1.msra.mxu0 0.0
    %5123 = vmatprep.subr.mxu0 0.0
    %5124 = vmatpush1.msra.mxu0 0.0
    %5125 = vmatprep.subr.mxu0 0.0
    %5126 = vmatpush1.msra.mxu0 0.0
    %5127 = vmatprep.subr.mxu0 0.0
    %5128 = vmatpush1.msra.mxu0 0.0
    %5129 = vmatprep.subr.mxu0 0.0
    %5130 = vmatpush1.msra.mxu0 0.0
    %5131 = vmatprep.subr.mxu0 0.0
    %5132 = vmatpush1.msra.mxu0 0.0
    %5133 = vmatprep.subr.mxu0 0.0
    %5134 = vmatpush1.msra.mxu0 0.0
    %5135 = vmatprep.subr.mxu0 0.0
    %5136 = vmatpush1.msra.mxu0 0.0
    %5137 = vmatprep.subr.mxu0 0.0
    %5138 = vmatpush1.msra.mxu0 0.0
    %5139 = vmatprep.subr.mxu0 0.0
    %5140 = vmatpush1.msra.mxu0 0.0
    %5141 = vmatprep.subr.mxu0 0.0
    %5142 = vmatpush1.msra.mxu0 0.0
    %5143 = vmatprep.subr.mxu0 0.0
    %5144 = vmatpush1.msra.mxu0 0.0
    %5145 = vmatprep.mubr.f32.mxu0 0.0
    %5146 = vmatmul.mubr.f32.gmra.mrb[0].mxu0 %v5079
    %v5147 = vpop.f32.mrb[0].mxu0
    %v5148 = vadd.f32 %v5076, %v5147
    %v5149 = vpop.f32.mrb[0].mxu0
    %5150 = vdwg.mxu0
    %v5151 = vxor.u32 %v5148, 2147483648
    %v5152 = vmul.f32 %v5151, 1.442695
    %v5153 = vpow.pop %v5152
    %v5154 = vadd.f32 %v5153, 1.0
    %v5155 = vrcp.pop %v5154
    %v5156 = vmul.f32 1.0, %v5155
    %vm5157 = vcmask 9216
    %5158 = vst.msk [vmem:[#allocation32] sm:$0x3] %vm5157, %v5156
    // Predicated region
    $region186: #{_lambda_.1} parent=1 // pred_check
      _
    $region187: #{_lambda_.1} parent=1 // pred_check_branch
      %5160 = sbr.rel (0) target = $region189
    $region188: #{_lambda_.1} parent=1 // pred_region
      %s5162 = ssub.s32 32, 32
      %5163 = vsyncadd [#allocation4], %s5162
      %s5165 = sshll.u32 [#allocation32], 4
      %s5166 = int_to_ptr.vmem [resolvable:$true] %s5165
      %5168 = dma.vmem_to_hbm [thread:$0]  %s5166, 32, %s27, [#allocation4]
    $region189: #{_lambda_.1} parent=1 // pred_fallthru
      _
    // Predicated region
    $region190: #{_lambda_.1} parent=1 // pred_check
      _
    $region191: #{_lambda_.1} parent=1 // pred_check_branch
      %5170 = sbr.rel (0) target = $region193
    $region192: #{_lambda_.1} parent=1 // pred_region
      %5171 = dma.done [#allocation4], 32
    $region193: #{_lambda_.1} parent=1 // pred_fallthru
      _
    %5172 = vsyncpa [#allocation3], 1
    %5173 = vsyncpa [#allocation6], 1
    %5174 = vsyncpa [#allocation9], 1
    %5175 = vsyncpa [#allocation12], 1
    %5176 = vsyncpa [#allocation15], 1
    %5177 = vsyncpa [#allocation18], 1
    %5178 = vsyncpa [#allocation21], 1
    %5179 = vsyncpa [#allocation24], 1
    %5180 = vsyncpa [#allocation27], 1
    %5181 = vsyncpa [#allocation30], 1
    %5182 = vsyncpa [#allocation4], 1

</llo_original>
